<compile_context>
chip_gen: v6e
topology: v6e:2x2x1
jax: 0.10.0
libtpu: 0.0.40
codegen_flags: <defaults>
</compile_context>

<pallas_src>
import numpy as np
import jax
import jax.numpy as jnp
from jax.experimental import pallas as pl
from jax.experimental.pallas import tpu as pltpu


# Aggregation-matmul dtype.  float32 keeps the self-test tight; on v6e/v7x this
# can be flipped to jnp.bfloat16 (halves the one-hot tile's VMEM/vreg footprint
# and runs the dominant matmul at native bf16 MXU rate) at a small precision
# cost on the edge features.
AGG_DTYPE = jnp.float32


def node_update_kernel(feat_ref, efeat_ref, dst_ref,
                       wvi_ref, bvi_ref, wvie_ref, bvie_ref,
                       w1_ref, b1_ref, w2_ref, b2_ref,
                       out_ref, acc_ref):
    n = pl.program_id(0)                # node-tile index ("parallel")
    e = pl.program_id(1)                # edge-tile index ("arbitrary", reduction)
    tile_n = acc_ref.shape[0]
    tile_e = efeat_ref.shape[0]
    hid = wvi_ref.shape[1]              # 64

    # ---- init accumulator at the start of the edge loop -------------------
    @pl.when(e == 0)
    def _():
        acc_ref[...] = jnp.zeros_like(acc_ref)

    # ---- project this edge tile into hidden space (+ ones column) ---------
    # efeat_ref is [TILE_E, in_efeats+1] (last col = 1 for real edges, 0 for
    # padding); wvie_ref is [in_efeats+1, hid+1] so proj = [e @ Wvie | ones].
    proj = jnp.dot(efeat_ref[...], wvie_ref[...],
                   preferred_element_type=jnp.float32)          # [TILE_E, hid+1]

    # ---- one-hot scatter of edges onto this node tile (per-tile only) -----
    row_ids = jax.lax.broadcasted_iota(jnp.int32, (tile_n, tile_e), 0) + n * tile_n
    one_hot = (row_ids == dst_ref[...]).astype(AGG_DTYPE)       # dst_ref: [1, TILE_E]

    # Single MXU pass accumulates [sum of projected edge feats | degree].
    acc_ref[...] += jnp.dot(one_hot, proj.astype(AGG_DTYPE),
                            preferred_element_type=jnp.float32)

    # ---- finalize: mean, first layer (vi + vie), MLP, store ----------------
    @pl.when(e == pl.num_programs(1) - 1)
    def _():
        acc = acc_ref[...]
        agg = acc[:, :hid]                                       # [TILE_N, hid]
        deg = acc[:, hid:hid + 1]                                # [TILE_N, 1]
        # Exact reciprocal on the narrow degree column, then one wide multiply
        # (the old wide broadcast divide is gone).
        inv_deg = 1.0 / jnp.maximum(deg, 1.0)
        vie = agg * inv_deg + bvie_ref[...]                      # mean then Linear_vie bias
        vi = jnp.dot(feat_ref[...], wvi_ref[...],
                     preferred_element_type=jnp.float32) + bvi_ref[...]
        h = jnp.maximum(vi + vie, 0.0)
        h = jnp.maximum(
            jnp.dot(h, w1_ref[...], preferred_element_type=jnp.float32) + b1_ref[...],
            0.0)
        out = jnp.maximum(
            jnp.dot(h, w2_ref[...], preferred_element_type=jnp.float32) + b2_ref[...],
            0.0)
        out_ref[...] = out.astype(out_ref.dtype)


def node_update(feat, efeat, dst_flat, params, *, tile_n=256, tile_e=512):
    """feat: [N, in_feats] f32, efeat: [E, in_efeats] f32, dst_flat: [E] int32."""
    N, in_feats = feat.shape
    E, in_efeats = efeat.shape
    hid = params["wvi"].shape[1]
    out_feats = params["w2"].shape[1]
    out_w = max(128, out_feats)                     # lane-dense output slab

    n_pad = pl.cdiv(N, tile_n) * tile_n
    e_pad = pl.cdiv(E, tile_e) * tile_e

    # node features: pad rows with zeros (outputs for padded rows are sliced off)
    feat_p = jnp.zeros((n_pad, in_feats), jnp.float32).at[:N].set(feat)

    # edge features: append a ones column (degree rides along the same MXU pass),
    # pad extra rows with zeros; padded dst = -1 so it never matches any node.
    efeat_aug = jnp.concatenate([efeat, jnp.ones((E, 1), efeat.dtype)], axis=1)
    efeat_p = jnp.zeros((e_pad, in_efeats + 1), jnp.float32).at[:E].set(efeat_aug)
    dst_p = jnp.full((1, e_pad), -1, jnp.int32).at[0, :E].set(dst_flat.astype(jnp.int32))

    # augmented edge-projection weight: [[Wvie, 0], [0, 1]]
    wvie_aug = (jnp.zeros((in_efeats + 1, hid + 1), jnp.float32)
                .at[:in_efeats, :hid].set(params["wvie"])
                .at[in_efeats, hid].set(1.0))

    # lane-dense last layer: pad to 128 output columns, slice after the call
    w2_p = jnp.zeros((hid, out_w), jnp.float32).at[:, :out_feats].set(params["w2"])
    b2_p = jnp.zeros((1, out_w), jnp.float32).at[:, :out_feats].set(params["b2"])

    grid = (n_pad // tile_n, e_pad // tile_e)
    const = lambda n, e: (0, 0)                     # weights: resident in VMEM

    res = pl.pallas_call(
        node_update_kernel,
        out_shape=jax.ShapeDtypeStruct((n_pad, out_w), jnp.float32),
        grid_spec=pltpu.PrefetchScalarGridSpec(
            num_scalar_prefetch=0,
            grid=grid,
            in_specs=[
                pl.BlockSpec((tile_n, in_feats), lambda n, e: (n, 0)),       # feat
                pl.BlockSpec((tile_e, in_efeats + 1), lambda n, e: (e, 0)),  # efeat(+1)
                pl.BlockSpec((1, tile_e), lambda n, e: (0, e)),              # dst
                pl.BlockSpec((in_feats, hid), const),                        # wvi
                pl.BlockSpec((1, hid), const),                               # bvi
                pl.BlockSpec((in_efeats + 1, hid + 1), const),               # wvie_aug
                pl.BlockSpec((1, hid), const),                               # bvie
                pl.BlockSpec((hid, hid), const),                             # w1
                pl.BlockSpec((1, hid), const),                               # b1
                pl.BlockSpec((hid, out_w), const),                           # w2 (padded)
                pl.BlockSpec((1, out_w), const),                             # b2 (padded)
            ],
            out_specs=pl.BlockSpec((tile_n, out_w), lambda n, e: (n, 0)),
            scratch_shapes=[pltpu.VMEM((tile_n, hid + 1), jnp.float32)],     # [agg | deg]
        ),
        compiler_params=pltpu.CompilerParams(
            dimension_semantics=("parallel", "arbitrary"),
            # comfortably within v5e/v6e/v7x scoped-VMEM budgets; actual usage ≪ 4 MiB
            vmem_limit_bytes=32 * 1024 * 1024,
        ),
    )(feat_p, efeat_p, dst_p,
      params["wvi"], params["bvi"], wvie_aug, params["bvie"],
      params["w1"], params["b1"], w2_p, b2_p)

    return res[:N, :out_feats]


# ----------------------------- parameter init --------------------------------

def xavier_normal(key, fan_in, fan_out, gain):
    std = gain * np.sqrt(2.0 / (fan_in + fan_out))
    # stored as [fan_in, fan_out] (transpose of torch Linear weight)
    return std * jax.random.normal(key, (fan_in, fan_out), dtype=jnp.float32)


def linear_bias(key, fan_in, fan_out):
    bound = 1.0 / np.sqrt(fan_in)
    return jax.random.uniform(key, (1, fan_out), minval=-bound, maxval=bound,
                              dtype=jnp.float32)


def make_params(key, in_feats, in_efeats, hid_feats=64, out_feats=32):
    gain = np.sqrt(2.0)  # nn.init.calculate_gain('relu')
    ks = jax.random.split(key, 8)
    return {
        "wvi":  xavier_normal(ks[0], in_feats, hid_feats, gain),
        "bvi":  linear_bias(ks[1], in_feats, hid_feats),
        "wvie": xavier_normal(ks[2], in_efeats, hid_feats, gain),
        "bvie": linear_bias(ks[3], in_efeats, hid_feats),
        "w1":   xavier_normal(ks[4], hid_feats, hid_feats, gain),
        "b1":   linear_bias(ks[5], hid_feats, hid_feats),
        "w2":   xavier_normal(ks[6], hid_feats, out_feats, gain),
        "b2":   linear_bias(ks[7], hid_feats, out_feats),
    }


# ------------------------------- reference -----------------------------------

def reference(feat, efeat, dst_flat, params):
    N = feat.shape[0]
    agg_sum = jnp.zeros((N, efeat.shape[1]), jnp.float32).at[dst_flat].add(efeat)
    deg = jnp.zeros((N,), jnp.float32).at[dst_flat].add(1.0)
    vie_in = agg_sum / jnp.maximum(deg, 1.0)[:, None]
    vi = feat @ params["wvi"] + params["bvi"]
    vie = vie_in @ params["wvie"] + params["bvie"]
    h = jnp.maximum(vi + vie, 0.0)
    h = jnp.maximum(h @ params["w1"] + params["b1"], 0.0)
    return jnp.maximum(h @ params["w2"] + params["b2"], 0.0)


if __name__ == "__main__":
    # Small but multi-tile: 2 node tiles x 3 edge tiles, both with ragged padding.
    N, E = 300, 1300
    in_feats, in_efeats = 8, 6
    hid_feats, out_feats = 64, 32

    key = jax.random.PRNGKey(0)
    k_feat, k_efeat, k_dst, k_params = jax.random.split(key, 4)

    feat = jax.random.normal(k_feat, (N, in_feats), dtype=jnp.float32)
    efeat = jax.random.normal(k_efeat, (E, in_efeats), dtype=jnp.float32)
    dst_flat = jax.random.randint(k_dst, (E,), 0, N, dtype=jnp.int32)

    params = make_params(k_params, in_feats, in_efeats, hid_feats, out_feats)

    out = node_update(feat, efeat, dst_flat, params)
    out = jax.block_until_ready(out)

    ref = reference(feat, efeat, dst_flat, params)
    # project-then-mean reorders f32 sums vs the scatter-mean reference -> 1e-4 tol
    np.testing.assert_allclose(np.asarray(out), np.asarray(ref), rtol=1e-4, atol=1e-4)

    print("KERNEL_OK")
</pallas_src>

<mosaic_0001>
module attributes {stable_mosaic.version = 11 : i64} {
  func.func @node_update_kernel(%arg0: i32, %arg1: i32, %arg2: memref<256x8xf32, #tpu.memory_space<vmem>>, %arg3: memref<512x7xf32, #tpu.memory_space<vmem>>, %arg4: memref<1x512xi32, #tpu.memory_space<vmem>>, %arg5: memref<8x64xf32, #tpu.memory_space<vmem>>, %arg6: memref<1x64xf32, #tpu.memory_space<vmem>>, %arg7: memref<7x65xf32, #tpu.memory_space<vmem>>, %arg8: memref<1x64xf32, #tpu.memory_space<vmem>>, %arg9: memref<64x64xf32, #tpu.memory_space<vmem>>, %arg10: memref<1x64xf32, #tpu.memory_space<vmem>>, %arg11: memref<64x128xf32, #tpu.memory_space<vmem>>, %arg12: memref<1x128xf32, #tpu.memory_space<vmem>>, %arg13: memref<256x128xf32, #tpu.memory_space<vmem>>, %arg14: memref<256x65xf32, #tpu.memory_space<vmem>>) attributes {dimension_semantics = [#tpu.dimension_semantics<parallel>, #tpu.dimension_semantics<arbitrary>], iteration_bounds = array<i64: 2, 3>, scalar_prefetch = 0 : i64, scratch_operands = 1 : i64, tpu.core_type = #tpu.core_type<tc>, window_params = [{transform_indices = @transform_0, window_bounds = array<i64: 256, 8>}, {transform_indices = @transform_1, window_bounds = array<i64: 512, 7>}, {transform_indices = @transform_2, window_bounds = array<i64: 1, 512>}, {pipeline_mode = #tpu.pipeline_mode<synchronous>, transform_indices = @transform_3, window_bounds = array<i64: 8, 64>}, {pipeline_mode = #tpu.pipeline_mode<synchronous>, transform_indices = @transform_4, window_bounds = array<i64: 1, 64>}, {pipeline_mode = #tpu.pipeline_mode<synchronous>, transform_indices = @transform_5, window_bounds = array<i64: 7, 65>}, {pipeline_mode = #tpu.pipeline_mode<synchronous>, transform_indices = @transform_6, window_bounds = array<i64: 1, 64>}, {pipeline_mode = #tpu.pipeline_mode<synchronous>, transform_indices = @transform_7, window_bounds = array<i64: 64, 64>}, {pipeline_mode = #tpu.pipeline_mode<synchronous>, transform_indices = @transform_8, window_bounds = array<i64: 1, 64>}, {pipeline_mode = #tpu.pipeline_mode<synchronous>, transform_indices = @transform_9, window_bounds = array<i64: 64, 128>}, {pipeline_mode = #tpu.pipeline_mode<synchronous>, transform_indices = @transform_10, window_bounds = array<i64: 1, 128>}, {transform_indices = @transform_11, window_bounds = array<i64: 256, 128>}]} {
    %c0_i32 = arith.constant 0 : i32
    %0 = arith.cmpi eq, %arg1, %c0_i32 : i32
    %1 = arith.extui %0 : i1 to i32
    %c0_i32_0 = arith.constant 0 : i32
    %2 = arith.cmpi ne, %1, %c0_i32_0 : i32
    scf.if %2 {
      %cst_12 = arith.constant 0.000000e+00 : f32
      %22 = vector.broadcast %cst_12 : f32 to vector<256x65xf32>
      %c0_13 = arith.constant 0 : index
      %c0_14 = arith.constant 0 : index
      %23 = vector.load %arg14[%c0_13, %c0_14] : memref<256x65xf32, #tpu.memory_space<vmem>>, vector<256x65xf32>
      tpu.vector_store %arg14[%c0_13, %c0_14], %22 {strides = array<i32>} : memref<256x65xf32, #tpu.memory_space<vmem>>, vector<256x65xf32>,
    } else {
    }
    %c0 = arith.constant 0 : index
    %c0_1 = arith.constant 0 : index
    %3 = vector.load %arg3[%c0, %c0_1] : memref<512x7xf32, #tpu.memory_space<vmem>>, vector<512x7xf32>
    %c0_2 = arith.constant 0 : index
    %c0_3 = arith.constant 0 : index
    %4 = vector.load %arg7[%c0_2, %c0_3] : memref<7x65xf32, #tpu.memory_space<vmem>>, vector<7x65xf32>
    %cst = arith.constant dense<0.000000e+00> : vector<512x65xf32>
    %5 = tpu.matmul %3, %4, %cst {dimension_numbers = #tpu.dot_dimension_numbers<[1], [0], [0], [1], [0, 0, 1, 1], [], []>} : vector<512x7xf32>, vector<7x65xf32>, vector<512x65xf32> -> vector<512x65xf32>
    %6 = tpu.iota {dimensions = array<i32: 0>} : vector<256x512xi32>
    %c256_i32 = arith.constant 256 : i32
    %7 = arith.muli %arg0, %c256_i32 : i32
    %8 = vector.broadcast %7 : i32 to vector<256x512xi32>
    %9 = arith.addi %6, %8 : vector<256x512xi32>
    %c0_4 = arith.constant 0 : index
    %c0_5 = arith.constant 0 : index
    %10 = vector.load %arg4[%c0_4, %c0_5] : memref<1x512xi32, #tpu.memory_space<vmem>>, vector<1x512xi32>
    %11 = vector.broadcast %10 : vector<1x512xi32> to vector<256x512xi32>
    %12 = arith.cmpi eq, %9, %11 : vector<256x512xi32>
    %13 = arith.extui %12 : vector<256x512xi1> to vector<256x512xi32>
    %14 = arith.sitofp %13 : vector<256x512xi32> to vector<256x512xf32>
    %c0_6 = arith.constant 0 : index
    %c0_7 = arith.constant 0 : index
    %15 = vector.load %arg14[%c0_6, %c0_7] : memref<256x65xf32, #tpu.memory_space<vmem>>, vector<256x65xf32>
    %cst_8 = arith.constant dense<0.000000e+00> : vector<256x65xf32>
    %16 = tpu.matmul %14, %5, %cst_8 {dimension_numbers = #tpu.dot_dimension_numbers<[1], [0], [0], [1], [0, 0, 1, 1], [], []>} : vector<256x512xf32>, vector<512x65xf32>, vector<256x65xf32> -> vector<256x65xf32>
    %17 = arith.addf %15, %16 : vector<256x65xf32>
    %c0_9 = arith.constant 0 : index
    %c0_10 = arith.constant 0 : index
    %18 = vector.load %arg14[%c0_9, %c0_10] : memref<256x65xf32, #tpu.memory_space<vmem>>, vector<256x65xf32>
    tpu.vector_store %arg14[%c0_9, %c0_10], %17 {strides = array<i32>} : memref<256x65xf32, #tpu.memory_space<vmem>>, vector<256x65xf32>,
    %c2_i32 = arith.constant 2 : i32
    %19 = arith.cmpi eq, %arg1, %c2_i32 : i32
    %20 = arith.extui %19 : i1 to i32
    %c0_i32_11 = arith.constant 0 : i32
    %21 = arith.cmpi ne, %20, %c0_i32_11 : i32
    scf.if %21 {
      %c0_12 = arith.constant 0 : index
      %c0_13 = arith.constant 0 : index
      %22 = vector.load %arg14[%c0_12, %c0_13] : memref<256x65xf32, #tpu.memory_space<vmem>>, vector<256x65xf32>
      %23 = vector.extract_strided_slice %22 {offsets = [0, 0], sizes = [256, 64], strides = [1, 1]} : vector<256x65xf32> to vector<256x64xf32>
      %24 = vector.extract_strided_slice %22 {offsets = [0, 64], sizes = [256, 1], strides = [1, 1]} : vector<256x65xf32> to vector<256x1xf32>
      %cst_14 = arith.constant 1.000000e+00 : f32
      %25 = vector.broadcast %cst_14 : f32 to vector<256x1xf32>
      %26 = arith.maximumf %24, %25 : vector<256x1xf32>
      %cst_15 = arith.constant 1.000000e+00 : f32
      %27 = vector.broadcast %cst_15 : f32 to vector<256x1xf32>
      %28 = arith.divf %27, %26 : vector<256x1xf32>
      %29 = vector.broadcast %28 : vector<256x1xf32> to vector<256x64xf32>
      %30 = arith.mulf %23, %29 : vector<256x64xf32>
      %c0_16 = arith.constant 0 : index
      %c0_17 = arith.constant 0 : index
      %31 = vector.load %arg8[%c0_16, %c0_17] : memref<1x64xf32, #tpu.memory_space<vmem>>, vector<1x64xf32>
      %32 = vector.broadcast %31 : vector<1x64xf32> to vector<256x64xf32>
      %33 = arith.addf %30, %32 : vector<256x64xf32>
      %c0_18 = arith.constant 0 : index
      %c0_19 = arith.constant 0 : index
      %34 = vector.load %arg2[%c0_18, %c0_19] : memref<256x8xf32, #tpu.memory_space<vmem>>, vector<256x8xf32>
      %c0_20 = arith.constant 0 : index
      %c0_21 = arith.constant 0 : index
      %35 = vector.load %arg5[%c0_20, %c0_21] : memref<8x64xf32, #tpu.memory_space<vmem>>, vector<8x64xf32>
      %cst_22 = arith.constant dense<0.000000e+00> : vector<256x64xf32>
      %36 = tpu.matmul %34, %35, %cst_22 {dimension_numbers = #tpu.dot_dimension_numbers<[1], [0], [0], [1], [0, 0, 1, 1], [], []>} : vector<256x8xf32>, vector<8x64xf32>, vector<256x64xf32> -> vector<256x64xf32>
      %c0_23 = arith.constant 0 : index
      %c0_24 = arith.constant 0 : index
      %37 = vector.load %arg6[%c0_23, %c0_24] : memref<1x64xf32, #tpu.memory_space<vmem>>, vector<1x64xf32>
      %38 = vector.broadcast %37 : vector<1x64xf32> to vector<256x64xf32>
      %39 = arith.addf %36, %38 : vector<256x64xf32>
      %40 = arith.addf %39, %33 : vector<256x64xf32>
      %cst_25 = arith.constant 0.000000e+00 : f32
      %41 = vector.broadcast %cst_25 : f32 to vector<256x64xf32>
      %42 = arith.maximumf %40, %41 : vector<256x64xf32>
      %c0_26 = arith.constant 0 : index
      %c0_27 = arith.constant 0 : index
      %43 = vector.load %arg9[%c0_26, %c0_27] : memref<64x64xf32, #tpu.memory_space<vmem>>, vector<64x64xf32>
      %cst_28 = arith.constant dense<0.000000e+00> : vector<256x64xf32>
      %44 = tpu.matmul %42, %43, %cst_28 {dimension_numbers = #tpu.dot_dimension_numbers<[1], [0], [0], [1], [0, 0, 1, 1], [], []>} : vector<256x64xf32>, vector<64x64xf32>, vector<256x64xf32> -> vector<256x64xf32>
      %c0_29 = arith.constant 0 : index
      %c0_30 = arith.constant 0 : index
      %45 = vector.load %arg10[%c0_29, %c0_30] : memref<1x64xf32, #tpu.memory_space<vmem>>, vector<1x64xf32>
      %46 = vector.broadcast %45 : vector<1x64xf32> to vector<256x64xf32>
      %47 = arith.addf %44, %46 : vector<256x64xf32>
      %cst_31 = arith.constant 0.000000e+00 : f32
      %48 = vector.broadcast %cst_31 : f32 to vector<256x64xf32>
      %49 = arith.maximumf %47, %48 : vector<256x64xf32>
      %c0_32 = arith.constant 0 : index
      %c0_33 = arith.constant 0 : index
      %50 = vector.load %arg11[%c0_32, %c0_33] : memref<64x128xf32, #tpu.memory_space<vmem>>, vector<64x128xf32>
      %cst_34 = arith.constant dense<0.000000e+00> : vector<256x128xf32>
      %51 = tpu.matmul %49, %50, %cst_34 {dimension_numbers = #tpu.dot_dimension_numbers<[1], [0], [0], [1], [0, 0, 1, 1], [], []>} : vector<256x64xf32>, vector<64x128xf32>, vector<256x128xf32> -> vector<256x128xf32>
      %c0_35 = arith.constant 0 : index
      %c0_36 = arith.constant 0 : index
      %52 = vector.load %arg12[%c0_35, %c0_36] : memref<1x128xf32, #tpu.memory_space<vmem>>, vector<1x128xf32>
      %53 = vector.broadcast %52 : vector<1x128xf32> to vector<256x128xf32>
      %54 = arith.addf %51, %53 : vector<256x128xf32>
      %cst_37 = arith.constant 0.000000e+00 : f32
      %55 = vector.broadcast %cst_37 : f32 to vector<256x128xf32>
      %56 = arith.maximumf %54, %55 : vector<256x128xf32>
      %c0_38 = arith.constant 0 : index
      %c0_39 = arith.constant 0 : index
      %57 = vector.load %arg13[%c0_38, %c0_39] : memref<256x128xf32, #tpu.memory_space<vmem>>, vector<256x128xf32>
      tpu.vector_store %arg13[%c0_38, %c0_39], %56 {strides = array<i32>} : memref<256x128xf32, #tpu.memory_space<vmem>>, vector<256x128xf32>,
    } else {
    }
    return
  }
  func.func @transform_0(%arg0: i32, %arg1: i32) -> (i32, i32) {
    %c0_i32 = arith.constant 0 : i32
    %c0_i32_0 = arith.constant 0 : i32
    return %arg0, %c0_i32 : i32, i32
  }
  func.func @transform_1(%arg0: i32, %arg1: i32) -> (i32, i32) {
    %c0_i32 = arith.constant 0 : i32
    %c0_i32_0 = arith.constant 0 : i32
    return %arg1, %c0_i32 : i32, i32
  }
  func.func @transform_2(%arg0: i32, %arg1: i32) -> (i32, i32) {
    %c0_i32 = arith.constant 0 : i32
    %c0_i32_0 = arith.constant 0 : i32
    return %c0_i32, %arg1 : i32, i32
  }
  func.func @transform_3(%arg0: i32, %arg1: i32) -> (i32, i32) {
    %c0_i32 = arith.constant 0 : i32
    %c0_i32_0 = arith.constant 0 : i32
    %c0_i32_1 = arith.constant 0 : i32
    return %c0_i32, %c0_i32_0 : i32, i32
  }
  func.func @transform_4(%arg0: i32, %arg1: i32) -> (i32, i32) {
    %c0_i32 = arith.constant 0 : i32
    %c0_i32_0 = arith.constant 0 : i32
    %c0_i32_1 = arith.constant 0 : i32
    return %c0_i32, %c0_i32_0 : i32, i32
  }
  func.func @transform_5(%arg0: i32, %arg1: i32) -> (i32, i32) {
    %c0_i32 = arith.constant 0 : i32
    %c0_i32_0 = arith.constant 0 : i32
    %c0_i32_1 = arith.constant 0 : i32
    return %c0_i32, %c0_i32_0 : i32, i32
  }
  func.func @transform_6(%arg0: i32, %arg1: i32) -> (i32, i32) {
    %c0_i32 = arith.constant 0 : i32
    %c0_i32_0 = arith.constant 0 : i32
    %c0_i32_1 = arith.constant 0 : i32
    return %c0_i32, %c0_i32_0 : i32, i32
  }
  func.func @transform_7(%arg0: i32, %arg1: i32) -> (i32, i32) {
    %c0_i32 = arith.constant 0 : i32
    %c0_i32_0 = arith.constant 0 : i32
    %c0_i32_1 = arith.constant 0 : i32
    return %c0_i32, %c0_i32_0 : i32, i32
  }
  func.func @transform_8(%arg0: i32, %arg1: i32) -> (i32, i32) {
    %c0_i32 = arith.constant 0 : i32
    %c0_i32_0 = arith.constant 0 : i32
    %c0_i32_1 = arith.constant 0 : i32
    return %c0_i32, %c0_i32_0 : i32, i32
  }
  func.func @transform_9(%arg0: i32, %arg1: i32) -> (i32, i32) {
    %c0_i32 = arith.constant 0 : i32
    %c0_i32_0 = arith.constant 0 : i32
    %c0_i32_1 = arith.constant 0 : i32
    return %c0_i32, %c0_i32_0 : i32, i32
  }
  func.func @transform_10(%arg0: i32, %arg1: i32) -> (i32, i32) {
    %c0_i32 = arith.constant 0 : i32
    %c0_i32_0 = arith.constant 0 : i32
    %c0_i32_1 = arith.constant 0 : i32
    return %c0_i32, %c0_i32_0 : i32, i32
  }
  func.func @transform_11(%arg0: i32, %arg1: i32) -> (i32, i32) {
    %c0_i32 = arith.constant 0 : i32
    %c0_i32_0 = arith.constant 0 : i32
    return %arg0, %c0_i32 : i32, i32
  }
}

</mosaic_0001>

<llo_original>
// kernel: tpu_custom_call.1
$region0: #{tpu_custom_call.1}
  #allocation0 [shape = 'u32[]', space=smem, size = 0x4, offset = 0x4, fixed_abs, tag = 'smem constant byte address 0x4 - core index']
  #allocation1 [shape = 'u32[144,128]{1,0:T(1,128)}', space=vmem, size = 0x12000, scoped, tag = 'internal scratch']
  #allocation2 [shape = 'f32[256,65]{1,0:T(8,128)}', space=vmem, size = 0x20000, scoped, tag = 'scratch operand']
  %s0 = inlined_call_operand.vmem [shape: f32[512,8], index: 0, kind: input, shape index: {}]
  %s1 = inlined_call_operand.vmem [shape: f32[1536,7], index: 1, kind: input, shape index: {}]
  %s2 = inlined_call_operand.vmem [shape: s32[1,1536], index: 2, kind: input, shape index: {}]
  %s3 = inlined_call_operand.vmem [shape: f32[8,64], index: 3, kind: input, shape index: {}]
  %s4 = inlined_call_operand.vmem [shape: f32[1,64], index: 4, kind: input, shape index: {}]
  %s5 = inlined_call_operand.vmem [shape: f32[7,65], index: 5, kind: input, shape index: {}]
  %s6 = inlined_call_operand.vmem [shape: f32[1,64], index: 6, kind: input, shape index: {}]
  %s7 = inlined_call_operand.vmem [shape: f32[64,64], index: 7, kind: input, shape index: {}]
  %s8 = inlined_call_operand.vmem [shape: f32[1,64], index: 8, kind: input, shape index: {}]
  %s9 = inlined_call_operand.vmem [shape: f32[64,128], index: 9, kind: input, shape index: {}]
  %s10 = inlined_call_operand.vmem [shape: f32[1,128], index: 10, kind: input, shape index: {}]
  %s11 = inlined_call_operand.hbm [shape: f32[512,128], index: 11, kind: output, shape index: {}]
  %s12 = sld [smem:[#allocation0]]
  $region85: #{tpu_custom_call.1} parent=0
    _
  %s14 = ssub.s32 1, %s12
  %s15 = scalar_select 0, %s14, %s12
  $region1: #{tpu_custom_call.1} parent=0
    #allocation3 [shape = 'u8[262144]{0}', space=vmem, size = 0x40000, scoped, tag = 'output window, operand 0']
    #allocation4 [shape = 's32[2]{0}', space=sflag, size = 0x8, scoped, tag = 'scoped memory for tpu_custom_call.1']
    %16 = vsyncpa [#allocation4], 0
    %s17 = scalar_lea.sflag [#allocation4], 1
    %18 = vsyncpa %s17, 0
    loop: start=0, step=1, limit=8
    $region2: #{tpu_custom_call.1} parent=1 // loop_pre_header
      _
    $region3: #{tpu_custom_call.1} parent=1 // loop_header
      %s20 = sphi 0, %s24
      %p21 = scmp.ge.s32.totalorder %s20, 8
      %s27 = sphi 0, %s39
      %s28 = sphi 0, %s35
      %s29 = sphi 0, %s27
      %s30 = sphi 0, %s28
      %s31 = sphi 0, %s29
      %s32 = sphi 0, %s30
      %s42 = sphi 0, %s44
      %s45 = sphi 0, %s42
      %s46 = sphi 0, %s45
      %s62 = sphi 0, %s46
      %s68 = sphi 0, %s70
      %s71 = sphi 0, %s68
      %s72 = sphi 0, %s71
      %s88 = sphi 0, %s72
      %s94 = sphi 0, %s96
      %s97 = sphi 0, %s94
      %s98 = sphi 0, %s97
      %s114 = sphi 0, %s98
      %s118 = sphi 0, %s118
      %s120 = sphi 0, %s118
      %s121 = sphi 0, %s120
      %s135 = sphi 0, %s121
      %s139 = sphi 0, %s139
      %s141 = sphi 0, %s139
      %s142 = sphi 0, %s141
      %s156 = sphi 0, %s142
      %s160 = sphi 0, %s160
      %s162 = sphi 0, %s160
      %s163 = sphi 0, %s162
      %s177 = sphi 0, %s163
      %s181 = sphi 0, %s181
      %s183 = sphi 0, %s181
      %s184 = sphi 0, %s183
      %s198 = sphi 0, %s184
      %s202 = sphi 0, %s202
      %s204 = sphi 0, %s202
      %s205 = sphi 0, %s204
      %s219 = sphi 0, %s205
      %s223 = sphi 0, %s223
      %s225 = sphi 0, %s223
      %s226 = sphi 0, %s225
      %s240 = sphi 0, %s226
      %s244 = sphi 0, %s244
      %s246 = sphi 0, %s244
      %s247 = sphi 0, %s246
      %s261 = sphi 0, %s247
      %s265 = sphi 0, %s265
      %s267 = sphi 0, %s265
      %s268 = sphi 0, %s267
      %s282 = sphi 0, %s268
      %s288 = sphi 0, %s290
      %s291 = sphi 0, %s288
      %s292 = sphi 0, %s291
      %s308 = sphi 0, %s292
    $region4: #{tpu_custom_call.1} parent=1 // loop_header_branch
      %23 = sbr.rel (%p21) target = $region8
    $region5: #{tpu_custom_call.1} parent=1 // loop_body
      %s25 = ssub.s32 %s20, 1
      %s26 = ssub.s32 %s20, 2
      %s33 = sadd.s32 1, %s28
      %p34 = scmp.ge.s32.totalorder %s33, 3
      %s35 = scalar_select %p34, 0, %s33
      %s36 = sadd.s32 1, %s27
      %s37 = scalar_select %p34, %s36, %s27
      %p38 = scmp.ge.s32.totalorder %s37, 2
      %s39 = scalar_select %p38, 0, %s37
      %s40 = ssub.s32 %s27, %s39
      %p41 = scmp.eq.s32.totalorder %s40, 0
      %s43 = sadd.s32 %s42, 1
      %s44 = scalar_select %p41, %s42, %s43
      %p47 = pneg %p41
      %p48 = scmp.eq.s32.totalorder %s20, 5
      %p49 = por %p47, %p48
      %p50 = scmp.ne.s32.totalorder %s42, %s45
      %p51 = scmp.eq.s32.totalorder %s20, 0
      %p52 = por %p50, %p51
      %p53 = scmp.ne.s32.totalorder %s42, %s45
      %p54 = scmp.eq.s32.totalorder %s25, 5
      %p55 = por %p53, %p54
      %p56 = scmp.ne.s32.totalorder %s45, %s46
      %p57 = scmp.eq.s32.totalorder %s25, 0
      %p58 = por %p56, %p57
      %p59 = scmp.ne.s32.totalorder %s45, %s46
      %p60 = scmp.eq.s32.totalorder %s26, 5
      %p61 = por %p59, %p60
      %p63 = scmp.ne.s32.totalorder %s46, %s62
      %p64 = scmp.eq.s32.totalorder %s26, 0
      %p65 = por %p63, %p64
      %s66 = ssub.s32 %s28, %s35
      %p67 = scmp.eq.s32.totalorder %s66, 0
      %s69 = sadd.s32 %s68, 1
      %s70 = scalar_select %p67, %s68, %s69
      %p73 = pneg %p67
      %p74 = scmp.eq.s32.totalorder %s20, 5
      %p75 = por %p73, %p74
      %p76 = scmp.ne.s32.totalorder %s68, %s71
      %p77 = scmp.eq.s32.totalorder %s20, 0
      %p78 = por %p76, %p77
      %p79 = scmp.ne.s32.totalorder %s68, %s71
      %p80 = scmp.eq.s32.totalorder %s25, 5
      %p81 = por %p79, %p80
      %p82 = scmp.ne.s32.totalorder %s71, %s72
      %p83 = scmp.eq.s32.totalorder %s25, 0
      %p84 = por %p82, %p83
      %p85 = scmp.ne.s32.totalorder %s71, %s72
      %p86 = scmp.eq.s32.totalorder %s26, 5
      %p87 = por %p85, %p86
      %p89 = scmp.ne.s32.totalorder %s72, %s88
      %p90 = scmp.eq.s32.totalorder %s26, 0
      %p91 = por %p89, %p90
      %s92 = ssub.s32 %s28, %s35
      %p93 = scmp.eq.s32.totalorder %s92, 0
      %s95 = sadd.s32 %s94, 1
      %s96 = scalar_select %p93, %s94, %s95
      %p99 = pneg %p93
      %p100 = scmp.eq.s32.totalorder %s20, 5
      %p101 = por %p99, %p100
      %p102 = scmp.ne.s32.totalorder %s94, %s97
      %p103 = scmp.eq.s32.totalorder %s20, 0
      %p104 = por %p102, %p103
      %p105 = scmp.ne.s32.totalorder %s94, %s97
      %p106 = scmp.eq.s32.totalorder %s25, 5
      %p107 = por %p105, %p106
      %p108 = scmp.ne.s32.totalorder %s97, %s98
      %p109 = scmp.eq.s32.totalorder %s25, 0
      %p110 = por %p108, %p109
      %p111 = scmp.ne.s32.totalorder %s97, %s98
      %p112 = scmp.eq.s32.totalorder %s26, 5
      %p113 = por %p111, %p112
      %p115 = scmp.ne.s32.totalorder %s98, %s114
      %p116 = scmp.eq.s32.totalorder %s26, 0
      %p117 = por %p115, %p116
      %s119 = sadd.s32 %s118, 1
      %p122 = scmp.eq.s32.totalorder %s20, 5
      %p123 = scmp.ne.s32.totalorder %s118, %s120
      %p124 = scmp.eq.s32.totalorder %s20, 0
      %p125 = por %p123, %p124
      %p126 = scmp.ne.s32.totalorder %s118, %s120
      %p127 = scmp.eq.s32.totalorder %s25, 5
      %p128 = por %p126, %p127
      %p129 = scmp.ne.s32.totalorder %s120, %s121
      %p130 = scmp.eq.s32.totalorder %s25, 0
      %p131 = por %p129, %p130
      %p132 = scmp.ne.s32.totalorder %s120, %s121
      %p133 = scmp.eq.s32.totalorder %s26, 5
      %p134 = por %p132, %p133
      %p136 = scmp.ne.s32.totalorder %s121, %s135
      %p137 = scmp.eq.s32.totalorder %s26, 0
      %p138 = por %p136, %p137
      %s140 = sadd.s32 %s139, 1
      %p143 = scmp.eq.s32.totalorder %s20, 5
      %p144 = scmp.ne.s32.totalorder %s139, %s141
      %p145 = scmp.eq.s32.totalorder %s20, 0
      %p146 = por %p144, %p145
      %p147 = scmp.ne.s32.totalorder %s139, %s141
      %p148 = scmp.eq.s32.totalorder %s25, 5
      %p149 = por %p147, %p148
      %p150 = scmp.ne.s32.totalorder %s141, %s142
      %p151 = scmp.eq.s32.totalorder %s25, 0
      %p152 = por %p150, %p151
      %p153 = scmp.ne.s32.totalorder %s141, %s142
      %p154 = scmp.eq.s32.totalorder %s26, 5
      %p155 = por %p153, %p154
      %p157 = scmp.ne.s32.totalorder %s142, %s156
      %p158 = scmp.eq.s32.totalorder %s26, 0
      %p159 = por %p157, %p158
      %s161 = sadd.s32 %s160, 1
      %p164 = scmp.eq.s32.totalorder %s20, 5
      %p165 = scmp.ne.s32.totalorder %s160, %s162
      %p166 = scmp.eq.s32.totalorder %s20, 0
      %p167 = por %p165, %p166
      %p168 = scmp.ne.s32.totalorder %s160, %s162
      %p169 = scmp.eq.s32.totalorder %s25, 5
      %p170 = por %p168, %p169
      %p171 = scmp.ne.s32.totalorder %s162, %s163
      %p172 = scmp.eq.s32.totalorder %s25, 0
      %p173 = por %p171, %p172
      %p174 = scmp.ne.s32.totalorder %s162, %s163
      %p175 = scmp.eq.s32.totalorder %s26, 5
      %p176 = por %p174, %p175
      %p178 = scmp.ne.s32.totalorder %s163, %s177
      %p179 = scmp.eq.s32.totalorder %s26, 0
      %p180 = por %p178, %p179
      %s182 = sadd.s32 %s181, 1
      %p185 = scmp.eq.s32.totalorder %s20, 5
      %p186 = scmp.ne.s32.totalorder %s181, %s183
      %p187 = scmp.eq.s32.totalorder %s20, 0
      %p188 = por %p186, %p187
      %p189 = scmp.ne.s32.totalorder %s181, %s183
      %p190 = scmp.eq.s32.totalorder %s25, 5
      %p191 = por %p189, %p190
      %p192 = scmp.ne.s32.totalorder %s183, %s184
      %p193 = scmp.eq.s32.totalorder %s25, 0
      %p194 = por %p192, %p193
      %p195 = scmp.ne.s32.totalorder %s183, %s184
      %p196 = scmp.eq.s32.totalorder %s26, 5
      %p197 = por %p195, %p196
      %p199 = scmp.ne.s32.totalorder %s184, %s198
      %p200 = scmp.eq.s32.totalorder %s26, 0
      %p201 = por %p199, %p200
      %s203 = sadd.s32 %s202, 1
      %p206 = scmp.eq.s32.totalorder %s20, 5
      %p207 = scmp.ne.s32.totalorder %s202, %s204
      %p208 = scmp.eq.s32.totalorder %s20, 0
      %p209 = por %p207, %p208
      %p210 = scmp.ne.s32.totalorder %s202, %s204
      %p211 = scmp.eq.s32.totalorder %s25, 5
      %p212 = por %p210, %p211
      %p213 = scmp.ne.s32.totalorder %s204, %s205
      %p214 = scmp.eq.s32.totalorder %s25, 0
      %p215 = por %p213, %p214
      %p216 = scmp.ne.s32.totalorder %s204, %s205
      %p217 = scmp.eq.s32.totalorder %s26, 5
      %p218 = por %p216, %p217
      %p220 = scmp.ne.s32.totalorder %s205, %s219
      %p221 = scmp.eq.s32.totalorder %s26, 0
      %p222 = por %p220, %p221
      %s224 = sadd.s32 %s223, 1
      %p227 = scmp.eq.s32.totalorder %s20, 5
      %p228 = scmp.ne.s32.totalorder %s223, %s225
      %p229 = scmp.eq.s32.totalorder %s20, 0
      %p230 = por %p228, %p229
      %p231 = scmp.ne.s32.totalorder %s223, %s225
      %p232 = scmp.eq.s32.totalorder %s25, 5
      %p233 = por %p231, %p232
      %p234 = scmp.ne.s32.totalorder %s225, %s226
      %p235 = scmp.eq.s32.totalorder %s25, 0
      %p236 = por %p234, %p235
      %p237 = scmp.ne.s32.totalorder %s225, %s226
      %p238 = scmp.eq.s32.totalorder %s26, 5
      %p239 = por %p237, %p238
      %p241 = scmp.ne.s32.totalorder %s226, %s240
      %p242 = scmp.eq.s32.totalorder %s26, 0
      %p243 = por %p241, %p242
      %s245 = sadd.s32 %s244, 1
      %p248 = scmp.eq.s32.totalorder %s20, 5
      %p249 = scmp.ne.s32.totalorder %s244, %s246
      %p250 = scmp.eq.s32.totalorder %s20, 0
      %p251 = por %p249, %p250
      %p252 = scmp.ne.s32.totalorder %s244, %s246
      %p253 = scmp.eq.s32.totalorder %s25, 5
      %p254 = por %p252, %p253
      %p255 = scmp.ne.s32.totalorder %s246, %s247
      %p256 = scmp.eq.s32.totalorder %s25, 0
      %p257 = por %p255, %p256
      %p258 = scmp.ne.s32.totalorder %s246, %s247
      %p259 = scmp.eq.s32.totalorder %s26, 5
      %p260 = por %p258, %p259
      %p262 = scmp.ne.s32.totalorder %s247, %s261
      %p263 = scmp.eq.s32.totalorder %s26, 0
      %p264 = por %p262, %p263
      %s266 = sadd.s32 %s265, 1
      %p269 = scmp.eq.s32.totalorder %s20, 5
      %p270 = scmp.ne.s32.totalorder %s265, %s267
      %p271 = scmp.eq.s32.totalorder %s20, 0
      %p272 = por %p270, %p271
      %p273 = scmp.ne.s32.totalorder %s265, %s267
      %p274 = scmp.eq.s32.totalorder %s25, 5
      %p275 = por %p273, %p274
      %p276 = scmp.ne.s32.totalorder %s267, %s268
      %p277 = scmp.eq.s32.totalorder %s25, 0
      %p278 = por %p276, %p277
      %p279 = scmp.ne.s32.totalorder %s267, %s268
      %p280 = scmp.eq.s32.totalorder %s26, 5
      %p281 = por %p279, %p280
      %p283 = scmp.ne.s32.totalorder %s268, %s282
      %p284 = scmp.eq.s32.totalorder %s26, 0
      %p285 = por %p283, %p284
      %s286 = ssub.s32 %s27, %s39
      %p287 = scmp.eq.s32.totalorder %s286, 0
      %s289 = sadd.s32 %s288, 1
      %s290 = scalar_select %p287, %s288, %s289
      %p293 = pneg %p287
      %p294 = scmp.eq.s32.totalorder %s20, 5
      %p295 = por %p293, %p294
      %p296 = scmp.ne.s32.totalorder %s288, %s291
      %p297 = scmp.eq.s32.totalorder %s20, 0
      %p298 = por %p296, %p297
      %p299 = scmp.ne.s32.totalorder %s288, %s291
      %p300 = scmp.eq.s32.totalorder %s25, 5
      %p301 = por %p299, %p300
      %p302 = scmp.ne.s32.totalorder %s291, %s292
      %p303 = scmp.eq.s32.totalorder %s25, 0
      %p304 = por %p302, %p303
      %p305 = scmp.ne.s32.totalorder %s291, %s292
      %p306 = scmp.eq.s32.totalorder %s26, 5
      %p307 = por %p305, %p306
      %p309 = scmp.ne.s32.totalorder %s292, %s308
      %p310 = scmp.eq.s32.totalorder %s26, 0
      %p311 = por %p309, %p310
      %p312 = scmp.le.s32.totalorder 1, %s20
      %p313 = scmp.lt.s32.totalorder %s20, 7
      %p314 = pnand %p312, %p313
      %p315 = pneg %p314
      // Predicated region
      $region9: #{tpu_custom_call.1} parent=5 // pred_check
        _
      $region10: #{tpu_custom_call.1} parent=5 // pred_check_branch
        %317 = sbr.rel (%p314) target = $region12
      $region11: #{tpu_custom_call.1} parent=5 // pred_region
        %s318 = ssub.s32 %s20, 1
        // Predicated region
        $region13: #{tpu_custom_call.1} parent=11 // pred_check
          %p319 = pneg %p131
        $region14: #{tpu_custom_call.1} parent=11 // pred_check_branch
          %321 = sbr.rel (%p319) target = $region16
        $region15: #{tpu_custom_call.1} parent=11 // pred_region
          _
        $region16: #{tpu_custom_call.1} parent=11 // pred_fallthru
          _
        // Predicated region
        $region17: #{tpu_custom_call.1} parent=11 // pred_check
          %p322 = pneg %p152
        $region18: #{tpu_custom_call.1} parent=11 // pred_check_branch
          %324 = sbr.rel (%p322) target = $region20
        $region19: #{tpu_custom_call.1} parent=11 // pred_region
          _
        $region20: #{tpu_custom_call.1} parent=11 // pred_fallthru
          _
        // Predicated region
        $region21: #{tpu_custom_call.1} parent=11 // pred_check
          %p325 = pneg %p173
        $region22: #{tpu_custom_call.1} parent=11 // pred_check_branch
          %327 = sbr.rel (%p325) target = $region24
        $region23: #{tpu_custom_call.1} parent=11 // pred_region
          _
        $region24: #{tpu_custom_call.1} parent=11 // pred_fallthru
          _
        // Predicated region
        $region25: #{tpu_custom_call.1} parent=11 // pred_check
          %p328 = pneg %p194
        $region26: #{tpu_custom_call.1} parent=11 // pred_check_branch
          %330 = sbr.rel (%p328) target = $region28
        $region27: #{tpu_custom_call.1} parent=11 // pred_region
          _
        $region28: #{tpu_custom_call.1} parent=11 // pred_fallthru
          _
        // Predicated region
        $region29: #{tpu_custom_call.1} parent=11 // pred_check
          %p331 = pneg %p215
        $region30: #{tpu_custom_call.1} parent=11 // pred_check_branch
          %333 = sbr.rel (%p331) target = $region32
        $region31: #{tpu_custom_call.1} parent=11 // pred_region
          _
        $region32: #{tpu_custom_call.1} parent=11 // pred_fallthru
          _
        // Predicated region
        $region33: #{tpu_custom_call.1} parent=11 // pred_check
          %p334 = pneg %p236
        $region34: #{tpu_custom_call.1} parent=11 // pred_check_branch
          %336 = sbr.rel (%p334) target = $region36
        $region35: #{tpu_custom_call.1} parent=11 // pred_region
          _
        $region36: #{tpu_custom_call.1} parent=11 // pred_fallthru
          _
        // Predicated region
        $region37: #{tpu_custom_call.1} parent=11 // pred_check
          %p337 = pneg %p257
        $region38: #{tpu_custom_call.1} parent=11 // pred_check_branch
          %339 = sbr.rel (%p337) target = $region40
        $region39: #{tpu_custom_call.1} parent=11 // pred_region
          _
        $region40: #{tpu_custom_call.1} parent=11 // pred_fallthru
          _
        // Predicated region
        $region41: #{tpu_custom_call.1} parent=11 // pred_check
          %p340 = pneg %p278
        $region42: #{tpu_custom_call.1} parent=11 // pred_check_branch
          %342 = sbr.rel (%p340) target = $region44
        $region43: #{tpu_custom_call.1} parent=11 // pred_region
          _
        $region44: #{tpu_custom_call.1} parent=11 // pred_fallthru
          _
      $region12: #{tpu_custom_call.1} parent=5 // pred_fallthru
        _
      %p343 = scmp.lt.s32.totalorder %s20, 6
      // Predicated region
      $region45: #{tpu_custom_call.1} parent=5 // pred_check
        %p344 = pneg %p343
      $region46: #{tpu_custom_call.1} parent=5 // pred_check_branch
        %346 = sbr.rel (%p344) target = $region48
      $region47: #{tpu_custom_call.1} parent=5 // pred_region
        // Predicated region
        $region49: #{tpu_custom_call.1} parent=47 // pred_check
          %p347 = pneg %p52
        $region50: #{tpu_custom_call.1} parent=47 // pred_check_branch
          %349 = sbr.rel (%p347) target = $region52
        $region51: #{tpu_custom_call.1} parent=47 // pred_region
          %s350 = smul.u32 32, %s27
          %p351 = scmp.lt.s32.totalorder %s350, 63
          %s352 = scalar_select %p351, %s350, 63
          %s353 = smul.addr %s352, 8
          %s354 = scalar_lea.vmem %s0, %s353
          %s355 = smul.u32 32, %s27
        $region52: #{tpu_custom_call.1} parent=47 // pred_fallthru
          _
        // Predicated region
        $region53: #{tpu_custom_call.1} parent=47 // pred_check
          %p356 = pneg %p78
        $region54: #{tpu_custom_call.1} parent=47 // pred_check_branch
          %358 = sbr.rel (%p356) target = $region56
        $region55: #{tpu_custom_call.1} parent=47 // pred_region
          %s359 = smul.u32 64, %s28
          %p360 = scmp.lt.s32.totalorder %s359, 191
          %s361 = scalar_select %p360, %s359, 191
          %s362 = smul.addr %s361, 8
          %s363 = scalar_lea.vmem %s1, %s362
          %s364 = smul.u32 64, %s28
        $region56: #{tpu_custom_call.1} parent=47 // pred_fallthru
          _
        // Predicated region
        $region57: #{tpu_custom_call.1} parent=47 // pred_check
          %p365 = pneg %p104
        $region58: #{tpu_custom_call.1} parent=47 // pred_check_branch
          %367 = sbr.rel (%p365) target = $region60
        $region59: #{tpu_custom_call.1} parent=47 // pred_region
          %s368 = smul.u32 4, %s28
          %p369 = scmp.lt.s32.totalorder %s368, 11
          %s370 = scalar_select %p369, %s368, 11
          %s371 = scalar_lea.vmem %s2, %s370
          %s372 = smul.u32 4, %s28
        $region60: #{tpu_custom_call.1} parent=47 // pred_fallthru
          _
      $region48: #{tpu_custom_call.1} parent=5 // pred_fallthru
        _
      %p373 = scmp.le.s32.totalorder 1, %s20
      %p374 = scmp.lt.s32.totalorder %s20, 7
      %p375 = pnand %p373, %p374
      %p376 = pneg %p375
      // Predicated region
      $region61: #{tpu_custom_call.1} parent=5 // pred_check
        _
      $region62: #{tpu_custom_call.1} parent=5 // pred_check_branch
        %378 = sbr.rel (%p375) target = $region64
      $region63: #{tpu_custom_call.1} parent=5 // pred_region
        %s379 = ssub.s32 %s20, 1
        %s380 = smul.u32 32, %s29
        %p381 = scmp.lt.s32.totalorder %s380, 63
        %s382 = scalar_select %p381, %s380, 63
        %s383 = smul.addr %s382, 8
        %s384 = scalar_lea.vmem %s0, %s383
        %p385 = pneg %p58
        %p386 = pneg %p55
        %s387 = smul.u32 64, %s30
        %p388 = scmp.lt.s32.totalorder %s387, 191
        %s389 = scalar_select %p388, %s387, 191
        %s390 = smul.addr %s389, 8
        %s391 = scalar_lea.vmem %s1, %s390
        %p392 = pneg %p84
        %p393 = pneg %p81
        %s394 = smul.u32 4, %s30
        %p395 = scmp.lt.s32.totalorder %s394, 11
        %s396 = scalar_select %p395, %s394, 11
        %s397 = scalar_lea.vmem %s2, %s396
        %p398 = pneg %p110
        %p399 = pneg %p107
        %p400 = pneg %p131
        %p401 = pneg %p128
        %p402 = pneg %p152
        %p403 = pneg %p149
        %p404 = pneg %p173
        %p405 = pneg %p170
        %p406 = pneg %p194
        %p407 = pneg %p191
        %p408 = pneg %p215
        %p409 = pneg %p212
        %p410 = pneg %p236
        %p411 = pneg %p233
        %p412 = pneg %p257
        %p413 = pneg %p254
        %p414 = pneg %p278
        %p415 = pneg %p275
        %p416 = pneg %p304
        %p417 = pneg %p301
        %s418 = sand.u32 %s291, 1
        %s419 = scalar_lea.sflag [#allocation4], %s418
        %s420 = sand.u32 %s291, 1
        %s421 = smul.addr %s420, 256
        %s422 = scalar_lea.vmem [#allocation3], %s421
        %s423 = smul.u32 32, %s29
        %p424 = scmp.lt.s32.totalorder %s423, 63
        %s425 = scalar_select %p424, %s423, 63
        %s426 = smul.addr %s425, 8
        %s427 = scalar_lea.vmem %s0, %s426
        %s428 = smul.u32 32, %s29
        %s429 = smul.u32 64, %s30
        %p430 = scmp.lt.s32.totalorder %s429, 191
        %s431 = scalar_select %p430, %s429, 191
        %s432 = smul.addr %s431, 8
        %s433 = scalar_lea.vmem %s1, %s432
        %s434 = smul.u32 64, %s30
        %s435 = smul.u32 4, %s30
        %p436 = scmp.lt.s32.totalorder %s435, 11
        %s437 = scalar_select %p436, %s435, 11
        %s438 = scalar_lea.vmem %s2, %s437
        %s439 = smul.u32 4, %s30
        %s440 = smul.u32 32, %s29
        %p441 = scmp.eq.s32.totalorder %s30, 0
        // Predicated region
        $region65: #{tpu_custom_call.1} parent=63 // pred_check
          %p442 = pneg %p441
        $region66: #{tpu_custom_call.1} parent=63 // pred_check_branch
          %444 = sbr.rel (%p442) target = $region68
        $region67: #{tpu_custom_call.1} parent=63 // pred_region
          %vm445 = vcmask 531456
          %446 = vst.msk [vmem:[#allocation2] sm:$0xff] %vm445, 0.0
          %447 = vst.msk [vmem:[#allocation2 + $0x8] sm:$0xff] %vm445, 0.0
          %448 = vst.msk [vmem:[#allocation2 + $0x10] sm:$0xff] %vm445, 0.0
          %449 = vst.msk [vmem:[#allocation2 + $0x18] sm:$0xff] %vm445, 0.0
          %450 = vst.msk [vmem:[#allocation2 + $0x20] sm:$0xff] %vm445, 0.0
          %451 = vst.msk [vmem:[#allocation2 + $0x28] sm:$0xff] %vm445, 0.0
          %452 = vst.msk [vmem:[#allocation2 + $0x30] sm:$0xff] %vm445, 0.0
          %453 = vst.msk [vmem:[#allocation2 + $0x38] sm:$0xff] %vm445, 0.0
          %454 = vst.msk [vmem:[#allocation2 + $0x40] sm:$0xff] %vm445, 0.0
          %455 = vst.msk [vmem:[#allocation2 + $0x48] sm:$0xff] %vm445, 0.0
          %456 = vst.msk [vmem:[#allocation2 + $0x50] sm:$0xff] %vm445, 0.0
          %457 = vst.msk [vmem:[#allocation2 + $0x58] sm:$0xff] %vm445, 0.0
          %458 = vst.msk [vmem:[#allocation2 + $0x60] sm:$0xff] %vm445, 0.0
          %459 = vst.msk [vmem:[#allocation2 + $0x68] sm:$0xff] %vm445, 0.0
          %460 = vst.msk [vmem:[#allocation2 + $0x70] sm:$0xff] %vm445, 0.0
          %461 = vst.msk [vmem:[#allocation2 + $0x78] sm:$0xff] %vm445, 0.0
          %462 = vst.msk [vmem:[#allocation2 + $0x80] sm:$0xff] %vm445, 0.0
          %463 = vst.msk [vmem:[#allocation2 + $0x88] sm:$0xff] %vm445, 0.0
          %464 = vst.msk [vmem:[#allocation2 + $0x90] sm:$0xff] %vm445, 0.0
          %465 = vst.msk [vmem:[#allocation2 + $0x98] sm:$0xff] %vm445, 0.0
          %466 = vst.msk [vmem:[#allocation2 + $0xa0] sm:$0xff] %vm445, 0.0
          %467 = vst.msk [vmem:[#allocation2 + $0xa8] sm:$0xff] %vm445, 0.0
          %468 = vst.msk [vmem:[#allocation2 + $0xb0] sm:$0xff] %vm445, 0.0
          %469 = vst.msk [vmem:[#allocation2 + $0xb8] sm:$0xff] %vm445, 0.0
          %470 = vst.msk [vmem:[#allocation2 + $0xc0] sm:$0xff] %vm445, 0.0
          %471 = vst.msk [vmem:[#allocation2 + $0xc8] sm:$0xff] %vm445, 0.0
          %472 = vst.msk [vmem:[#allocation2 + $0xd0] sm:$0xff] %vm445, 0.0
          %473 = vst.msk [vmem:[#allocation2 + $0xd8] sm:$0xff] %vm445, 0.0
          %474 = vst.msk [vmem:[#allocation2 + $0xe0] sm:$0xff] %vm445, 0.0
          %475 = vst.msk [vmem:[#allocation2 + $0xe8] sm:$0xff] %vm445, 0.0
          %476 = vst.msk [vmem:[#allocation2 + $0xf0] sm:$0xff] %vm445, 0.0
          %477 = vst.msk [vmem:[#allocation2 + $0xf8] sm:$0xff] %vm445, 0.0
        $region68: #{tpu_custom_call.1} parent=63 // pred_fallthru
          _
        %v478 = vld [vmem:[%s433] sm:$0xff]
        %v479 = vld [vmem:[%s433 + $0x8] sm:$0xff]
        %v480 = vld [vmem:[%s433 + $0x10] sm:$0xff]
        %v481 = vld [vmem:[%s433 + $0x18] sm:$0xff]
        %v482 = vld [vmem:[%s433 + $0x20] sm:$0xff]
        %v483 = vld [vmem:[%s433 + $0x28] sm:$0xff]
        %v484 = vld [vmem:[%s433 + $0x30] sm:$0xff]
        %v485 = vld [vmem:[%s433 + $0x38] sm:$0xff]
        %v486 = vld [vmem:[%s433 + $0x40] sm:$0xff]
        %v487 = vld [vmem:[%s433 + $0x48] sm:$0xff]
        %v488 = vld [vmem:[%s433 + $0x50] sm:$0xff]
        %v489 = vld [vmem:[%s433 + $0x58] sm:$0xff]
        %v490 = vld [vmem:[%s433 + $0x60] sm:$0xff]
        %v491 = vld [vmem:[%s433 + $0x68] sm:$0xff]
        %v492 = vld [vmem:[%s433 + $0x70] sm:$0xff]
        %v493 = vld [vmem:[%s433 + $0x78] sm:$0xff]
        %v494 = vld [vmem:[%s433 + $0x80] sm:$0xff]
        %v495 = vld [vmem:[%s433 + $0x88] sm:$0xff]
        %v496 = vld [vmem:[%s433 + $0x90] sm:$0xff]
        %v497 = vld [vmem:[%s433 + $0x98] sm:$0xff]
        %v498 = vld [vmem:[%s433 + $0xa0] sm:$0xff]
        %v499 = vld [vmem:[%s433 + $0xa8] sm:$0xff]
        %v500 = vld [vmem:[%s433 + $0xb0] sm:$0xff]
        %v501 = vld [vmem:[%s433 + $0xb8] sm:$0xff]
        %v502 = vld [vmem:[%s433 + $0xc0] sm:$0xff]
        %v503 = vld [vmem:[%s433 + $0xc8] sm:$0xff]
        %v504 = vld [vmem:[%s433 + $0xd0] sm:$0xff]
        %v505 = vld [vmem:[%s433 + $0xd8] sm:$0xff]
        %v506 = vld [vmem:[%s433 + $0xe0] sm:$0xff]
        %v507 = vld [vmem:[%s433 + $0xe8] sm:$0xff]
        %v508 = vld [vmem:[%s433 + $0xf0] sm:$0xff]
        %v509 = vld [vmem:[%s433 + $0xf8] sm:$0xff]
        %v510 = vld [vmem:[%s433 + $0x100] sm:$0xff]
        %v511 = vld [vmem:[%s433 + $0x108] sm:$0xff]
        %v512 = vld [vmem:[%s433 + $0x110] sm:$0xff]
        %v513 = vld [vmem:[%s433 + $0x118] sm:$0xff]
        %v514 = vld [vmem:[%s433 + $0x120] sm:$0xff]
        %v515 = vld [vmem:[%s433 + $0x128] sm:$0xff]
        %v516 = vld [vmem:[%s433 + $0x130] sm:$0xff]
        %v517 = vld [vmem:[%s433 + $0x138] sm:$0xff]
        %v518 = vld [vmem:[%s433 + $0x140] sm:$0xff]
        %v519 = vld [vmem:[%s433 + $0x148] sm:$0xff]
        %v520 = vld [vmem:[%s433 + $0x150] sm:$0xff]
        %v521 = vld [vmem:[%s433 + $0x158] sm:$0xff]
        %v522 = vld [vmem:[%s433 + $0x160] sm:$0xff]
        %v523 = vld [vmem:[%s433 + $0x168] sm:$0xff]
        %v524 = vld [vmem:[%s433 + $0x170] sm:$0xff]
        %v525 = vld [vmem:[%s433 + $0x178] sm:$0xff]
        %v526 = vld [vmem:[%s433 + $0x180] sm:$0xff]
        %v527 = vld [vmem:[%s433 + $0x188] sm:$0xff]
        %v528 = vld [vmem:[%s433 + $0x190] sm:$0xff]
        %v529 = vld [vmem:[%s433 + $0x198] sm:$0xff]
        %v530 = vld [vmem:[%s433 + $0x1a0] sm:$0xff]
        %v531 = vld [vmem:[%s433 + $0x1a8] sm:$0xff]
        %v532 = vld [vmem:[%s433 + $0x1b0] sm:$0xff]
        %v533 = vld [vmem:[%s433 + $0x1b8] sm:$0xff]
        %v534 = vld [vmem:[%s433 + $0x1c0] sm:$0xff]
        %v535 = vld [vmem:[%s433 + $0x1c8] sm:$0xff]
        %v536 = vld [vmem:[%s433 + $0x1d0] sm:$0xff]
        %v537 = vld [vmem:[%s433 + $0x1d8] sm:$0xff]
        %v538 = vld [vmem:[%s433 + $0x1e0] sm:$0xff]
        %v539 = vld [vmem:[%s433 + $0x1e8] sm:$0xff]
        %v540 = vld [vmem:[%s433 + $0x1f0] sm:$0xff]
        %v541 = vld [vmem:[%s433 + $0x1f8] sm:$0xff]
        %v542 = vld [vmem:[%s5] sm:$0x7f]
        %vm543 = vcmask 56320
        %v545 = vsel %vm543, %v478, 0
        %v548 = vsel %vm543, %v479, 0
        %v551 = vsel %vm543, %v480, 0
        %v554 = vsel %vm543, %v481, 0
        %v557 = vsel %vm543, %v482, 0
        %v560 = vsel %vm543, %v483, 0
        %v563 = vsel %vm543, %v484, 0
        %v566 = vsel %vm543, %v485, 0
        %v569 = vsel %vm543, %v486, 0
        %v572 = vsel %vm543, %v487, 0
        %v575 = vsel %vm543, %v488, 0
        %v578 = vsel %vm543, %v489, 0
        %v581 = vsel %vm543, %v490, 0
        %v584 = vsel %vm543, %v491, 0
        %v587 = vsel %vm543, %v492, 0
        %v590 = vsel %vm543, %v493, 0
        %v593 = vsel %vm543, %v494, 0
        %v596 = vsel %vm543, %v495, 0
        %v599 = vsel %vm543, %v496, 0
        %v602 = vsel %vm543, %v497, 0
        %v605 = vsel %vm543, %v498, 0
        %v608 = vsel %vm543, %v499, 0
        %v611 = vsel %vm543, %v500, 0
        %v614 = vsel %vm543, %v501, 0
        %v617 = vsel %vm543, %v502, 0
        %v620 = vsel %vm543, %v503, 0
        %v623 = vsel %vm543, %v504, 0
        %v626 = vsel %vm543, %v505, 0
        %v629 = vsel %vm543, %v506, 0
        %v632 = vsel %vm543, %v507, 0
        %v635 = vsel %vm543, %v508, 0
        %v638 = vsel %vm543, %v509, 0
        %v641 = vsel %vm543, %v510, 0
        %v644 = vsel %vm543, %v511, 0
        %v647 = vsel %vm543, %v512, 0
        %v650 = vsel %vm543, %v513, 0
        %v653 = vsel %vm543, %v514, 0
        %v656 = vsel %vm543, %v515, 0
        %v659 = vsel %vm543, %v516, 0
        %v662 = vsel %vm543, %v517, 0
        %v665 = vsel %vm543, %v518, 0
        %v668 = vsel %vm543, %v519, 0
        %v671 = vsel %vm543, %v520, 0
        %v674 = vsel %vm543, %v521, 0
        %v677 = vsel %vm543, %v522, 0
        %v680 = vsel %vm543, %v523, 0
        %v683 = vsel %vm543, %v524, 0
        %v686 = vsel %vm543, %v525, 0
        %v689 = vsel %vm543, %v526, 0
        %v692 = vsel %vm543, %v527, 0
        %v695 = vsel %vm543, %v528, 0
        %v698 = vsel %vm543, %v529, 0
        %v701 = vsel %vm543, %v530, 0
        %v704 = vsel %vm543, %v531, 0
        %v707 = vsel %vm543, %v532, 0
        %v710 = vsel %vm543, %v533, 0
        %v713 = vsel %vm543, %v534, 0
        %v716 = vsel %vm543, %v535, 0
        %v719 = vsel %vm543, %v536, 0
        %v722 = vsel %vm543, %v537, 0
        %v725 = vsel %vm543, %v538, 0
        %v728 = vsel %vm543, %v539, 0
        %v731 = vsel %vm543, %v540, 0
        %v734 = vsel %vm543, %v541, 0
        %vm736 = vcmask 1046528
        %v738 = vsel %vm736, %v542, 0
        %740 = vmatprep.subr.mxu0 0.0
        %741 = vmatpush1.msra.mxu0 0.0
        %742 = vmatprep.subr.mxu0 0.0
        %743 = vmatpush1.msra.mxu0 0.0
        %744 = vmatprep.subr.mxu0 0.0
        %745 = vmatpush1.msra.mxu0 0.0
        %746 = vmatprep.subr.mxu0 0.0
        %747 = vmatpush1.msra.mxu0 0.0
        %748 = vmatprep.subr.mxu0 0.0
        %749 = vmatpush1.msra.mxu0 0.0
        %750 = vmatprep.subr.mxu0 0.0
        %751 = vmatpush1.msra.mxu0 0.0
        %752 = vmatprep.subr.mxu0 0.0
        %753 = vmatpush1.msra.mxu0 0.0
        %754 = vmatprep.subr.mxu0 0.0
        %755 = vmatpush1.msra.mxu0 0.0
        %756 = vmatprep.subr.mxu0 0.0
        %757 = vmatpush1.msra.mxu0 0.0
        %758 = vmatprep.subr.mxu0 0.0
        %759 = vmatpush1.msra.mxu0 0.0
        %760 = vmatprep.subr.mxu0 0.0
        %761 = vmatpush1.msra.mxu0 0.0
        %762 = vmatprep.subr.mxu0 0.0
        %763 = vmatpush1.msra.mxu0 0.0
        %764 = vmatprep.subr.mxu0 0.0
        %765 = vmatpush1.msra.mxu0 0.0
        %766 = vmatprep.subr.mxu0 0.0
        %767 = vmatpush1.msra.mxu0 0.0
        %768 = vmatprep.subr.mxu0 0.0
        %769 = vmatpush1.msra.mxu0 0.0
        %770 = vmatprep.subr.mxu0 0.0
        %771 = vmatpush1.msra.mxu0 %v738
        %772 = vmatprep.subr.mxu0 0.0
        %773 = vmatpush2.msra.mxu0 0.0
        %774 = vmatprep.subr.mxu0 0.0
        %775 = vmatpush2.msra.mxu0 0.0
        %776 = vmatprep.subr.mxu0 0.0
        %777 = vmatpush2.msra.mxu0 0.0
        %778 = vmatprep.subr.mxu0 0.0
        %779 = vmatpush2.msra.mxu0 0.0
        %780 = vmatprep.subr.mxu0 0.0
        %781 = vmatpush2.msra.mxu0 0.0
        %782 = vmatprep.subr.mxu0 0.0
        %783 = vmatpush2.msra.mxu0 0.0
        %784 = vmatprep.subr.mxu0 0.0
        %785 = vmatpush2.msra.mxu0 0.0
        %786 = vmatprep.subr.mxu0 0.0
        %787 = vmatpush2.msra.mxu0 0.0
        %788 = vmatprep.subr.mxu0 0.0
        %789 = vmatpush2.msra.mxu0 0.0
        %790 = vmatprep.subr.mxu0 0.0
        %791 = vmatpush2.msra.mxu0 0.0
        %792 = vmatprep.subr.mxu0 0.0
        %793 = vmatpush2.msra.mxu0 0.0
        %794 = vmatprep.subr.mxu0 0.0
        %795 = vmatpush2.msra.mxu0 0.0
        %796 = vmatprep.subr.mxu0 0.0
        %797 = vmatpush2.msra.mxu0 0.0
        %798 = vmatprep.subr.mxu0 0.0
        %799 = vmatpush2.msra.mxu0 0.0
        %800 = vmatprep.subr.mxu0 0.0
        %801 = vmatpush2.msra.mxu0 0.0
        %802 = vmatprep.subr.mxu0 0.0
        %803 = vmatpush2.msra.mxu0 0.0
        %804 = vmatprep.mubr.f32.mxu0 0.0
        %805 = vmatmul.mubr.f32.gmra.mxu0 %v545
        %v806 = vpop.f32.mrf.mxu0
        %v807 = vadd.f32 0.0, %v806
        %v808 = vpop.f32.mrf.mxu0
        %809 = vmatprep.mubr.f32.mxu0 0.0
        %810 = vmatmul.mubr.f32.gmra.mxu0 %v548
        %v811 = vpop.f32.mrf.mxu0
        %v812 = vadd.f32 0.0, %v811
        %v813 = vpop.f32.mrf.mxu0
        %814 = vmatprep.mubr.f32.mxu0 0.0
        %815 = vmatmul.mubr.f32.gmra.mxu0 %v551
        %v816 = vpop.f32.mrf.mxu0
        %v817 = vadd.f32 0.0, %v816
        %v818 = vpop.f32.mrf.mxu0
        %819 = vmatprep.mubr.f32.mxu0 0.0
        %820 = vmatmul.mubr.f32.gmra.mxu0 %v554
        %v821 = vpop.f32.mrf.mxu0
        %v822 = vadd.f32 0.0, %v821
        %v823 = vpop.f32.mrf.mxu0
        %824 = vmatprep.mubr.f32.mxu0 0.0
        %825 = vmatmul.mubr.f32.gmra.mxu0 %v557
        %v826 = vpop.f32.mrf.mxu0
        %v827 = vadd.f32 0.0, %v826
        %v828 = vpop.f32.mrf.mxu0
        %829 = vmatprep.mubr.f32.mxu0 0.0
        %830 = vmatmul.mubr.f32.gmra.mxu0 %v560
        %v831 = vpop.f32.mrf.mxu0
        %v832 = vadd.f32 0.0, %v831
        %v833 = vpop.f32.mrf.mxu0
        %834 = vmatprep.mubr.f32.mxu0 0.0
        %835 = vmatmul.mubr.f32.gmra.mxu0 %v563
        %v836 = vpop.f32.mrf.mxu0
        %v837 = vadd.f32 0.0, %v836
        %v838 = vpop.f32.mrf.mxu0
        %839 = vmatprep.mubr.f32.mxu0 0.0
        %840 = vmatmul.mubr.f32.gmra.mxu0 %v566
        %v841 = vpop.f32.mrf.mxu0
        %v842 = vadd.f32 0.0, %v841
        %v843 = vpop.f32.mrf.mxu0
        %844 = vmatprep.mubr.f32.mxu0 0.0
        %845 = vmatmul.mubr.f32.gmra.mxu0 %v569
        %v846 = vpop.f32.mrf.mxu0
        %v847 = vadd.f32 0.0, %v846
        %v848 = vpop.f32.mrf.mxu0
        %849 = vmatprep.mubr.f32.mxu0 0.0
        %850 = vmatmul.mubr.f32.gmra.mxu0 %v572
        %v851 = vpop.f32.mrf.mxu0
        %v852 = vadd.f32 0.0, %v851
        %v853 = vpop.f32.mrf.mxu0
        %854 = vmatprep.mubr.f32.mxu0 0.0
        %855 = vmatmul.mubr.f32.gmra.mxu0 %v575
        %v856 = vpop.f32.mrf.mxu0
        %v857 = vadd.f32 0.0, %v856
        %v858 = vpop.f32.mrf.mxu0
        %859 = vmatprep.mubr.f32.mxu0 0.0
        %860 = vmatmul.mubr.f32.gmra.mxu0 %v578
        %v861 = vpop.f32.mrf.mxu0
        %v862 = vadd.f32 0.0, %v861
        %v863 = vpop.f32.mrf.mxu0
        %864 = vmatprep.mubr.f32.mxu0 0.0
        %865 = vmatmul.mubr.f32.gmra.mxu0 %v581
        %v866 = vpop.f32.mrf.mxu0
        %v867 = vadd.f32 0.0, %v866
        %v868 = vpop.f32.mrf.mxu0
        %869 = vmatprep.mubr.f32.mxu0 0.0
        %870 = vmatmul.mubr.f32.gmra.mxu0 %v584
        %v871 = vpop.f32.mrf.mxu0
        %v872 = vadd.f32 0.0, %v871
        %v873 = vpop.f32.mrf.mxu0
        %874 = vmatprep.mubr.f32.mxu0 0.0
        %875 = vmatmul.mubr.f32.gmra.mxu0 %v587
        %v876 = vpop.f32.mrf.mxu0
        %v877 = vadd.f32 0.0, %v876
        %v878 = vpop.f32.mrf.mxu0
        %879 = vmatprep.mubr.f32.mxu0 0.0
        %880 = vmatmul.mubr.f32.gmra.mxu0 %v590
        %v881 = vpop.f32.mrf.mxu0
        %v882 = vadd.f32 0.0, %v881
        %v883 = vpop.f32.mrf.mxu0
        %884 = vmatprep.mubr.f32.mxu0 0.0
        %885 = vmatmul.mubr.f32.gmra.mxu0 %v593
        %v886 = vpop.f32.mrf.mxu0
        %v887 = vadd.f32 0.0, %v886
        %v888 = vpop.f32.mrf.mxu0
        %889 = vmatprep.mubr.f32.mxu0 0.0
        %890 = vmatmul.mubr.f32.gmra.mxu0 %v596
        %v891 = vpop.f32.mrf.mxu0
        %v892 = vadd.f32 0.0, %v891
        %v893 = vpop.f32.mrf.mxu0
        %894 = vmatprep.mubr.f32.mxu0 0.0
        %895 = vmatmul.mubr.f32.gmra.mxu0 %v599
        %v896 = vpop.f32.mrf.mxu0
        %v897 = vadd.f32 0.0, %v896
        %v898 = vpop.f32.mrf.mxu0
        %899 = vmatprep.mubr.f32.mxu0 0.0
        %900 = vmatmul.mubr.f32.gmra.mxu0 %v602
        %v901 = vpop.f32.mrf.mxu0
        %v902 = vadd.f32 0.0, %v901
        %v903 = vpop.f32.mrf.mxu0
        %904 = vmatprep.mubr.f32.mxu0 0.0
        %905 = vmatmul.mubr.f32.gmra.mxu0 %v605
        %v906 = vpop.f32.mrf.mxu0
        %v907 = vadd.f32 0.0, %v906
        %v908 = vpop.f32.mrf.mxu0
        %909 = vmatprep.mubr.f32.mxu0 0.0
        %910 = vmatmul.mubr.f32.gmra.mxu0 %v608
        %v911 = vpop.f32.mrf.mxu0
        %v912 = vadd.f32 0.0, %v911
        %v913 = vpop.f32.mrf.mxu0
        %914 = vmatprep.mubr.f32.mxu0 0.0
        %915 = vmatmul.mubr.f32.gmra.mxu0 %v611
        %v916 = vpop.f32.mrf.mxu0
        %v917 = vadd.f32 0.0, %v916
        %v918 = vpop.f32.mrf.mxu0
        %919 = vmatprep.mubr.f32.mxu0 0.0
        %920 = vmatmul.mubr.f32.gmra.mxu0 %v614
        %v921 = vpop.f32.mrf.mxu0
        %v922 = vadd.f32 0.0, %v921
        %v923 = vpop.f32.mrf.mxu0
        %924 = vmatprep.mubr.f32.mxu0 0.0
        %925 = vmatmul.mubr.f32.gmra.mxu0 %v617
        %v926 = vpop.f32.mrf.mxu0
        %v927 = vadd.f32 0.0, %v926
        %v928 = vpop.f32.mrf.mxu0
        %929 = vmatprep.mubr.f32.mxu0 0.0
        %930 = vmatmul.mubr.f32.gmra.mxu0 %v620
        %v931 = vpop.f32.mrf.mxu0
        %v932 = vadd.f32 0.0, %v931
        %v933 = vpop.f32.mrf.mxu0
        %934 = vmatprep.mubr.f32.mxu0 0.0
        %935 = vmatmul.mubr.f32.gmra.mxu0 %v623
        %v936 = vpop.f32.mrf.mxu0
        %v937 = vadd.f32 0.0, %v936
        %v938 = vpop.f32.mrf.mxu0
        %939 = vmatprep.mubr.f32.mxu0 0.0
        %940 = vmatmul.mubr.f32.gmra.mxu0 %v626
        %v941 = vpop.f32.mrf.mxu0
        %v942 = vadd.f32 0.0, %v941
        %v943 = vpop.f32.mrf.mxu0
        %944 = vmatprep.mubr.f32.mxu0 0.0
        %945 = vmatmul.mubr.f32.gmra.mxu0 %v629
        %v946 = vpop.f32.mrf.mxu0
        %v947 = vadd.f32 0.0, %v946
        %v948 = vpop.f32.mrf.mxu0
        %949 = vmatprep.mubr.f32.mxu0 0.0
        %950 = vmatmul.mubr.f32.gmra.mxu0 %v632
        %v951 = vpop.f32.mrf.mxu0
        %v952 = vadd.f32 0.0, %v951
        %v953 = vpop.f32.mrf.mxu0
        %954 = vmatprep.mubr.f32.mxu0 0.0
        %955 = vmatmul.mubr.f32.gmra.mxu0 %v635
        %v956 = vpop.f32.mrf.mxu0
        %v957 = vadd.f32 0.0, %v956
        %v958 = vpop.f32.mrf.mxu0
        %959 = vmatprep.mubr.f32.mxu0 0.0
        %960 = vmatmul.mubr.f32.gmra.mxu0 %v638
        %v961 = vpop.f32.mrf.mxu0
        %v962 = vadd.f32 0.0, %v961
        %v963 = vpop.f32.mrf.mxu0
        %964 = vmatprep.mubr.f32.mxu0 0.0
        %965 = vmatmul.mubr.f32.gmra.mxu0 %v641
        %v966 = vpop.f32.mrf.mxu0
        %v967 = vadd.f32 0.0, %v966
        %v968 = vpop.f32.mrf.mxu0
        %969 = vmatprep.mubr.f32.mxu0 0.0
        %970 = vmatmul.mubr.f32.gmra.mxu0 %v644
        %v971 = vpop.f32.mrf.mxu0
        %v972 = vadd.f32 0.0, %v971
        %v973 = vpop.f32.mrf.mxu0
        %974 = vmatprep.mubr.f32.mxu0 0.0
        %975 = vmatmul.mubr.f32.gmra.mxu0 %v647
        %v976 = vpop.f32.mrf.mxu0
        %v977 = vadd.f32 0.0, %v976
        %v978 = vpop.f32.mrf.mxu0
        %979 = vmatprep.mubr.f32.mxu0 0.0
        %980 = vmatmul.mubr.f32.gmra.mxu0 %v650
        %v981 = vpop.f32.mrf.mxu0
        %v982 = vadd.f32 0.0, %v981
        %v983 = vpop.f32.mrf.mxu0
        %984 = vmatprep.mubr.f32.mxu0 0.0
        %985 = vmatmul.mubr.f32.gmra.mxu0 %v653
        %v986 = vpop.f32.mrf.mxu0
        %v987 = vadd.f32 0.0, %v986
        %v988 = vpop.f32.mrf.mxu0
        %989 = vmatprep.mubr.f32.mxu0 0.0
        %990 = vmatmul.mubr.f32.gmra.mxu0 %v656
        %v991 = vpop.f32.mrf.mxu0
        %v992 = vadd.f32 0.0, %v991
        %v993 = vpop.f32.mrf.mxu0
        %994 = vmatprep.mubr.f32.mxu0 0.0
        %995 = vmatmul.mubr.f32.gmra.mxu0 %v659
        %v996 = vpop.f32.mrf.mxu0
        %v997 = vadd.f32 0.0, %v996
        %v998 = vpop.f32.mrf.mxu0
        %999 = vmatprep.mubr.f32.mxu0 0.0
        %1000 = vmatmul.mubr.f32.gmra.mxu0 %v662
        %v1001 = vpop.f32.mrf.mxu0
        %v1002 = vadd.f32 0.0, %v1001
        %v1003 = vpop.f32.mrf.mxu0
        %1004 = vmatprep.mubr.f32.mxu0 0.0
        %1005 = vmatmul.mubr.f32.gmra.mxu0 %v665
        %v1006 = vpop.f32.mrf.mxu0
        %v1007 = vadd.f32 0.0, %v1006
        %v1008 = vpop.f32.mrf.mxu0
        %1009 = vmatprep.mubr.f32.mxu0 0.0
        %1010 = vmatmul.mubr.f32.gmra.mxu0 %v668
        %v1011 = vpop.f32.mrf.mxu0
        %v1012 = vadd.f32 0.0, %v1011
        %v1013 = vpop.f32.mrf.mxu0
        %1014 = vmatprep.mubr.f32.mxu0 0.0
        %1015 = vmatmul.mubr.f32.gmra.mxu0 %v671
        %v1016 = vpop.f32.mrf.mxu0
        %v1017 = vadd.f32 0.0, %v1016
        %v1018 = vpop.f32.mrf.mxu0
        %1019 = vmatprep.mubr.f32.mxu0 0.0
        %1020 = vmatmul.mubr.f32.gmra.mxu0 %v674
        %v1021 = vpop.f32.mrf.mxu0
        %v1022 = vadd.f32 0.0, %v1021
        %v1023 = vpop.f32.mrf.mxu0
        %1024 = vmatprep.mubr.f32.mxu0 0.0
        %1025 = vmatmul.mubr.f32.gmra.mxu0 %v677
        %v1026 = vpop.f32.mrf.mxu0
        %v1027 = vadd.f32 0.0, %v1026
        %v1028 = vpop.f32.mrf.mxu0
        %1029 = vmatprep.mubr.f32.mxu0 0.0
        %1030 = vmatmul.mubr.f32.gmra.mxu0 %v680
        %v1031 = vpop.f32.mrf.mxu0
        %v1032 = vadd.f32 0.0, %v1031
        %v1033 = vpop.f32.mrf.mxu0
        %1034 = vmatprep.mubr.f32.mxu0 0.0
        %1035 = vmatmul.mubr.f32.gmra.mxu0 %v683
        %v1036 = vpop.f32.mrf.mxu0
        %v1037 = vadd.f32 0.0, %v1036
        %v1038 = vpop.f32.mrf.mxu0
        %1039 = vmatprep.mubr.f32.mxu0 0.0
        %1040 = vmatmul.mubr.f32.gmra.mxu0 %v686
        %v1041 = vpop.f32.mrf.mxu0
        %v1042 = vadd.f32 0.0, %v1041
        %v1043 = vpop.f32.mrf.mxu0
        %1044 = vmatprep.mubr.f32.mxu0 0.0
        %1045 = vmatmul.mubr.f32.gmra.mxu0 %v689
        %v1046 = vpop.f32.mrf.mxu0
        %v1047 = vadd.f32 0.0, %v1046
        %v1048 = vpop.f32.mrf.mxu0
        %1049 = vmatprep.mubr.f32.mxu0 0.0
        %1050 = vmatmul.mubr.f32.gmra.mxu0 %v692
        %v1051 = vpop.f32.mrf.mxu0
        %v1052 = vadd.f32 0.0, %v1051
        %v1053 = vpop.f32.mrf.mxu0
        %1054 = vmatprep.mubr.f32.mxu0 0.0
        %1055 = vmatmul.mubr.f32.gmra.mxu0 %v695
        %v1056 = vpop.f32.mrf.mxu0
        %v1057 = vadd.f32 0.0, %v1056
        %v1058 = vpop.f32.mrf.mxu0
        %1059 = vmatprep.mubr.f32.mxu0 0.0
        %1060 = vmatmul.mubr.f32.gmra.mxu0 %v698
        %v1061 = vpop.f32.mrf.mxu0
        %v1062 = vadd.f32 0.0, %v1061
        %v1063 = vpop.f32.mrf.mxu0
        %1064 = vmatprep.mubr.f32.mxu0 0.0
        %1065 = vmatmul.mubr.f32.gmra.mxu0 %v701
        %v1066 = vpop.f32.mrf.mxu0
        %v1067 = vadd.f32 0.0, %v1066
        %v1068 = vpop.f32.mrf.mxu0
        %1069 = vmatprep.mubr.f32.mxu0 0.0
        %1070 = vmatmul.mubr.f32.gmra.mxu0 %v704
        %v1071 = vpop.f32.mrf.mxu0
        %v1072 = vadd.f32 0.0, %v1071
        %v1073 = vpop.f32.mrf.mxu0
        %1074 = vmatprep.mubr.f32.mxu0 0.0
        %1075 = vmatmul.mubr.f32.gmra.mxu0 %v707
        %v1076 = vpop.f32.mrf.mxu0
        %v1077 = vadd.f32 0.0, %v1076
        %v1078 = vpop.f32.mrf.mxu0
        %1079 = vmatprep.mubr.f32.mxu0 0.0
        %1080 = vmatmul.mubr.f32.gmra.mxu0 %v710
        %v1081 = vpop.f32.mrf.mxu0
        %v1082 = vadd.f32 0.0, %v1081
        %v1083 = vpop.f32.mrf.mxu0
        %1084 = vmatprep.mubr.f32.mxu0 0.0
        %1085 = vmatmul.mubr.f32.gmra.mxu0 %v713
        %v1086 = vpop.f32.mrf.mxu0
        %v1087 = vadd.f32 0.0, %v1086
        %v1088 = vpop.f32.mrf.mxu0
        %1089 = vmatprep.mubr.f32.mxu0 0.0
        %1090 = vmatmul.mubr.f32.gmra.mxu0 %v716
        %v1091 = vpop.f32.mrf.mxu0
        %v1092 = vadd.f32 0.0, %v1091
        %v1093 = vpop.f32.mrf.mxu0
        %1094 = vmatprep.mubr.f32.mxu0 0.0
        %1095 = vmatmul.mubr.f32.gmra.mxu0 %v719
        %v1096 = vpop.f32.mrf.mxu0
        %v1097 = vadd.f32 0.0, %v1096
        %v1098 = vpop.f32.mrf.mxu0
        %1099 = vmatprep.mubr.f32.mxu0 0.0
        %1100 = vmatmul.mubr.f32.gmra.mxu0 %v722
        %v1101 = vpop.f32.mrf.mxu0
        %v1102 = vadd.f32 0.0, %v1101
        %v1103 = vpop.f32.mrf.mxu0
        %1104 = vmatprep.mubr.f32.mxu0 0.0
        %1105 = vmatmul.mubr.f32.gmra.mxu0 %v725
        %v1106 = vpop.f32.mrf.mxu0
        %v1107 = vadd.f32 0.0, %v1106
        %v1108 = vpop.f32.mrf.mxu0
        %1109 = vmatprep.mubr.f32.mxu0 0.0
        %1110 = vmatmul.mubr.f32.gmra.mxu0 %v728
        %v1111 = vpop.f32.mrf.mxu0
        %v1112 = vadd.f32 0.0, %v1111
        %v1113 = vpop.f32.mrf.mxu0
        %1114 = vmatprep.mubr.f32.mxu0 0.0
        %1115 = vmatmul.mubr.f32.gmra.mxu0 %v731
        %v1116 = vpop.f32.mrf.mxu0
        %v1117 = vadd.f32 0.0, %v1116
        %v1118 = vpop.f32.mrf.mxu0
        %1119 = vmatprep.mubr.f32.mxu0 0.0
        %1120 = vmatmul.mubr.f32.gmra.mxu0 %v734
        %v1121 = vpop.f32.mrf.mxu0
        %v1122 = vadd.f32 0.0, %v1121
        %v1123 = vpop.f32.mrf.mxu0
        %1124 = vdwg.mxu0
        %v1125 = vlaneseq
        %v1126 = vshrl.u32 %v1125, 7
        %v1127 = vadd.s32 %v1126, 8
        %v1128 = vadd.s32 %v1126, 16
        %v1129 = vadd.s32 %v1126, 24
        %v1130 = vadd.s32 %v1126, 32
        %v1131 = vadd.s32 %v1126, 40
        %v1132 = vadd.s32 %v1126, 48
        %v1133 = vadd.s32 %v1126, 56
        %v1134 = vadd.s32 %v1126, 64
        %v1135 = vadd.s32 %v1126, 72
        %v1136 = vadd.s32 %v1126, 80
        %v1137 = vadd.s32 %v1126, 88
        %v1138 = vadd.s32 %v1126, 96
        %v1139 = vadd.s32 %v1126, 104
        %v1140 = vadd.s32 %v1126, 112
        %v1141 = vadd.s32 %v1126, 120
        %v1142 = vadd.s32 %v1126, 128
        %v1143 = vadd.s32 %v1126, 136
        %v1144 = vadd.s32 %v1126, 144
        %v1145 = vadd.s32 %v1126, 152
        %v1146 = vadd.s32 %v1126, 160
        %v1147 = vadd.s32 %v1126, 168
        %v1148 = vadd.s32 %v1126, 176
        %v1149 = vadd.s32 %v1126, 184
        %v1150 = vadd.s32 %v1126, 192
        %v1151 = vadd.s32 %v1126, 200
        %v1152 = vadd.s32 %v1126, 208
        %v1153 = vadd.s32 %v1126, 216
        %v1154 = vadd.s32 %v1126, 224
        %v1155 = vadd.s32 %v1126, 232
        %v1156 = vadd.s32 %v1126, 240
        %v1157 = vadd.s32 %v1126, 248
        %s1158 = smul.u32 %s29, 256
        %v1159 = vstv %s1158
        %v1160 = vadd.s32 %v1126, %v1159
        %v1161 = vadd.s32 %v1127, %v1159
        %v1162 = vadd.s32 %v1128, %v1159
        %v1163 = vadd.s32 %v1129, %v1159
        %v1164 = vadd.s32 %v1130, %v1159
        %v1165 = vadd.s32 %v1131, %v1159
        %v1166 = vadd.s32 %v1132, %v1159
        %v1167 = vadd.s32 %v1133, %v1159
        %v1168 = vadd.s32 %v1134, %v1159
        %v1169 = vadd.s32 %v1135, %v1159
        %v1170 = vadd.s32 %v1136, %v1159
        %v1171 = vadd.s32 %v1137, %v1159
        %v1172 = vadd.s32 %v1138, %v1159
        %v1173 = vadd.s32 %v1139, %v1159
        %v1174 = vadd.s32 %v1140, %v1159
        %v1175 = vadd.s32 %v1141, %v1159
        %v1176 = vadd.s32 %v1142, %v1159
        %v1177 = vadd.s32 %v1143, %v1159
        %v1178 = vadd.s32 %v1144, %v1159
        %v1179 = vadd.s32 %v1145, %v1159
        %v1180 = vadd.s32 %v1146, %v1159
        %v1181 = vadd.s32 %v1147, %v1159
        %v1182 = vadd.s32 %v1148, %v1159
        %v1183 = vadd.s32 %v1149, %v1159
        %v1184 = vadd.s32 %v1150, %v1159
        %v1185 = vadd.s32 %v1151, %v1159
        %v1186 = vadd.s32 %v1152, %v1159
        %v1187 = vadd.s32 %v1153, %v1159
        %v1188 = vadd.s32 %v1154, %v1159
        %v1189 = vadd.s32 %v1155, %v1159
        %v1190 = vadd.s32 %v1156, %v1159
        %v1191 = vadd.s32 %v1157, %v1159
        %v1192 = vld [vmem:[%s438] sm:$0xf]
        %v1193 = vlaneseq
        %v1194 = vshrl.u32 %v1193, 7
        %v1195 = vsub.s32 0, %v1194
        %v1196 = vrot.slane %v1192, %v1195
        %v1197 = vlaneseq
        %v1198 = vshrl.u32 %v1197, 7
        %v1199 = vsub.s32 1, %v1198
        %v1200 = vrot.slane %v1192, %v1199
        %v1201 = vlaneseq
        %v1202 = vshrl.u32 %v1201, 7
        %v1203 = vsub.s32 2, %v1202
        %v1204 = vrot.slane %v1192, %v1203
        %v1205 = vlaneseq
        %v1206 = vshrl.u32 %v1205, 7
        %v1207 = vsub.s32 3, %v1206
        %v1208 = vrot.slane %v1192, %v1207
        %vm1209 = vcmp.eq.s32.totalorder %v1160, %v1196
        %vm1210 = vcmp.eq.s32.totalorder %v1160, %v1200
        %vm1211 = vcmp.eq.s32.totalorder %v1160, %v1204
        %vm1212 = vcmp.eq.s32.totalorder %v1160, %v1208
        %vm1213 = vcmp.eq.s32.totalorder %v1161, %v1196
        %vm1214 = vcmp.eq.s32.totalorder %v1161, %v1200
        %vm1215 = vcmp.eq.s32.totalorder %v1161, %v1204
        %vm1216 = vcmp.eq.s32.totalorder %v1161, %v1208
        %vm1217 = vcmp.eq.s32.totalorder %v1162, %v1196
        %vm1218 = vcmp.eq.s32.totalorder %v1162, %v1200
        %vm1219 = vcmp.eq.s32.totalorder %v1162, %v1204
        %vm1220 = vcmp.eq.s32.totalorder %v1162, %v1208
        %vm1221 = vcmp.eq.s32.totalorder %v1163, %v1196
        %vm1222 = vcmp.eq.s32.totalorder %v1163, %v1200
        %vm1223 = vcmp.eq.s32.totalorder %v1163, %v1204
        %vm1224 = vcmp.eq.s32.totalorder %v1163, %v1208
        %vm1225 = vcmp.eq.s32.totalorder %v1164, %v1196
        %vm1226 = vcmp.eq.s32.totalorder %v1164, %v1200
        %vm1227 = vcmp.eq.s32.totalorder %v1164, %v1204
        %vm1228 = vcmp.eq.s32.totalorder %v1164, %v1208
        %vm1229 = vcmp.eq.s32.totalorder %v1165, %v1196
        %vm1230 = vcmp.eq.s32.totalorder %v1165, %v1200
        %vm1231 = vcmp.eq.s32.totalorder %v1165, %v1204
        %vm1232 = vcmp.eq.s32.totalorder %v1165, %v1208
        %vm1233 = vcmp.eq.s32.totalorder %v1166, %v1196
        %vm1234 = vcmp.eq.s32.totalorder %v1166, %v1200
        %vm1235 = vcmp.eq.s32.totalorder %v1166, %v1204
        %vm1236 = vcmp.eq.s32.totalorder %v1166, %v1208
        %vm1237 = vcmp.eq.s32.totalorder %v1167, %v1196
        %vm1238 = vcmp.eq.s32.totalorder %v1167, %v1200
        %vm1239 = vcmp.eq.s32.totalorder %v1167, %v1204
        %vm1240 = vcmp.eq.s32.totalorder %v1167, %v1208
        %vm1241 = vcmp.eq.s32.totalorder %v1168, %v1196
        %vm1242 = vcmp.eq.s32.totalorder %v1168, %v1200
        %vm1243 = vcmp.eq.s32.totalorder %v1168, %v1204
        %vm1244 = vcmp.eq.s32.totalorder %v1168, %v1208
        %vm1245 = vcmp.eq.s32.totalorder %v1169, %v1196
        %vm1246 = vcmp.eq.s32.totalorder %v1169, %v1200
        %vm1247 = vcmp.eq.s32.totalorder %v1169, %v1204
        %vm1248 = vcmp.eq.s32.totalorder %v1169, %v1208
        %vm1249 = vcmp.eq.s32.totalorder %v1170, %v1196
        %vm1250 = vcmp.eq.s32.totalorder %v1170, %v1200
        %vm1251 = vcmp.eq.s32.totalorder %v1170, %v1204
        %vm1252 = vcmp.eq.s32.totalorder %v1170, %v1208
        %vm1253 = vcmp.eq.s32.totalorder %v1171, %v1196
        %vm1254 = vcmp.eq.s32.totalorder %v1171, %v1200
        %vm1255 = vcmp.eq.s32.totalorder %v1171, %v1204
        %vm1256 = vcmp.eq.s32.totalorder %v1171, %v1208
        %vm1257 = vcmp.eq.s32.totalorder %v1172, %v1196
        %vm1258 = vcmp.eq.s32.totalorder %v1172, %v1200
        %vm1259 = vcmp.eq.s32.totalorder %v1172, %v1204
        %vm1260 = vcmp.eq.s32.totalorder %v1172, %v1208
        %vm1261 = vcmp.eq.s32.totalorder %v1173, %v1196
        %vm1262 = vcmp.eq.s32.totalorder %v1173, %v1200
        %vm1263 = vcmp.eq.s32.totalorder %v1173, %v1204
        %vm1264 = vcmp.eq.s32.totalorder %v1173, %v1208
        %vm1265 = vcmp.eq.s32.totalorder %v1174, %v1196
        %vm1266 = vcmp.eq.s32.totalorder %v1174, %v1200
        %vm1267 = vcmp.eq.s32.totalorder %v1174, %v1204
        %vm1268 = vcmp.eq.s32.totalorder %v1174, %v1208
        %vm1269 = vcmp.eq.s32.totalorder %v1175, %v1196
        %vm1270 = vcmp.eq.s32.totalorder %v1175, %v1200
        %vm1271 = vcmp.eq.s32.totalorder %v1175, %v1204
        %vm1272 = vcmp.eq.s32.totalorder %v1175, %v1208
        %vm1273 = vcmp.eq.s32.totalorder %v1176, %v1196
        %vm1274 = vcmp.eq.s32.totalorder %v1176, %v1200
        %vm1275 = vcmp.eq.s32.totalorder %v1176, %v1204
        %vm1276 = vcmp.eq.s32.totalorder %v1176, %v1208
        %vm1277 = vcmp.eq.s32.totalorder %v1177, %v1196
        %vm1278 = vcmp.eq.s32.totalorder %v1177, %v1200
        %vm1279 = vcmp.eq.s32.totalorder %v1177, %v1204
        %vm1280 = vcmp.eq.s32.totalorder %v1177, %v1208
        %vm1281 = vcmp.eq.s32.totalorder %v1178, %v1196
        %vm1282 = vcmp.eq.s32.totalorder %v1178, %v1200
        %vm1283 = vcmp.eq.s32.totalorder %v1178, %v1204
        %vm1284 = vcmp.eq.s32.totalorder %v1178, %v1208
        %vm1285 = vcmp.eq.s32.totalorder %v1179, %v1196
        %vm1286 = vcmp.eq.s32.totalorder %v1179, %v1200
        %vm1287 = vcmp.eq.s32.totalorder %v1179, %v1204
        %vm1288 = vcmp.eq.s32.totalorder %v1179, %v1208
        %vm1289 = vcmp.eq.s32.totalorder %v1180, %v1196
        %vm1290 = vcmp.eq.s32.totalorder %v1180, %v1200
        %vm1291 = vcmp.eq.s32.totalorder %v1180, %v1204
        %vm1292 = vcmp.eq.s32.totalorder %v1180, %v1208
        %vm1293 = vcmp.eq.s32.totalorder %v1181, %v1196
        %vm1294 = vcmp.eq.s32.totalorder %v1181, %v1200
        %vm1295 = vcmp.eq.s32.totalorder %v1181, %v1204
        %vm1296 = vcmp.eq.s32.totalorder %v1181, %v1208
        %vm1297 = vcmp.eq.s32.totalorder %v1182, %v1196
        %vm1298 = vcmp.eq.s32.totalorder %v1182, %v1200
        %vm1299 = vcmp.eq.s32.totalorder %v1182, %v1204
        %vm1300 = vcmp.eq.s32.totalorder %v1182, %v1208
        %vm1301 = vcmp.eq.s32.totalorder %v1183, %v1196
        %vm1302 = vcmp.eq.s32.totalorder %v1183, %v1200
        %vm1303 = vcmp.eq.s32.totalorder %v1183, %v1204
        %vm1304 = vcmp.eq.s32.totalorder %v1183, %v1208
        %vm1305 = vcmp.eq.s32.totalorder %v1184, %v1196
        %vm1306 = vcmp.eq.s32.totalorder %v1184, %v1200
        %vm1307 = vcmp.eq.s32.totalorder %v1184, %v1204
        %vm1308 = vcmp.eq.s32.totalorder %v1184, %v1208
        %vm1309 = vcmp.eq.s32.totalorder %v1185, %v1196
        %vm1310 = vcmp.eq.s32.totalorder %v1185, %v1200
        %vm1311 = vcmp.eq.s32.totalorder %v1185, %v1204
        %vm1312 = vcmp.eq.s32.totalorder %v1185, %v1208
        %vm1313 = vcmp.eq.s32.totalorder %v1186, %v1196
        %vm1314 = vcmp.eq.s32.totalorder %v1186, %v1200
        %vm1315 = vcmp.eq.s32.totalorder %v1186, %v1204
        %vm1316 = vcmp.eq.s32.totalorder %v1186, %v1208
        %vm1317 = vcmp.eq.s32.totalorder %v1187, %v1196
        %vm1318 = vcmp.eq.s32.totalorder %v1187, %v1200
        %vm1319 = vcmp.eq.s32.totalorder %v1187, %v1204
        %vm1320 = vcmp.eq.s32.totalorder %v1187, %v1208
        %vm1321 = vcmp.eq.s32.totalorder %v1188, %v1196
        %vm1322 = vcmp.eq.s32.totalorder %v1188, %v1200
        %vm1323 = vcmp.eq.s32.totalorder %v1188, %v1204
        %vm1324 = vcmp.eq.s32.totalorder %v1188, %v1208
        %vm1325 = vcmp.eq.s32.totalorder %v1189, %v1196
        %vm1326 = vcmp.eq.s32.totalorder %v1189, %v1200
        %vm1327 = vcmp.eq.s32.totalorder %v1189, %v1204
        %vm1328 = vcmp.eq.s32.totalorder %v1189, %v1208
        %vm1329 = vcmp.eq.s32.totalorder %v1190, %v1196
        %vm1330 = vcmp.eq.s32.totalorder %v1190, %v1200
        %vm1331 = vcmp.eq.s32.totalorder %v1190, %v1204
        %vm1332 = vcmp.eq.s32.totalorder %v1190, %v1208
        %vm1333 = vcmp.eq.s32.totalorder %v1191, %v1196
        %vm1334 = vcmp.eq.s32.totalorder %v1191, %v1200
        %vm1335 = vcmp.eq.s32.totalorder %v1191, %v1204
        %vm1336 = vcmp.eq.s32.totalorder %v1191, %v1208
        %v1337 = vsel %vm1209, 1, 0
        %v1338 = vsel %vm1210, 1, 0
        %v1339 = vsel %vm1211, 1, 0
        %v1340 = vsel %vm1212, 1, 0
        %v1341 = vsel %vm1213, 1, 0
        %v1342 = vsel %vm1214, 1, 0
        %v1343 = vsel %vm1215, 1, 0
        %v1344 = vsel %vm1216, 1, 0
        %v1345 = vsel %vm1217, 1, 0
        %v1346 = vsel %vm1218, 1, 0
        %v1347 = vsel %vm1219, 1, 0
        %v1348 = vsel %vm1220, 1, 0
        %v1349 = vsel %vm1221, 1, 0
        %v1350 = vsel %vm1222, 1, 0
        %v1351 = vsel %vm1223, 1, 0
        %v1352 = vsel %vm1224, 1, 0
        %v1353 = vsel %vm1225, 1, 0
        %v1354 = vsel %vm1226, 1, 0
        %v1355 = vsel %vm1227, 1, 0
        %v1356 = vsel %vm1228, 1, 0
        %v1357 = vsel %vm1229, 1, 0
        %v1358 = vsel %vm1230, 1, 0
        %v1359 = vsel %vm1231, 1, 0
        %v1360 = vsel %vm1232, 1, 0
        %v1361 = vsel %vm1233, 1, 0
        %v1362 = vsel %vm1234, 1, 0
        %v1363 = vsel %vm1235, 1, 0
        %v1364 = vsel %vm1236, 1, 0
        %v1365 = vsel %vm1237, 1, 0
        %v1366 = vsel %vm1238, 1, 0
        %v1367 = vsel %vm1239, 1, 0
        %v1368 = vsel %vm1240, 1, 0
        %v1369 = vsel %vm1241, 1, 0
        %v1370 = vsel %vm1242, 1, 0
        %v1371 = vsel %vm1243, 1, 0
        %v1372 = vsel %vm1244, 1, 0
        %v1373 = vsel %vm1245, 1, 0
        %v1374 = vsel %vm1246, 1, 0
        %v1375 = vsel %vm1247, 1, 0
        %v1376 = vsel %vm1248, 1, 0
        %v1377 = vsel %vm1249, 1, 0
        %v1378 = vsel %vm1250, 1, 0
        %v1379 = vsel %vm1251, 1, 0
        %v1380 = vsel %vm1252, 1, 0
        %v1381 = vsel %vm1253, 1, 0
        %v1382 = vsel %vm1254, 1, 0
        %v1383 = vsel %vm1255, 1, 0
        %v1384 = vsel %vm1256, 1, 0
        %v1385 = vsel %vm1257, 1, 0
        %v1386 = vsel %vm1258, 1, 0
        %v1387 = vsel %vm1259, 1, 0
        %v1388 = vsel %vm1260, 1, 0
        %v1389 = vsel %vm1261, 1, 0
        %v1390 = vsel %vm1262, 1, 0
        %v1391 = vsel %vm1263, 1, 0
        %v1392 = vsel %vm1264, 1, 0
        %v1393 = vsel %vm1265, 1, 0
        %v1394 = vsel %vm1266, 1, 0
        %v1395 = vsel %vm1267, 1, 0
        %v1396 = vsel %vm1268, 1, 0
        %v1397 = vsel %vm1269, 1, 0
        %v1398 = vsel %vm1270, 1, 0
        %v1399 = vsel %vm1271, 1, 0
        %v1400 = vsel %vm1272, 1, 0
        %v1401 = vsel %vm1273, 1, 0
        %v1402 = vsel %vm1274, 1, 0
        %v1403 = vsel %vm1275, 1, 0
        %v1404 = vsel %vm1276, 1, 0
        %v1405 = vsel %vm1277, 1, 0
        %v1406 = vsel %vm1278, 1, 0
        %v1407 = vsel %vm1279, 1, 0
        %v1408 = vsel %vm1280, 1, 0
        %v1409 = vsel %vm1281, 1, 0
        %v1410 = vsel %vm1282, 1, 0
        %v1411 = vsel %vm1283, 1, 0
        %v1412 = vsel %vm1284, 1, 0
        %v1413 = vsel %vm1285, 1, 0
        %v1414 = vsel %vm1286, 1, 0
        %v1415 = vsel %vm1287, 1, 0
        %v1416 = vsel %vm1288, 1, 0
        %v1417 = vsel %vm1289, 1, 0
        %v1418 = vsel %vm1290, 1, 0
        %v1419 = vsel %vm1291, 1, 0
        %v1420 = vsel %vm1292, 1, 0
        %v1421 = vsel %vm1293, 1, 0
        %v1422 = vsel %vm1294, 1, 0
        %v1423 = vsel %vm1295, 1, 0
        %v1424 = vsel %vm1296, 1, 0
        %v1425 = vsel %vm1297, 1, 0
        %v1426 = vsel %vm1298, 1, 0
        %v1427 = vsel %vm1299, 1, 0
        %v1428 = vsel %vm1300, 1, 0
        %v1429 = vsel %vm1301, 1, 0
        %v1430 = vsel %vm1302, 1, 0
        %v1431 = vsel %vm1303, 1, 0
        %v1432 = vsel %vm1304, 1, 0
        %v1433 = vsel %vm1305, 1, 0
        %v1434 = vsel %vm1306, 1, 0
        %v1435 = vsel %vm1307, 1, 0
        %v1436 = vsel %vm1308, 1, 0
        %v1437 = vsel %vm1309, 1, 0
        %v1438 = vsel %vm1310, 1, 0
        %v1439 = vsel %vm1311, 1, 0
        %v1440 = vsel %vm1312, 1, 0
        %v1441 = vsel %vm1313, 1, 0
        %v1442 = vsel %vm1314, 1, 0
        %v1443 = vsel %vm1315, 1, 0
        %v1444 = vsel %vm1316, 1, 0
        %v1445 = vsel %vm1317, 1, 0
        %v1446 = vsel %vm1318, 1, 0
        %v1447 = vsel %vm1319, 1, 0
        %v1448 = vsel %vm1320, 1, 0
        %v1449 = vsel %vm1321, 1, 0
        %v1450 = vsel %vm1322, 1, 0
        %v1451 = vsel %vm1323, 1, 0
        %v1452 = vsel %vm1324, 1, 0
        %v1453 = vsel %vm1325, 1, 0
        %v1454 = vsel %vm1326, 1, 0
        %v1455 = vsel %vm1327, 1, 0
        %v1456 = vsel %vm1328, 1, 0
        %v1457 = vsel %vm1329, 1, 0
        %v1458 = vsel %vm1330, 1, 0
        %v1459 = vsel %vm1331, 1, 0
        %v1460 = vsel %vm1332, 1, 0
        %v1461 = vsel %vm1333, 1, 0
        %v1462 = vsel %vm1334, 1, 0
        %v1463 = vsel %vm1335, 1, 0
        %v1464 = vsel %vm1336, 1, 0
        %v1465 = vcvt.s32.f32 %v1337
        %v1466 = vcvt.s32.f32 %v1338
        %v1467 = vcvt.s32.f32 %v1339
        %v1468 = vcvt.s32.f32 %v1340
        %v1469 = vcvt.s32.f32 %v1341
        %v1470 = vcvt.s32.f32 %v1342
        %v1471 = vcvt.s32.f32 %v1343
        %v1472 = vcvt.s32.f32 %v1344
        %v1473 = vcvt.s32.f32 %v1345
        %v1474 = vcvt.s32.f32 %v1346
        %v1475 = vcvt.s32.f32 %v1347
        %v1476 = vcvt.s32.f32 %v1348
        %v1477 = vcvt.s32.f32 %v1349
        %v1478 = vcvt.s32.f32 %v1350
        %v1479 = vcvt.s32.f32 %v1351
        %v1480 = vcvt.s32.f32 %v1352
        %v1481 = vcvt.s32.f32 %v1353
        %v1482 = vcvt.s32.f32 %v1354
        %v1483 = vcvt.s32.f32 %v1355
        %v1484 = vcvt.s32.f32 %v1356
        %v1485 = vcvt.s32.f32 %v1357
        %v1486 = vcvt.s32.f32 %v1358
        %v1487 = vcvt.s32.f32 %v1359
        %v1488 = vcvt.s32.f32 %v1360
        %v1489 = vcvt.s32.f32 %v1361
        %v1490 = vcvt.s32.f32 %v1362
        %v1491 = vcvt.s32.f32 %v1363
        %v1492 = vcvt.s32.f32 %v1364
        %v1493 = vcvt.s32.f32 %v1365
        %v1494 = vcvt.s32.f32 %v1366
        %v1495 = vcvt.s32.f32 %v1367
        %v1496 = vcvt.s32.f32 %v1368
        %v1497 = vcvt.s32.f32 %v1369
        %v1498 = vcvt.s32.f32 %v1370
        %v1499 = vcvt.s32.f32 %v1371
        %v1500 = vcvt.s32.f32 %v1372
        %v1501 = vcvt.s32.f32 %v1373
        %v1502 = vcvt.s32.f32 %v1374
        %v1503 = vcvt.s32.f32 %v1375
        %v1504 = vcvt.s32.f32 %v1376
        %v1505 = vcvt.s32.f32 %v1377
        %v1506 = vcvt.s32.f32 %v1378
        %v1507 = vcvt.s32.f32 %v1379
        %v1508 = vcvt.s32.f32 %v1380
        %v1509 = vcvt.s32.f32 %v1381
        %v1510 = vcvt.s32.f32 %v1382
        %v1511 = vcvt.s32.f32 %v1383
        %v1512 = vcvt.s32.f32 %v1384
        %v1513 = vcvt.s32.f32 %v1385
        %v1514 = vcvt.s32.f32 %v1386
        %v1515 = vcvt.s32.f32 %v1387
        %v1516 = vcvt.s32.f32 %v1388
        %v1517 = vcvt.s32.f32 %v1389
        %v1518 = vcvt.s32.f32 %v1390
        %v1519 = vcvt.s32.f32 %v1391
        %v1520 = vcvt.s32.f32 %v1392
        %v1521 = vcvt.s32.f32 %v1393
        %v1522 = vcvt.s32.f32 %v1394
        %v1523 = vcvt.s32.f32 %v1395
        %v1524 = vcvt.s32.f32 %v1396
        %v1525 = vcvt.s32.f32 %v1397
        %v1526 = vcvt.s32.f32 %v1398
        %v1527 = vcvt.s32.f32 %v1399
        %v1528 = vcvt.s32.f32 %v1400
        %v1529 = vcvt.s32.f32 %v1401
        %v1530 = vcvt.s32.f32 %v1402
        %v1531 = vcvt.s32.f32 %v1403
        %v1532 = vcvt.s32.f32 %v1404
        %v1533 = vcvt.s32.f32 %v1405
        %v1534 = vcvt.s32.f32 %v1406
        %v1535 = vcvt.s32.f32 %v1407
        %v1536 = vcvt.s32.f32 %v1408
        %v1537 = vcvt.s32.f32 %v1409
        %v1538 = vcvt.s32.f32 %v1410
        %v1539 = vcvt.s32.f32 %v1411
        %v1540 = vcvt.s32.f32 %v1412
        %v1541 = vcvt.s32.f32 %v1413
        %v1542 = vcvt.s32.f32 %v1414
        %v1543 = vcvt.s32.f32 %v1415
        %v1544 = vcvt.s32.f32 %v1416
        %v1545 = vcvt.s32.f32 %v1417
        %v1546 = vcvt.s32.f32 %v1418
        %v1547 = vcvt.s32.f32 %v1419
        %v1548 = vcvt.s32.f32 %v1420
        %v1549 = vcvt.s32.f32 %v1421
        %v1550 = vcvt.s32.f32 %v1422
        %v1551 = vcvt.s32.f32 %v1423
        %v1552 = vcvt.s32.f32 %v1424
        %v1553 = vcvt.s32.f32 %v1425
        %v1554 = vcvt.s32.f32 %v1426
        %v1555 = vcvt.s32.f32 %v1427
        %v1556 = vcvt.s32.f32 %v1428
        %v1557 = vcvt.s32.f32 %v1429
        %v1558 = vcvt.s32.f32 %v1430
        %v1559 = vcvt.s32.f32 %v1431
        %v1560 = vcvt.s32.f32 %v1432
        %v1561 = vcvt.s32.f32 %v1433
        %v1562 = vcvt.s32.f32 %v1434
        %v1563 = vcvt.s32.f32 %v1435
        %v1564 = vcvt.s32.f32 %v1436
        %v1565 = vcvt.s32.f32 %v1437
        %v1566 = vcvt.s32.f32 %v1438
        %v1567 = vcvt.s32.f32 %v1439
        %v1568 = vcvt.s32.f32 %v1440
        %v1569 = vcvt.s32.f32 %v1441
        %v1570 = vcvt.s32.f32 %v1442
        %v1571 = vcvt.s32.f32 %v1443
        %v1572 = vcvt.s32.f32 %v1444
        %v1573 = vcvt.s32.f32 %v1445
        %v1574 = vcvt.s32.f32 %v1446
        %v1575 = vcvt.s32.f32 %v1447
        %v1576 = vcvt.s32.f32 %v1448
        %v1577 = vcvt.s32.f32 %v1449
        %v1578 = vcvt.s32.f32 %v1450
        %v1579 = vcvt.s32.f32 %v1451
        %v1580 = vcvt.s32.f32 %v1452
        %v1581 = vcvt.s32.f32 %v1453
        %v1582 = vcvt.s32.f32 %v1454
        %v1583 = vcvt.s32.f32 %v1455
        %v1584 = vcvt.s32.f32 %v1456
        %v1585 = vcvt.s32.f32 %v1457
        %v1586 = vcvt.s32.f32 %v1458
        %v1587 = vcvt.s32.f32 %v1459
        %v1588 = vcvt.s32.f32 %v1460
        %v1589 = vcvt.s32.f32 %v1461
        %v1590 = vcvt.s32.f32 %v1462
        %v1591 = vcvt.s32.f32 %v1463
        %v1592 = vcvt.s32.f32 %v1464
        %v1593 = vld [vmem:[#allocation2] sm:$0xff]
        %v1594 = vld [vmem:[#allocation2 + $0x8] sm:$0xff]
        %v1595 = vld [vmem:[#allocation2 + $0x10] sm:$0xff]
        %v1596 = vld [vmem:[#allocation2 + $0x18] sm:$0xff]
        %v1597 = vld [vmem:[#allocation2 + $0x20] sm:$0xff]
        %v1598 = vld [vmem:[#allocation2 + $0x28] sm:$0xff]
        %v1599 = vld [vmem:[#allocation2 + $0x30] sm:$0xff]
        %v1600 = vld [vmem:[#allocation2 + $0x38] sm:$0xff]
        %v1601 = vld [vmem:[#allocation2 + $0x40] sm:$0xff]
        %v1602 = vld [vmem:[#allocation2 + $0x48] sm:$0xff]
        %v1603 = vld [vmem:[#allocation2 + $0x50] sm:$0xff]
        %v1604 = vld [vmem:[#allocation2 + $0x58] sm:$0xff]
        %v1605 = vld [vmem:[#allocation2 + $0x60] sm:$0xff]
        %v1606 = vld [vmem:[#allocation2 + $0x68] sm:$0xff]
        %v1607 = vld [vmem:[#allocation2 + $0x70] sm:$0xff]
        %v1608 = vld [vmem:[#allocation2 + $0x78] sm:$0xff]
        %v1609 = vld [vmem:[#allocation2 + $0x80] sm:$0xff]
        %v1610 = vld [vmem:[#allocation2 + $0x88] sm:$0xff]
        %v1611 = vld [vmem:[#allocation2 + $0x90] sm:$0xff]
        %v1612 = vld [vmem:[#allocation2 + $0x98] sm:$0xff]
        %v1613 = vld [vmem:[#allocation2 + $0xa0] sm:$0xff]
        %v1614 = vld [vmem:[#allocation2 + $0xa8] sm:$0xff]
        %v1615 = vld [vmem:[#allocation2 + $0xb0] sm:$0xff]
        %v1616 = vld [vmem:[#allocation2 + $0xb8] sm:$0xff]
        %v1617 = vld [vmem:[#allocation2 + $0xc0] sm:$0xff]
        %v1618 = vld [vmem:[#allocation2 + $0xc8] sm:$0xff]
        %v1619 = vld [vmem:[#allocation2 + $0xd0] sm:$0xff]
        %v1620 = vld [vmem:[#allocation2 + $0xd8] sm:$0xff]
        %v1621 = vld [vmem:[#allocation2 + $0xe0] sm:$0xff]
        %v1622 = vld [vmem:[#allocation2 + $0xe8] sm:$0xff]
        %v1623 = vld [vmem:[#allocation2 + $0xf0] sm:$0xff]
        %v1624 = vld [vmem:[#allocation2 + $0xf8] sm:$0xff]
        %1625 = vmatprep.subr.mxu0 0.0
        %1626 = vmatpush1.msra.mxu0 %v882
        %1627 = vmatprep.subr.mxu0 0.0
        %1628 = vmatpush1.msra.mxu0 %v877
        %1629 = vmatprep.subr.mxu0 0.0
        %1630 = vmatpush1.msra.mxu0 %v872
        %1631 = vmatprep.subr.mxu0 0.0
        %1632 = vmatpush1.msra.mxu0 %v867
        %1633 = vmatprep.subr.mxu0 0.0
        %1634 = vmatpush1.msra.mxu0 %v862
        %1635 = vmatprep.subr.mxu0 0.0
        %1636 = vmatpush1.msra.mxu0 %v857
        %1637 = vmatprep.subr.mxu0 0.0
        %1638 = vmatpush1.msra.mxu0 %v852
        %1639 = vmatprep.subr.mxu0 0.0
        %1640 = vmatpush1.msra.mxu0 %v847
        %1641 = vmatprep.subr.mxu0 0.0
        %1642 = vmatpush1.msra.mxu0 %v842
        %1643 = vmatprep.subr.mxu0 0.0
        %1644 = vmatpush1.msra.mxu0 %v837
        %1645 = vmatprep.subr.mxu0 0.0
        %1646 = vmatpush1.msra.mxu0 %v832
        %1647 = vmatprep.subr.mxu0 0.0
        %1648 = vmatpush1.msra.mxu0 %v827
        %1649 = vmatprep.subr.mxu0 0.0
        %1650 = vmatpush1.msra.mxu0 %v822
        %1651 = vmatprep.subr.mxu0 0.0
        %1652 = vmatpush1.msra.mxu0 %v817
        %1653 = vmatprep.subr.mxu0 0.0
        %1654 = vmatpush1.msra.mxu0 %v812
        %1655 = vmatprep.subr.mxu0 0.0
        %1656 = vmatpush1.msra.mxu0 %v807
        %1657 = vmatprep.subr.mxu0 0.0
        %1658 = vmatpush2.msra.mxu0 %v962
        %1659 = vmatprep.subr.mxu0 0.0
        %1660 = vmatpush2.msra.mxu0 %v957
        %1661 = vmatprep.subr.mxu0 0.0
        %1662 = vmatpush2.msra.mxu0 %v952
        %1663 = vmatprep.subr.mxu0 0.0
        %1664 = vmatpush2.msra.mxu0 %v947
        %1665 = vmatprep.subr.mxu0 0.0
        %1666 = vmatpush2.msra.mxu0 %v942
        %1667 = vmatprep.subr.mxu0 0.0
        %1668 = vmatpush2.msra.mxu0 %v937
        %1669 = vmatprep.subr.mxu0 0.0
        %1670 = vmatpush2.msra.mxu0 %v932
        %1671 = vmatprep.subr.mxu0 0.0
        %1672 = vmatpush2.msra.mxu0 %v927
        %1673 = vmatprep.subr.mxu0 0.0
        %1674 = vmatpush2.msra.mxu0 %v922
        %1675 = vmatprep.subr.mxu0 0.0
        %1676 = vmatpush2.msra.mxu0 %v917
        %1677 = vmatprep.subr.mxu0 0.0
        %1678 = vmatpush2.msra.mxu0 %v912
        %1679 = vmatprep.subr.mxu0 0.0
        %1680 = vmatpush2.msra.mxu0 %v907
        %1681 = vmatprep.subr.mxu0 0.0
        %1682 = vmatpush2.msra.mxu0 %v902
        %1683 = vmatprep.subr.mxu0 0.0
        %1684 = vmatpush2.msra.mxu0 %v897
        %1685 = vmatprep.subr.mxu0 0.0
        %1686 = vmatpush2.msra.mxu0 %v892
        %1687 = vmatprep.subr.mxu0 0.0
        %1688 = vmatpush2.msra.mxu0 %v887
        %1689 = vmatprep.mubr.f32.mxu0 %v1466
        %1690 = vmatmul.mubr.f32.gmra.mxu0 %v1465
        %v1691 = vpop.f32.mrf.mxu0
        %v1692 = vadd.f32 0.0, %v1691
        %v1693 = vpop.f32.mrf.mxu0
        %1694 = vmatprep.mubr.f32.mxu0 %v1470
        %1695 = vmatmul.mubr.f32.gmra.mxu0 %v1469
        %v1696 = vpop.f32.mrf.mxu0
        %v1697 = vadd.f32 0.0, %v1696
        %v1698 = vpop.f32.mrf.mxu0
        %1699 = vmatprep.mubr.f32.mxu0 %v1474
        %1700 = vmatmul.mubr.f32.gmra.mxu0 %v1473
        %v1701 = vpop.f32.mrf.mxu0
        %v1702 = vadd.f32 0.0, %v1701
        %v1703 = vpop.f32.mrf.mxu0
        %1704 = vmatprep.mubr.f32.mxu0 %v1478
        %1705 = vmatmul.mubr.f32.gmra.mxu0 %v1477
        %v1706 = vpop.f32.mrf.mxu0
        %v1707 = vadd.f32 0.0, %v1706
        %v1708 = vpop.f32.mrf.mxu0
        %1709 = vmatprep.mubr.f32.mxu0 %v1482
        %1710 = vmatmul.mubr.f32.gmra.mxu0 %v1481
        %v1711 = vpop.f32.mrf.mxu0
        %v1712 = vadd.f32 0.0, %v1711
        %v1713 = vpop.f32.mrf.mxu0
        %1714 = vmatprep.mubr.f32.mxu0 %v1486
        %1715 = vmatmul.mubr.f32.gmra.mxu0 %v1485
        %v1716 = vpop.f32.mrf.mxu0
        %v1717 = vadd.f32 0.0, %v1716
        %v1718 = vpop.f32.mrf.mxu0
        %1719 = vmatprep.mubr.f32.mxu0 %v1490
        %1720 = vmatmul.mubr.f32.gmra.mxu0 %v1489
        %v1721 = vpop.f32.mrf.mxu0
        %v1722 = vadd.f32 0.0, %v1721
        %v1723 = vpop.f32.mrf.mxu0
        %1724 = vmatprep.mubr.f32.mxu0 %v1494
        %1725 = vmatmul.mubr.f32.gmra.mxu0 %v1493
        %v1726 = vpop.f32.mrf.mxu0
        %v1727 = vadd.f32 0.0, %v1726
        %v1728 = vpop.f32.mrf.mxu0
        %1729 = vmatprep.mubr.f32.mxu0 %v1498
        %1730 = vmatmul.mubr.f32.gmra.mxu0 %v1497
        %v1731 = vpop.f32.mrf.mxu0
        %v1732 = vadd.f32 0.0, %v1731
        %v1733 = vpop.f32.mrf.mxu0
        %1734 = vmatprep.mubr.f32.mxu0 %v1502
        %1735 = vmatmul.mubr.f32.gmra.mxu0 %v1501
        %v1736 = vpop.f32.mrf.mxu0
        %v1737 = vadd.f32 0.0, %v1736
        %v1738 = vpop.f32.mrf.mxu0
        %1739 = vmatprep.mubr.f32.mxu0 %v1506
        %1740 = vmatmul.mubr.f32.gmra.mxu0 %v1505
        %v1741 = vpop.f32.mrf.mxu0
        %v1742 = vadd.f32 0.0, %v1741
        %v1743 = vpop.f32.mrf.mxu0
        %1744 = vmatprep.mubr.f32.mxu0 %v1510
        %1745 = vmatmul.mubr.f32.gmra.mxu0 %v1509
        %v1746 = vpop.f32.mrf.mxu0
        %v1747 = vadd.f32 0.0, %v1746
        %v1748 = vpop.f32.mrf.mxu0
        %1749 = vmatprep.mubr.f32.mxu0 %v1514
        %1750 = vmatmul.mubr.f32.gmra.mxu0 %v1513
        %v1751 = vpop.f32.mrf.mxu0
        %v1752 = vadd.f32 0.0, %v1751
        %v1753 = vpop.f32.mrf.mxu0
        %1754 = vmatprep.mubr.f32.mxu0 %v1518
        %1755 = vmatmul.mubr.f32.gmra.mxu0 %v1517
        %v1756 = vpop.f32.mrf.mxu0
        %v1757 = vadd.f32 0.0, %v1756
        %v1758 = vpop.f32.mrf.mxu0
        %1759 = vmatprep.mubr.f32.mxu0 %v1522
        %1760 = vmatmul.mubr.f32.gmra.mxu0 %v1521
        %v1761 = vpop.f32.mrf.mxu0
        %v1762 = vadd.f32 0.0, %v1761
        %v1763 = vpop.f32.mrf.mxu0
        %1764 = vmatprep.mubr.f32.mxu0 %v1526
        %1765 = vmatmul.mubr.f32.gmra.mxu0 %v1525
        %v1766 = vpop.f32.mrf.mxu0
        %v1767 = vadd.f32 0.0, %v1766
        %v1768 = vpop.f32.mrf.mxu0
        %1769 = vmatprep.mubr.f32.mxu0 %v1530
        %1770 = vmatmul.mubr.f32.gmra.mxu0 %v1529
        %v1771 = vpop.f32.mrf.mxu0
        %v1772 = vadd.f32 0.0, %v1771
        %v1773 = vpop.f32.mrf.mxu0
        %1774 = vmatprep.mubr.f32.mxu0 %v1534
        %1775 = vmatmul.mubr.f32.gmra.mxu0 %v1533
        %v1776 = vpop.f32.mrf.mxu0
        %v1777 = vadd.f32 0.0, %v1776
        %v1778 = vpop.f32.mrf.mxu0
        %1779 = vmatprep.mubr.f32.mxu0 %v1538
        %1780 = vmatmul.mubr.f32.gmra.mxu0 %v1537
        %v1781 = vpop.f32.mrf.mxu0
        %v1782 = vadd.f32 0.0, %v1781
        %v1783 = vpop.f32.mrf.mxu0
        %1784 = vmatprep.mubr.f32.mxu0 %v1542
        %1785 = vmatmul.mubr.f32.gmra.mxu0 %v1541
        %v1786 = vpop.f32.mrf.mxu0
        %v1787 = vadd.f32 0.0, %v1786
        %v1788 = vpop.f32.mrf.mxu0
        %1789 = vmatprep.mubr.f32.mxu0 %v1546
        %1790 = vmatmul.mubr.f32.gmra.mxu0 %v1545
        %v1791 = vpop.f32.mrf.mxu0
        %v1792 = vadd.f32 0.0, %v1791
        %v1793 = vpop.f32.mrf.mxu0
        %1794 = vmatprep.mubr.f32.mxu0 %v1550
        %1795 = vmatmul.mubr.f32.gmra.mxu0 %v1549
        %v1796 = vpop.f32.mrf.mxu0
        %v1797 = vadd.f32 0.0, %v1796
        %v1798 = vpop.f32.mrf.mxu0
        %1799 = vmatprep.mubr.f32.mxu0 %v1554
        %1800 = vmatmul.mubr.f32.gmra.mxu0 %v1553
        %v1801 = vpop.f32.mrf.mxu0
        %v1802 = vadd.f32 0.0, %v1801
        %v1803 = vpop.f32.mrf.mxu0
        %1804 = vmatprep.mubr.f32.mxu0 %v1558
        %1805 = vmatmul.mubr.f32.gmra.mxu0 %v1557
        %v1806 = vpop.f32.mrf.mxu0
        %v1807 = vadd.f32 0.0, %v1806
        %v1808 = vpop.f32.mrf.mxu0
        %1809 = vmatprep.mubr.f32.mxu0 %v1562
        %1810 = vmatmul.mubr.f32.gmra.mxu0 %v1561
        %v1811 = vpop.f32.mrf.mxu0
        %v1812 = vadd.f32 0.0, %v1811
        %v1813 = vpop.f32.mrf.mxu0
        %1814 = vmatprep.mubr.f32.mxu0 %v1566
        %1815 = vmatmul.mubr.f32.gmra.mxu0 %v1565
        %v1816 = vpop.f32.mrf.mxu0
        %v1817 = vadd.f32 0.0, %v1816
        %v1818 = vpop.f32.mrf.mxu0
        %1819 = vmatprep.mubr.f32.mxu0 %v1570
        %1820 = vmatmul.mubr.f32.gmra.mxu0 %v1569
        %v1821 = vpop.f32.mrf.mxu0
        %v1822 = vadd.f32 0.0, %v1821
        %v1823 = vpop.f32.mrf.mxu0
        %1824 = vmatprep.mubr.f32.mxu0 %v1574
        %1825 = vmatmul.mubr.f32.gmra.mxu0 %v1573
        %v1826 = vpop.f32.mrf.mxu0
        %v1827 = vadd.f32 0.0, %v1826
        %v1828 = vpop.f32.mrf.mxu0
        %1829 = vmatprep.mubr.f32.mxu0 %v1578
        %1830 = vmatmul.mubr.f32.gmra.mxu0 %v1577
        %v1831 = vpop.f32.mrf.mxu0
        %v1832 = vadd.f32 0.0, %v1831
        %v1833 = vpop.f32.mrf.mxu0
        %1834 = vmatprep.mubr.f32.mxu0 %v1582
        %1835 = vmatmul.mubr.f32.gmra.mxu0 %v1581
        %v1836 = vpop.f32.mrf.mxu0
        %v1837 = vadd.f32 0.0, %v1836
        %v1838 = vpop.f32.mrf.mxu0
        %1839 = vmatprep.mubr.f32.mxu0 %v1586
        %1840 = vmatmul.mubr.f32.gmra.mxu0 %v1585
        %v1841 = vpop.f32.mrf.mxu0
        %v1842 = vadd.f32 0.0, %v1841
        %v1843 = vpop.f32.mrf.mxu0
        %1844 = vmatprep.mubr.f32.mxu0 %v1590
        %1845 = vmatmul.mubr.f32.gmra.mxu0 %v1589
        %v1846 = vpop.f32.mrf.mxu0
        %v1847 = vadd.f32 0.0, %v1846
        %v1848 = vpop.f32.mrf.mxu0
        %1849 = vdwg.mxu0
        %1850 = vmatprep.subr.mxu0 0.0
        %1851 = vmatpush1.msra.mxu0 %v1042
        %1852 = vmatprep.subr.mxu0 0.0
        %1853 = vmatpush1.msra.mxu0 %v1037
        %1854 = vmatprep.subr.mxu0 0.0
        %1855 = vmatpush1.msra.mxu0 %v1032
        %1856 = vmatprep.subr.mxu0 0.0
        %1857 = vmatpush1.msra.mxu0 %v1027
        %1858 = vmatprep.subr.mxu0 0.0
        %1859 = vmatpush1.msra.mxu0 %v1022
        %1860 = vmatprep.subr.mxu0 0.0
        %1861 = vmatpush1.msra.mxu0 %v1017
        %1862 = vmatprep.subr.mxu0 0.0
        %1863 = vmatpush1.msra.mxu0 %v1012
        %1864 = vmatprep.subr.mxu0 0.0
        %1865 = vmatpush1.msra.mxu0 %v1007
        %1866 = vmatprep.subr.mxu0 0.0
        %1867 = vmatpush1.msra.mxu0 %v1002
        %1868 = vmatprep.subr.mxu0 0.0
        %1869 = vmatpush1.msra.mxu0 %v997
        %1870 = vmatprep.subr.mxu0 0.0
        %1871 = vmatpush1.msra.mxu0 %v992
        %1872 = vmatprep.subr.mxu0 0.0
        %1873 = vmatpush1.msra.mxu0 %v987
        %1874 = vmatprep.subr.mxu0 0.0
        %1875 = vmatpush1.msra.mxu0 %v982
        %1876 = vmatprep.subr.mxu0 0.0
        %1877 = vmatpush1.msra.mxu0 %v977
        %1878 = vmatprep.subr.mxu0 0.0
        %1879 = vmatpush1.msra.mxu0 %v972
        %1880 = vmatprep.subr.mxu0 0.0
        %1881 = vmatpush1.msra.mxu0 %v967
        %1882 = vmatprep.subr.mxu0 0.0
        %1883 = vmatpush2.msra.mxu0 %v1122
        %1884 = vmatprep.subr.mxu0 0.0
        %1885 = vmatpush2.msra.mxu0 %v1117
        %1886 = vmatprep.subr.mxu0 0.0
        %1887 = vmatpush2.msra.mxu0 %v1112
        %1888 = vmatprep.subr.mxu0 0.0
        %1889 = vmatpush2.msra.mxu0 %v1107
        %1890 = vmatprep.subr.mxu0 0.0
        %1891 = vmatpush2.msra.mxu0 %v1102
        %1892 = vmatprep.subr.mxu0 0.0
        %1893 = vmatpush2.msra.mxu0 %v1097
        %1894 = vmatprep.subr.mxu0 0.0
        %1895 = vmatpush2.msra.mxu0 %v1092
        %1896 = vmatprep.subr.mxu0 0.0
        %1897 = vmatpush2.msra.mxu0 %v1087
        %1898 = vmatprep.subr.mxu0 0.0
        %1899 = vmatpush2.msra.mxu0 %v1082
        %1900 = vmatprep.subr.mxu0 0.0
        %1901 = vmatpush2.msra.mxu0 %v1077
        %1902 = vmatprep.subr.mxu0 0.0
        %1903 = vmatpush2.msra.mxu0 %v1072
        %1904 = vmatprep.subr.mxu0 0.0
        %1905 = vmatpush2.msra.mxu0 %v1067
        %1906 = vmatprep.subr.mxu0 0.0
        %1907 = vmatpush2.msra.mxu0 %v1062
        %1908 = vmatprep.subr.mxu0 0.0
        %1909 = vmatpush2.msra.mxu0 %v1057
        %1910 = vmatprep.subr.mxu0 0.0
        %1911 = vmatpush2.msra.mxu0 %v1052
        %1912 = vmatprep.subr.mxu0 0.0
        %1913 = vmatpush2.msra.mxu0 %v1047
        %1914 = vmatprep.mubr.f32.mxu0 %v1468
        %1915 = vmatmul.mubr.f32.gmra.mxu0 %v1467
        %v1916 = vpop.f32.mrf.mxu0
        %v1917 = vadd.f32 %v1692, %v1916
        %v1918 = vpop.f32.mrf.mxu0
        %1919 = vmatprep.mubr.f32.mxu0 %v1472
        %1920 = vmatmul.mubr.f32.gmra.mxu0 %v1471
        %v1921 = vpop.f32.mrf.mxu0
        %v1922 = vadd.f32 %v1697, %v1921
        %v1923 = vpop.f32.mrf.mxu0
        %1924 = vmatprep.mubr.f32.mxu0 %v1476
        %1925 = vmatmul.mubr.f32.gmra.mxu0 %v1475
        %v1926 = vpop.f32.mrf.mxu0
        %v1927 = vadd.f32 %v1702, %v1926
        %v1928 = vpop.f32.mrf.mxu0
        %1929 = vmatprep.mubr.f32.mxu0 %v1480
        %1930 = vmatmul.mubr.f32.gmra.mxu0 %v1479
        %v1931 = vpop.f32.mrf.mxu0
        %v1932 = vadd.f32 %v1707, %v1931
        %v1933 = vpop.f32.mrf.mxu0
        %1934 = vmatprep.mubr.f32.mxu0 %v1484
        %1935 = vmatmul.mubr.f32.gmra.mxu0 %v1483
        %v1936 = vpop.f32.mrf.mxu0
        %v1937 = vadd.f32 %v1712, %v1936
        %v1938 = vpop.f32.mrf.mxu0
        %1939 = vmatprep.mubr.f32.mxu0 %v1488
        %1940 = vmatmul.mubr.f32.gmra.mxu0 %v1487
        %v1941 = vpop.f32.mrf.mxu0
        %v1942 = vadd.f32 %v1717, %v1941
        %v1943 = vpop.f32.mrf.mxu0
        %1944 = vmatprep.mubr.f32.mxu0 %v1492
        %1945 = vmatmul.mubr.f32.gmra.mxu0 %v1491
        %v1946 = vpop.f32.mrf.mxu0
        %v1947 = vadd.f32 %v1722, %v1946
        %v1948 = vpop.f32.mrf.mxu0
        %1949 = vmatprep.mubr.f32.mxu0 %v1496
        %1950 = vmatmul.mubr.f32.gmra.mxu0 %v1495
        %v1951 = vpop.f32.mrf.mxu0
        %v1952 = vadd.f32 %v1727, %v1951
        %v1953 = vpop.f32.mrf.mxu0
        %1954 = vmatprep.mubr.f32.mxu0 %v1500
        %1955 = vmatmul.mubr.f32.gmra.mxu0 %v1499
        %v1956 = vpop.f32.mrf.mxu0
        %v1957 = vadd.f32 %v1732, %v1956
        %v1958 = vpop.f32.mrf.mxu0
        %1959 = vmatprep.mubr.f32.mxu0 %v1504
        %1960 = vmatmul.mubr.f32.gmra.mxu0 %v1503
        %v1961 = vpop.f32.mrf.mxu0
        %v1962 = vadd.f32 %v1737, %v1961
        %v1963 = vpop.f32.mrf.mxu0
        %1964 = vmatprep.mubr.f32.mxu0 %v1508
        %1965 = vmatmul.mubr.f32.gmra.mxu0 %v1507
        %v1966 = vpop.f32.mrf.mxu0
        %v1967 = vadd.f32 %v1742, %v1966
        %v1968 = vpop.f32.mrf.mxu0
        %1969 = vmatprep.mubr.f32.mxu0 %v1512
        %1970 = vmatmul.mubr.f32.gmra.mxu0 %v1511
        %v1971 = vpop.f32.mrf.mxu0
        %v1972 = vadd.f32 %v1747, %v1971
        %v1973 = vpop.f32.mrf.mxu0
        %1974 = vmatprep.mubr.f32.mxu0 %v1516
        %1975 = vmatmul.mubr.f32.gmra.mxu0 %v1515
        %v1976 = vpop.f32.mrf.mxu0
        %v1977 = vadd.f32 %v1752, %v1976
        %v1978 = vpop.f32.mrf.mxu0
        %1979 = vmatprep.mubr.f32.mxu0 %v1520
        %1980 = vmatmul.mubr.f32.gmra.mxu0 %v1519
        %v1981 = vpop.f32.mrf.mxu0
        %v1982 = vadd.f32 %v1757, %v1981
        %v1983 = vpop.f32.mrf.mxu0
        %1984 = vmatprep.mubr.f32.mxu0 %v1524
        %1985 = vmatmul.mubr.f32.gmra.mxu0 %v1523
        %v1986 = vpop.f32.mrf.mxu0
        %v1987 = vadd.f32 %v1762, %v1986
        %v1988 = vpop.f32.mrf.mxu0
        %1989 = vmatprep.mubr.f32.mxu0 %v1528
        %1990 = vmatmul.mubr.f32.gmra.mxu0 %v1527
        %v1991 = vpop.f32.mrf.mxu0
        %v1992 = vadd.f32 %v1767, %v1991
        %v1993 = vpop.f32.mrf.mxu0
        %1994 = vmatprep.mubr.f32.mxu0 %v1532
        %1995 = vmatmul.mubr.f32.gmra.mxu0 %v1531
        %v1996 = vpop.f32.mrf.mxu0
        %v1997 = vadd.f32 %v1772, %v1996
        %v1998 = vpop.f32.mrf.mxu0
        %1999 = vmatprep.mubr.f32.mxu0 %v1536
        %2000 = vmatmul.mubr.f32.gmra.mxu0 %v1535
        %v2001 = vpop.f32.mrf.mxu0
        %v2002 = vadd.f32 %v1777, %v2001
        %v2003 = vpop.f32.mrf.mxu0
        %2004 = vmatprep.mubr.f32.mxu0 %v1540
        %2005 = vmatmul.mubr.f32.gmra.mxu0 %v1539
        %v2006 = vpop.f32.mrf.mxu0
        %v2007 = vadd.f32 %v1782, %v2006
        %v2008 = vpop.f32.mrf.mxu0
        %2009 = vmatprep.mubr.f32.mxu0 %v1544
        %2010 = vmatmul.mubr.f32.gmra.mxu0 %v1543
        %v2011 = vpop.f32.mrf.mxu0
        %v2012 = vadd.f32 %v1787, %v2011
        %v2013 = vpop.f32.mrf.mxu0
        %2014 = vmatprep.mubr.f32.mxu0 %v1548
        %2015 = vmatmul.mubr.f32.gmra.mxu0 %v1547
        %v2016 = vpop.f32.mrf.mxu0
        %v2017 = vadd.f32 %v1792, %v2016
        %v2018 = vpop.f32.mrf.mxu0
        %2019 = vmatprep.mubr.f32.mxu0 %v1552
        %2020 = vmatmul.mubr.f32.gmra.mxu0 %v1551
        %v2021 = vpop.f32.mrf.mxu0
        %v2022 = vadd.f32 %v1797, %v2021
        %v2023 = vpop.f32.mrf.mxu0
        %2024 = vmatprep.mubr.f32.mxu0 %v1556
        %2025 = vmatmul.mubr.f32.gmra.mxu0 %v1555
        %v2026 = vpop.f32.mrf.mxu0
        %v2027 = vadd.f32 %v1802, %v2026
        %v2028 = vpop.f32.mrf.mxu0
        %2029 = vmatprep.mubr.f32.mxu0 %v1560
        %2030 = vmatmul.mubr.f32.gmra.mxu0 %v1559
        %v2031 = vpop.f32.mrf.mxu0
        %v2032 = vadd.f32 %v1807, %v2031
        %v2033 = vpop.f32.mrf.mxu0
        %2034 = vmatprep.mubr.f32.mxu0 %v1564
        %2035 = vmatmul.mubr.f32.gmra.mxu0 %v1563
        %v2036 = vpop.f32.mrf.mxu0
        %v2037 = vadd.f32 %v1812, %v2036
        %v2038 = vpop.f32.mrf.mxu0
        %2039 = vmatprep.mubr.f32.mxu0 %v1568
        %2040 = vmatmul.mubr.f32.gmra.mxu0 %v1567
        %v2041 = vpop.f32.mrf.mxu0
        %v2042 = vadd.f32 %v1817, %v2041
        %v2043 = vpop.f32.mrf.mxu0
        %2044 = vmatprep.mubr.f32.mxu0 %v1572
        %2045 = vmatmul.mubr.f32.gmra.mxu0 %v1571
        %v2046 = vpop.f32.mrf.mxu0
        %v2047 = vadd.f32 %v1822, %v2046
        %v2048 = vpop.f32.mrf.mxu0
        %2049 = vmatprep.mubr.f32.mxu0 %v1576
        %2050 = vmatmul.mubr.f32.gmra.mxu0 %v1575
        %v2051 = vpop.f32.mrf.mxu0
        %v2052 = vadd.f32 %v1827, %v2051
        %v2053 = vpop.f32.mrf.mxu0
        %2054 = vmatprep.mubr.f32.mxu0 %v1580
        %2055 = vmatmul.mubr.f32.gmra.mxu0 %v1579
        %v2056 = vpop.f32.mrf.mxu0
        %v2057 = vadd.f32 %v1832, %v2056
        %v2058 = vpop.f32.mrf.mxu0
        %2059 = vmatprep.mubr.f32.mxu0 %v1584
        %2060 = vmatmul.mubr.f32.gmra.mxu0 %v1583
        %v2061 = vpop.f32.mrf.mxu0
        %v2062 = vadd.f32 %v1837, %v2061
        %v2063 = vpop.f32.mrf.mxu0
        %2064 = vmatprep.mubr.f32.mxu0 %v1588
        %2065 = vmatmul.mubr.f32.gmra.mxu0 %v1587
        %v2066 = vpop.f32.mrf.mxu0
        %v2067 = vadd.f32 %v1842, %v2066
        %v2068 = vpop.f32.mrf.mxu0
        %2069 = vmatprep.mubr.f32.mxu0 %v1592
        %2070 = vmatmul.mubr.f32.gmra.mxu0 %v1591
        %v2071 = vpop.f32.mrf.mxu0
        %v2072 = vadd.f32 %v1847, %v2071
        %v2073 = vpop.f32.mrf.mxu0
        %2074 = vdwg.mxu0
        %v2075 = vadd.f32 %v1593, %v1917
        %v2076 = vadd.f32 %v1594, %v1922
        %v2077 = vadd.f32 %v1595, %v1927
        %v2078 = vadd.f32 %v1596, %v1932
        %v2079 = vadd.f32 %v1597, %v1937
        %v2080 = vadd.f32 %v1598, %v1942
        %v2081 = vadd.f32 %v1599, %v1947
        %v2082 = vadd.f32 %v1600, %v1952
        %v2083 = vadd.f32 %v1601, %v1957
        %v2084 = vadd.f32 %v1602, %v1962
        %v2085 = vadd.f32 %v1603, %v1967
        %v2086 = vadd.f32 %v1604, %v1972
        %v2087 = vadd.f32 %v1605, %v1977
        %v2088 = vadd.f32 %v1606, %v1982
        %v2089 = vadd.f32 %v1607, %v1987
        %v2090 = vadd.f32 %v1608, %v1992
        %v2091 = vadd.f32 %v1609, %v1997
        %v2092 = vadd.f32 %v1610, %v2002
        %v2093 = vadd.f32 %v1611, %v2007
        %v2094 = vadd.f32 %v1612, %v2012
        %v2095 = vadd.f32 %v1613, %v2017
        %v2096 = vadd.f32 %v1614, %v2022
        %v2097 = vadd.f32 %v1615, %v2027
        %v2098 = vadd.f32 %v1616, %v2032
        %v2099 = vadd.f32 %v1617, %v2037
        %v2100 = vadd.f32 %v1618, %v2042
        %v2101 = vadd.f32 %v1619, %v2047
        %v2102 = vadd.f32 %v1620, %v2052
        %v2103 = vadd.f32 %v1621, %v2057
        %v2104 = vadd.f32 %v1622, %v2062
        %v2105 = vadd.f32 %v1623, %v2067
        %v2106 = vadd.f32 %v1624, %v2072
        %vm2107 = vcmask 531456
        %2108 = vst.msk [vmem:[#allocation2] sm:$0xff] %vm2107, %v2075
        %2109 = vst.msk [vmem:[#allocation2 + $0x8] sm:$0xff] %vm2107, %v2076
        %2110 = vst.msk [vmem:[#allocation2 + $0x10] sm:$0xff] %vm2107, %v2077
        %2111 = vst.msk [vmem:[#allocation2 + $0x18] sm:$0xff] %vm2107, %v2078
        %2112 = vst.msk [vmem:[#allocation2 + $0x20] sm:$0xff] %vm2107, %v2079
        %2113 = vst.msk [vmem:[#allocation2 + $0x28] sm:$0xff] %vm2107, %v2080
        %2114 = vst.msk [vmem:[#allocation2 + $0x30] sm:$0xff] %vm2107, %v2081
        %2115 = vst.msk [vmem:[#allocation2 + $0x38] sm:$0xff] %vm2107, %v2082
        %2116 = vst.msk [vmem:[#allocation2 + $0x40] sm:$0xff] %vm2107, %v2083
        %2117 = vst.msk [vmem:[#allocation2 + $0x48] sm:$0xff] %vm2107, %v2084
        %2118 = vst.msk [vmem:[#allocation2 + $0x50] sm:$0xff] %vm2107, %v2085
        %2119 = vst.msk [vmem:[#allocation2 + $0x58] sm:$0xff] %vm2107, %v2086
        %2120 = vst.msk [vmem:[#allocation2 + $0x60] sm:$0xff] %vm2107, %v2087
        %2121 = vst.msk [vmem:[#allocation2 + $0x68] sm:$0xff] %vm2107, %v2088
        %2122 = vst.msk [vmem:[#allocation2 + $0x70] sm:$0xff] %vm2107, %v2089
        %2123 = vst.msk [vmem:[#allocation2 + $0x78] sm:$0xff] %vm2107, %v2090
        %2124 = vst.msk [vmem:[#allocation2 + $0x80] sm:$0xff] %vm2107, %v2091
        %2125 = vst.msk [vmem:[#allocation2 + $0x88] sm:$0xff] %vm2107, %v2092
        %2126 = vst.msk [vmem:[#allocation2 + $0x90] sm:$0xff] %vm2107, %v2093
        %2127 = vst.msk [vmem:[#allocation2 + $0x98] sm:$0xff] %vm2107, %v2094
        %2128 = vst.msk [vmem:[#allocation2 + $0xa0] sm:$0xff] %vm2107, %v2095
        %2129 = vst.msk [vmem:[#allocation2 + $0xa8] sm:$0xff] %vm2107, %v2096
        %2130 = vst.msk [vmem:[#allocation2 + $0xb0] sm:$0xff] %vm2107, %v2097
        %2131 = vst.msk [vmem:[#allocation2 + $0xb8] sm:$0xff] %vm2107, %v2098
        %2132 = vst.msk [vmem:[#allocation2 + $0xc0] sm:$0xff] %vm2107, %v2099
        %2133 = vst.msk [vmem:[#allocation2 + $0xc8] sm:$0xff] %vm2107, %v2100
        %2134 = vst.msk [vmem:[#allocation2 + $0xd0] sm:$0xff] %vm2107, %v2101
        %2135 = vst.msk [vmem:[#allocation2 + $0xd8] sm:$0xff] %vm2107, %v2102
        %2136 = vst.msk [vmem:[#allocation2 + $0xe0] sm:$0xff] %vm2107, %v2103
        %2137 = vst.msk [vmem:[#allocation2 + $0xe8] sm:$0xff] %vm2107, %v2104
        %2138 = vst.msk [vmem:[#allocation2 + $0xf0] sm:$0xff] %vm2107, %v2105
        %2139 = vst.msk [vmem:[#allocation2 + $0xf8] sm:$0xff] %vm2107, %v2106
        %p2140 = scmp.eq.s32.totalorder %s30, 2
        // Predicated region
        $region69: #{tpu_custom_call.1} parent=63 // pred_check
          %p2141 = pneg %p2140
        $region70: #{tpu_custom_call.1} parent=63 // pred_check_branch
          %2143 = sbr.rel (%p2141) target = $region72
        $region71: #{tpu_custom_call.1} parent=63 // pred_region
          %v2144 = vld [vmem:[#allocation2] sm:$0xff]
          %v2145 = vld [vmem:[#allocation2 + $0x8] sm:$0xff]
          %v2146 = vld [vmem:[#allocation2 + $0x10] sm:$0xff]
          %v2147 = vld [vmem:[#allocation2 + $0x18] sm:$0xff]
          %v2148 = vld [vmem:[#allocation2 + $0x20] sm:$0xff]
          %v2149 = vld [vmem:[#allocation2 + $0x28] sm:$0xff]
          %v2150 = vld [vmem:[#allocation2 + $0x30] sm:$0xff]
          %v2151 = vld [vmem:[#allocation2 + $0x38] sm:$0xff]
          %v2152 = vld [vmem:[#allocation2 + $0x40] sm:$0xff]
          %v2153 = vld [vmem:[#allocation2 + $0x48] sm:$0xff]
          %v2154 = vld [vmem:[#allocation2 + $0x50] sm:$0xff]
          %v2155 = vld [vmem:[#allocation2 + $0x58] sm:$0xff]
          %v2156 = vld [vmem:[#allocation2 + $0x60] sm:$0xff]
          %v2157 = vld [vmem:[#allocation2 + $0x68] sm:$0xff]
          %v2158 = vld [vmem:[#allocation2 + $0x70] sm:$0xff]
          %v2159 = vld [vmem:[#allocation2 + $0x78] sm:$0xff]
          %v2160 = vld [vmem:[#allocation2 + $0x80] sm:$0xff]
          %v2161 = vld [vmem:[#allocation2 + $0x88] sm:$0xff]
          %v2162 = vld [vmem:[#allocation2 + $0x90] sm:$0xff]
          %v2163 = vld [vmem:[#allocation2 + $0x98] sm:$0xff]
          %v2164 = vld [vmem:[#allocation2 + $0xa0] sm:$0xff]
          %v2165 = vld [vmem:[#allocation2 + $0xa8] sm:$0xff]
          %v2166 = vld [vmem:[#allocation2 + $0xb0] sm:$0xff]
          %v2167 = vld [vmem:[#allocation2 + $0xb8] sm:$0xff]
          %v2168 = vld [vmem:[#allocation2 + $0xc0] sm:$0xff]
          %v2169 = vld [vmem:[#allocation2 + $0xc8] sm:$0xff]
          %v2170 = vld [vmem:[#allocation2 + $0xd0] sm:$0xff]
          %v2171 = vld [vmem:[#allocation2 + $0xd8] sm:$0xff]
          %v2172 = vld [vmem:[#allocation2 + $0xe0] sm:$0xff]
          %v2173 = vld [vmem:[#allocation2 + $0xe8] sm:$0xff]
          %v2174 = vld [vmem:[#allocation2 + $0xf0] sm:$0xff]
          %v2175 = vld [vmem:[#allocation2 + $0xf8] sm:$0xff]
          %v2176 = vmax.f32 %v2144, 1.0
          %v2177 = vmax.f32 %v2145, 1.0
          %v2178 = vmax.f32 %v2146, 1.0
          %v2179 = vmax.f32 %v2147, 1.0
          %v2180 = vmax.f32 %v2148, 1.0
          %v2181 = vmax.f32 %v2149, 1.0
          %v2182 = vmax.f32 %v2150, 1.0
          %v2183 = vmax.f32 %v2151, 1.0
          %v2184 = vmax.f32 %v2152, 1.0
          %v2185 = vmax.f32 %v2153, 1.0
          %v2186 = vmax.f32 %v2154, 1.0
          %v2187 = vmax.f32 %v2155, 1.0
          %v2188 = vmax.f32 %v2156, 1.0
          %v2189 = vmax.f32 %v2157, 1.0
          %v2190 = vmax.f32 %v2158, 1.0
          %v2191 = vmax.f32 %v2159, 1.0
          %v2192 = vmax.f32 %v2160, 1.0
          %v2193 = vmax.f32 %v2161, 1.0
          %v2194 = vmax.f32 %v2162, 1.0
          %v2195 = vmax.f32 %v2163, 1.0
          %v2196 = vmax.f32 %v2164, 1.0
          %v2197 = vmax.f32 %v2165, 1.0
          %v2198 = vmax.f32 %v2166, 1.0
          %v2199 = vmax.f32 %v2167, 1.0
          %v2200 = vmax.f32 %v2168, 1.0
          %v2201 = vmax.f32 %v2169, 1.0
          %v2202 = vmax.f32 %v2170, 1.0
          %v2203 = vmax.f32 %v2171, 1.0
          %v2204 = vmax.f32 %v2172, 1.0
          %v2205 = vmax.f32 %v2173, 1.0
          %v2206 = vmax.f32 %v2174, 1.0
          %v2207 = vmax.f32 %v2175, 1.0
          %v2208 = vrcp.pop %v2176
          %v2209 = vmul.f32 1.0, %v2208
          %v2210 = vrcp.pop %v2177
          %v2211 = vmul.f32 1.0, %v2210
          %v2212 = vrcp.pop %v2178
          %v2213 = vmul.f32 1.0, %v2212
          %v2214 = vrcp.pop %v2179
          %v2215 = vmul.f32 1.0, %v2214
          %v2216 = vrcp.pop %v2180
          %v2217 = vmul.f32 1.0, %v2216
          %v2218 = vrcp.pop %v2181
          %v2219 = vmul.f32 1.0, %v2218
          %v2220 = vrcp.pop %v2182
          %v2221 = vmul.f32 1.0, %v2220
          %v2222 = vrcp.pop %v2183
          %v2223 = vmul.f32 1.0, %v2222
          %v2224 = vrcp.pop %v2184
          %v2225 = vmul.f32 1.0, %v2224
          %v2226 = vrcp.pop %v2185
          %v2227 = vmul.f32 1.0, %v2226
          %v2228 = vrcp.pop %v2186
          %v2229 = vmul.f32 1.0, %v2228
          %v2230 = vrcp.pop %v2187
          %v2231 = vmul.f32 1.0, %v2230
          %v2232 = vrcp.pop %v2188
          %v2233 = vmul.f32 1.0, %v2232
          %v2234 = vrcp.pop %v2189
          %v2235 = vmul.f32 1.0, %v2234
          %v2236 = vrcp.pop %v2190
          %v2237 = vmul.f32 1.0, %v2236
          %v2238 = vrcp.pop %v2191
          %v2239 = vmul.f32 1.0, %v2238
          %v2240 = vrcp.pop %v2192
          %v2241 = vmul.f32 1.0, %v2240
          %v2242 = vrcp.pop %v2193
          %v2243 = vmul.f32 1.0, %v2242
          %v2244 = vrcp.pop %v2194
          %v2245 = vmul.f32 1.0, %v2244
          %v2246 = vrcp.pop %v2195
          %v2247 = vmul.f32 1.0, %v2246
          %v2248 = vrcp.pop %v2196
          %v2249 = vmul.f32 1.0, %v2248
          %v2250 = vrcp.pop %v2197
          %v2251 = vmul.f32 1.0, %v2250
          %v2252 = vrcp.pop %v2198
          %v2253 = vmul.f32 1.0, %v2252
          %v2254 = vrcp.pop %v2199
          %v2255 = vmul.f32 1.0, %v2254
          %v2256 = vrcp.pop %v2200
          %v2257 = vmul.f32 1.0, %v2256
          %v2258 = vrcp.pop %v2201
          %v2259 = vmul.f32 1.0, %v2258
          %v2260 = vrcp.pop %v2202
          %v2261 = vmul.f32 1.0, %v2260
          %v2262 = vrcp.pop %v2203
          %v2263 = vmul.f32 1.0, %v2262
          %v2264 = vrcp.pop %v2204
          %v2265 = vmul.f32 1.0, %v2264
          %v2266 = vrcp.pop %v2205
          %v2267 = vmul.f32 1.0, %v2266
          %v2268 = vrcp.pop %v2206
          %v2269 = vmul.f32 1.0, %v2268
          %v2270 = vrcp.pop %v2207
          %v2271 = vmul.f32 1.0, %v2270
          %2273 = vset.pattern.permute.xlu0 64
          %2274 = vperm.xlu0 %2273, %v2209
          %v2275 = vpop.permute.xlu0 %2274
          %2278 = vset.pattern.permute.xlu0 64
          %2279 = vperm.xlu0 %2278, %v2211
          %v2280 = vpop.permute.xlu0 %2279
          %2283 = vset.pattern.permute.xlu0 64
          %2284 = vperm.xlu0 %2283, %v2213
          %v2285 = vpop.permute.xlu0 %2284
          %2288 = vset.pattern.permute.xlu0 64
          %2289 = vperm.xlu0 %2288, %v2215
          %v2290 = vpop.permute.xlu0 %2289
          %2293 = vset.pattern.permute.xlu0 64
          %2294 = vperm.xlu0 %2293, %v2217
          %v2295 = vpop.permute.xlu0 %2294
          %2298 = vset.pattern.permute.xlu0 64
          %2299 = vperm.xlu0 %2298, %v2219
          %v2300 = vpop.permute.xlu0 %2299
          %2303 = vset.pattern.permute.xlu0 64
          %2304 = vperm.xlu0 %2303, %v2221
          %v2305 = vpop.permute.xlu0 %2304
          %2308 = vset.pattern.permute.xlu0 64
          %2309 = vperm.xlu0 %2308, %v2223
          %v2310 = vpop.permute.xlu0 %2309
          %2313 = vset.pattern.permute.xlu0 64
          %2314 = vperm.xlu0 %2313, %v2225
          %v2315 = vpop.permute.xlu0 %2314
          %2318 = vset.pattern.permute.xlu0 64
          %2319 = vperm.xlu0 %2318, %v2227
          %v2320 = vpop.permute.xlu0 %2319
          %2323 = vset.pattern.permute.xlu0 64
          %2324 = vperm.xlu0 %2323, %v2229
          %v2325 = vpop.permute.xlu0 %2324
          %2328 = vset.pattern.permute.xlu0 64
          %2329 = vperm.xlu0 %2328, %v2231
          %v2330 = vpop.permute.xlu0 %2329
          %2333 = vset.pattern.permute.xlu0 64
          %2334 = vperm.xlu0 %2333, %v2233
          %v2335 = vpop.permute.xlu0 %2334
          %2338 = vset.pattern.permute.xlu0 64
          %2339 = vperm.xlu0 %2338, %v2235
          %v2340 = vpop.permute.xlu0 %2339
          %2343 = vset.pattern.permute.xlu0 64
          %2344 = vperm.xlu0 %2343, %v2237
          %v2345 = vpop.permute.xlu0 %2344
          %2348 = vset.pattern.permute.xlu0 64
          %2349 = vperm.xlu0 %2348, %v2239
          %v2350 = vpop.permute.xlu0 %2349
          %2353 = vset.pattern.permute.xlu0 64
          %2354 = vperm.xlu0 %2353, %v2241
          %v2355 = vpop.permute.xlu0 %2354
          %2358 = vset.pattern.permute.xlu0 64
          %2359 = vperm.xlu0 %2358, %v2243
          %v2360 = vpop.permute.xlu0 %2359
          %2363 = vset.pattern.permute.xlu0 64
          %2364 = vperm.xlu0 %2363, %v2245
          %v2365 = vpop.permute.xlu0 %2364
          %2368 = vset.pattern.permute.xlu0 64
          %2369 = vperm.xlu0 %2368, %v2247
          %v2370 = vpop.permute.xlu0 %2369
          %2373 = vset.pattern.permute.xlu0 64
          %2374 = vperm.xlu0 %2373, %v2249
          %v2375 = vpop.permute.xlu0 %2374
          %2378 = vset.pattern.permute.xlu0 64
          %2379 = vperm.xlu0 %2378, %v2251
          %v2380 = vpop.permute.xlu0 %2379
          %2383 = vset.pattern.permute.xlu0 64
          %2384 = vperm.xlu0 %2383, %v2253
          %v2385 = vpop.permute.xlu0 %2384
          %2388 = vset.pattern.permute.xlu0 64
          %2389 = vperm.xlu0 %2388, %v2255
          %v2390 = vpop.permute.xlu0 %2389
          %2393 = vset.pattern.permute.xlu0 64
          %2394 = vperm.xlu0 %2393, %v2257
          %v2395 = vpop.permute.xlu0 %2394
          %2398 = vset.pattern.permute.xlu0 64
          %2399 = vperm.xlu0 %2398, %v2259
          %v2400 = vpop.permute.xlu0 %2399
          %2403 = vset.pattern.permute.xlu0 64
          %2404 = vperm.xlu0 %2403, %v2261
          %v2405 = vpop.permute.xlu0 %2404
          %2408 = vset.pattern.permute.xlu0 64
          %2409 = vperm.xlu0 %2408, %v2263
          %v2410 = vpop.permute.xlu0 %2409
          %2413 = vset.pattern.permute.xlu0 64
          %2414 = vperm.xlu0 %2413, %v2265
          %v2415 = vpop.permute.xlu0 %2414
          %2418 = vset.pattern.permute.xlu0 64
          %2419 = vperm.xlu0 %2418, %v2267
          %v2420 = vpop.permute.xlu0 %2419
          %2423 = vset.pattern.permute.xlu0 64
          %2424 = vperm.xlu0 %2423, %v2269
          %v2425 = vpop.permute.xlu0 %2424
          %2428 = vset.pattern.permute.xlu0 64
          %2429 = vperm.xlu0 %2428, %v2271
          %v2430 = vpop.permute.xlu0 %2429
          %v2432 = vmul.f32 %v2144, %v2275
          %v2433 = vmul.f32 %v2145, %v2280
          %v2434 = vmul.f32 %v2146, %v2285
          %v2435 = vmul.f32 %v2147, %v2290
          %v2436 = vmul.f32 %v2148, %v2295
          %v2437 = vmul.f32 %v2149, %v2300
          %v2438 = vmul.f32 %v2150, %v2305
          %v2439 = vmul.f32 %v2151, %v2310
          %v2440 = vmul.f32 %v2152, %v2315
          %v2441 = vmul.f32 %v2153, %v2320
          %v2442 = vmul.f32 %v2154, %v2325
          %v2443 = vmul.f32 %v2155, %v2330
          %v2444 = vmul.f32 %v2156, %v2335
          %v2445 = vmul.f32 %v2157, %v2340
          %v2446 = vmul.f32 %v2158, %v2345
          %v2447 = vmul.f32 %v2159, %v2350
          %v2448 = vmul.f32 %v2160, %v2355
          %v2449 = vmul.f32 %v2161, %v2360
          %v2450 = vmul.f32 %v2162, %v2365
          %v2451 = vmul.f32 %v2163, %v2370
          %v2452 = vmul.f32 %v2164, %v2375
          %v2453 = vmul.f32 %v2165, %v2380
          %v2454 = vmul.f32 %v2166, %v2385
          %v2455 = vmul.f32 %v2167, %v2390
          %v2456 = vmul.f32 %v2168, %v2395
          %v2457 = vmul.f32 %v2169, %v2400
          %v2458 = vmul.f32 %v2170, %v2405
          %v2459 = vmul.f32 %v2171, %v2410
          %v2460 = vmul.f32 %v2172, %v2415
          %v2461 = vmul.f32 %v2173, %v2420
          %v2462 = vmul.f32 %v2174, %v2425
          %v2463 = vmul.f32 %v2175, %v2430
          %v2464 = vld [vmem:[%s6] sm:$0x1]
          %v2466 = vlaneseq
          %v2467 = vshrl.u32 %v2466, 7
          %v2468 = vsub.s32 0, %v2467
          %v2469 = vrot.slane %v2464, %v2468
          %v2471 = vadd.f32 %v2432, %v2469
          %v2472 = vadd.f32 %v2433, %v2469
          %v2473 = vadd.f32 %v2434, %v2469
          %v2474 = vadd.f32 %v2435, %v2469
          %v2475 = vadd.f32 %v2436, %v2469
          %v2476 = vadd.f32 %v2437, %v2469
          %v2477 = vadd.f32 %v2438, %v2469
          %v2478 = vadd.f32 %v2439, %v2469
          %v2479 = vadd.f32 %v2440, %v2469
          %v2480 = vadd.f32 %v2441, %v2469
          %v2481 = vadd.f32 %v2442, %v2469
          %v2482 = vadd.f32 %v2443, %v2469
          %v2483 = vadd.f32 %v2444, %v2469
          %v2484 = vadd.f32 %v2445, %v2469
          %v2485 = vadd.f32 %v2446, %v2469
          %v2486 = vadd.f32 %v2447, %v2469
          %v2487 = vadd.f32 %v2448, %v2469
          %v2488 = vadd.f32 %v2449, %v2469
          %v2489 = vadd.f32 %v2450, %v2469
          %v2490 = vadd.f32 %v2451, %v2469
          %v2491 = vadd.f32 %v2452, %v2469
          %v2492 = vadd.f32 %v2453, %v2469
          %v2493 = vadd.f32 %v2454, %v2469
          %v2494 = vadd.f32 %v2455, %v2469
          %v2495 = vadd.f32 %v2456, %v2469
          %v2496 = vadd.f32 %v2457, %v2469
          %v2497 = vadd.f32 %v2458, %v2469
          %v2498 = vadd.f32 %v2459, %v2469
          %v2499 = vadd.f32 %v2460, %v2469
          %v2500 = vadd.f32 %v2461, %v2469
          %v2501 = vadd.f32 %v2462, %v2469
          %v2502 = vadd.f32 %v2463, %v2469
          %v2503 = vld [vmem:[%s427] sm:$0xff]
          %v2504 = vld [vmem:[%s427 + $0x8] sm:$0xff]
          %v2505 = vld [vmem:[%s427 + $0x10] sm:$0xff]
          %v2506 = vld [vmem:[%s427 + $0x18] sm:$0xff]
          %v2507 = vld [vmem:[%s427 + $0x20] sm:$0xff]
          %v2508 = vld [vmem:[%s427 + $0x28] sm:$0xff]
          %v2509 = vld [vmem:[%s427 + $0x30] sm:$0xff]
          %v2510 = vld [vmem:[%s427 + $0x38] sm:$0xff]
          %v2511 = vld [vmem:[%s427 + $0x40] sm:$0xff]
          %v2512 = vld [vmem:[%s427 + $0x48] sm:$0xff]
          %v2513 = vld [vmem:[%s427 + $0x50] sm:$0xff]
          %v2514 = vld [vmem:[%s427 + $0x58] sm:$0xff]
          %v2515 = vld [vmem:[%s427 + $0x60] sm:$0xff]
          %v2516 = vld [vmem:[%s427 + $0x68] sm:$0xff]
          %v2517 = vld [vmem:[%s427 + $0x70] sm:$0xff]
          %v2518 = vld [vmem:[%s427 + $0x78] sm:$0xff]
          %v2519 = vld [vmem:[%s427 + $0x80] sm:$0xff]
          %v2520 = vld [vmem:[%s427 + $0x88] sm:$0xff]
          %v2521 = vld [vmem:[%s427 + $0x90] sm:$0xff]
          %v2522 = vld [vmem:[%s427 + $0x98] sm:$0xff]
          %v2523 = vld [vmem:[%s427 + $0xa0] sm:$0xff]
          %v2524 = vld [vmem:[%s427 + $0xa8] sm:$0xff]
          %v2525 = vld [vmem:[%s427 + $0xb0] sm:$0xff]
          %v2526 = vld [vmem:[%s427 + $0xb8] sm:$0xff]
          %v2527 = vld [vmem:[%s427 + $0xc0] sm:$0xff]
          %v2528 = vld [vmem:[%s427 + $0xc8] sm:$0xff]
          %v2529 = vld [vmem:[%s427 + $0xd0] sm:$0xff]
          %v2530 = vld [vmem:[%s427 + $0xd8] sm:$0xff]
          %v2531 = vld [vmem:[%s427 + $0xe0] sm:$0xff]
          %v2532 = vld [vmem:[%s427 + $0xe8] sm:$0xff]
          %v2533 = vld [vmem:[%s427 + $0xf0] sm:$0xff]
          %v2534 = vld [vmem:[%s427 + $0xf8] sm:$0xff]
          %v2535 = vld [vmem:[%s3] sm:$0xff]
          %v2536 = vld [vmem:[%s4] sm:$0x1]
          %v2538 = vlaneseq
          %v2539 = vshrl.u32 %v2538, 7
          %v2540 = vsub.s32 0, %v2539
          %v2541 = vrot.slane %v2536, %v2540
          %vm2543 = vcmask 64512
          %v2545 = vsel %vm2543, %v2503, 0
          %v2548 = vsel %vm2543, %v2504, 0
          %v2551 = vsel %vm2543, %v2505, 0
          %v2554 = vsel %vm2543, %v2506, 0
          %v2557 = vsel %vm2543, %v2507, 0
          %v2560 = vsel %vm2543, %v2508, 0
          %v2563 = vsel %vm2543, %v2509, 0
          %v2566 = vsel %vm2543, %v2510, 0
          %v2569 = vsel %vm2543, %v2511, 0
          %v2572 = vsel %vm2543, %v2512, 0
          %v2575 = vsel %vm2543, %v2513, 0
          %v2578 = vsel %vm2543, %v2514, 0
          %v2581 = vsel %vm2543, %v2515, 0
          %v2584 = vsel %vm2543, %v2516, 0
          %v2587 = vsel %vm2543, %v2517, 0
          %v2590 = vsel %vm2543, %v2518, 0
          %v2593 = vsel %vm2543, %v2519, 0
          %v2596 = vsel %vm2543, %v2520, 0
          %v2599 = vsel %vm2543, %v2521, 0
          %v2602 = vsel %vm2543, %v2522, 0
          %v2605 = vsel %vm2543, %v2523, 0
          %v2608 = vsel %vm2543, %v2524, 0
          %v2611 = vsel %vm2543, %v2525, 0
          %v2614 = vsel %vm2543, %v2526, 0
          %v2617 = vsel %vm2543, %v2527, 0
          %v2620 = vsel %vm2543, %v2528, 0
          %v2623 = vsel %vm2543, %v2529, 0
          %v2626 = vsel %vm2543, %v2530, 0
          %v2629 = vsel %vm2543, %v2531, 0
          %v2632 = vsel %vm2543, %v2532, 0
          %v2635 = vsel %vm2543, %v2533, 0
          %v2638 = vsel %vm2543, %v2534, 0
          %2640 = vmatprep.subr.mxu0 0.0
          %2641 = vmatpush1.msra.mxu0 0.0
          %2642 = vmatprep.subr.mxu0 0.0
          %2643 = vmatpush1.msra.mxu0 0.0
          %2644 = vmatprep.subr.mxu0 0.0
          %2645 = vmatpush1.msra.mxu0 0.0
          %2646 = vmatprep.subr.mxu0 0.0
          %2647 = vmatpush1.msra.mxu0 0.0
          %2648 = vmatprep.subr.mxu0 0.0
          %2649 = vmatpush1.msra.mxu0 0.0
          %2650 = vmatprep.subr.mxu0 0.0
          %2651 = vmatpush1.msra.mxu0 0.0
          %2652 = vmatprep.subr.mxu0 0.0
          %2653 = vmatpush1.msra.mxu0 0.0
          %2654 = vmatprep.subr.mxu0 0.0
          %2655 = vmatpush1.msra.mxu0 0.0
          %2656 = vmatprep.subr.mxu0 0.0
          %2657 = vmatpush1.msra.mxu0 0.0
          %2658 = vmatprep.subr.mxu0 0.0
          %2659 = vmatpush1.msra.mxu0 0.0
          %2660 = vmatprep.subr.mxu0 0.0
          %2661 = vmatpush1.msra.mxu0 0.0
          %2662 = vmatprep.subr.mxu0 0.0
          %2663 = vmatpush1.msra.mxu0 0.0
          %2664 = vmatprep.subr.mxu0 0.0
          %2665 = vmatpush1.msra.mxu0 0.0
          %2666 = vmatprep.subr.mxu0 0.0
          %2667 = vmatpush1.msra.mxu0 0.0
          %2668 = vmatprep.subr.mxu0 0.0
          %2669 = vmatpush1.msra.mxu0 0.0
          %2670 = vmatprep.subr.mxu0 0.0
          %2671 = vmatpush1.msra.mxu0 %v2535
          %2672 = vmatprep.subr.mxu0 0.0
          %2673 = vmatpush2.msra.mxu0 0.0
          %2674 = vmatprep.subr.mxu0 0.0
          %2675 = vmatpush2.msra.mxu0 0.0
          %2676 = vmatprep.subr.mxu0 0.0
          %2677 = vmatpush2.msra.mxu0 0.0
          %2678 = vmatprep.subr.mxu0 0.0
          %2679 = vmatpush2.msra.mxu0 0.0
          %2680 = vmatprep.subr.mxu0 0.0
          %2681 = vmatpush2.msra.mxu0 0.0
          %2682 = vmatprep.subr.mxu0 0.0
          %2683 = vmatpush2.msra.mxu0 0.0
          %2684 = vmatprep.subr.mxu0 0.0
          %2685 = vmatpush2.msra.mxu0 0.0
          %2686 = vmatprep.subr.mxu0 0.0
          %2687 = vmatpush2.msra.mxu0 0.0
          %2688 = vmatprep.subr.mxu0 0.0
          %2689 = vmatpush2.msra.mxu0 0.0
          %2690 = vmatprep.subr.mxu0 0.0
          %2691 = vmatpush2.msra.mxu0 0.0
          %2692 = vmatprep.subr.mxu0 0.0
          %2693 = vmatpush2.msra.mxu0 0.0
          %2694 = vmatprep.subr.mxu0 0.0
          %2695 = vmatpush2.msra.mxu0 0.0
          %2696 = vmatprep.subr.mxu0 0.0
          %2697 = vmatpush2.msra.mxu0 0.0
          %2698 = vmatprep.subr.mxu0 0.0
          %2699 = vmatpush2.msra.mxu0 0.0
          %2700 = vmatprep.subr.mxu0 0.0
          %2701 = vmatpush2.msra.mxu0 0.0
          %2702 = vmatprep.subr.mxu0 0.0
          %2703 = vmatpush2.msra.mxu0 0.0
          %2704 = vmatprep.mubr.f32.mxu0 0.0
          %2705 = vmatmul.mubr.f32.gmra.mxu0 %v2545
          %v2706 = vpop.f32.mrf.mxu0
          %v2707 = vadd.f32 %v2541, %v2706
          %v2708 = vpop.f32.mrf.mxu0
          %2709 = vmatprep.mubr.f32.mxu0 0.0
          %2710 = vmatmul.mubr.f32.gmra.mxu0 %v2548
          %v2711 = vpop.f32.mrf.mxu0
          %v2712 = vadd.f32 %v2541, %v2711
          %v2713 = vpop.f32.mrf.mxu0
          %2714 = vmatprep.mubr.f32.mxu0 0.0
          %2715 = vmatmul.mubr.f32.gmra.mxu0 %v2551
          %v2716 = vpop.f32.mrf.mxu0
          %v2717 = vadd.f32 %v2541, %v2716
          %v2718 = vpop.f32.mrf.mxu0
          %2719 = vmatprep.mubr.f32.mxu0 0.0
          %2720 = vmatmul.mubr.f32.gmra.mxu0 %v2554
          %v2721 = vpop.f32.mrf.mxu0
          %v2722 = vadd.f32 %v2541, %v2721
          %v2723 = vpop.f32.mrf.mxu0
          %2724 = vmatprep.mubr.f32.mxu0 0.0
          %2725 = vmatmul.mubr.f32.gmra.mxu0 %v2557
          %v2726 = vpop.f32.mrf.mxu0
          %v2727 = vadd.f32 %v2541, %v2726
          %v2728 = vpop.f32.mrf.mxu0
          %2729 = vmatprep.mubr.f32.mxu0 0.0
          %2730 = vmatmul.mubr.f32.gmra.mxu0 %v2560
          %v2731 = vpop.f32.mrf.mxu0
          %v2732 = vadd.f32 %v2541, %v2731
          %v2733 = vpop.f32.mrf.mxu0
          %2734 = vmatprep.mubr.f32.mxu0 0.0
          %2735 = vmatmul.mubr.f32.gmra.mxu0 %v2563
          %v2736 = vpop.f32.mrf.mxu0
          %v2737 = vadd.f32 %v2541, %v2736
          %v2738 = vpop.f32.mrf.mxu0
          %2739 = vmatprep.mubr.f32.mxu0 0.0
          %2740 = vmatmul.mubr.f32.gmra.mxu0 %v2566
          %v2741 = vpop.f32.mrf.mxu0
          %v2742 = vadd.f32 %v2541, %v2741
          %v2743 = vpop.f32.mrf.mxu0
          %2744 = vmatprep.mubr.f32.mxu0 0.0
          %2745 = vmatmul.mubr.f32.gmra.mxu0 %v2569
          %v2746 = vpop.f32.mrf.mxu0
          %v2747 = vadd.f32 %v2541, %v2746
          %v2748 = vpop.f32.mrf.mxu0
          %2749 = vmatprep.mubr.f32.mxu0 0.0
          %2750 = vmatmul.mubr.f32.gmra.mxu0 %v2572
          %v2751 = vpop.f32.mrf.mxu0
          %v2752 = vadd.f32 %v2541, %v2751
          %v2753 = vpop.f32.mrf.mxu0
          %2754 = vmatprep.mubr.f32.mxu0 0.0
          %2755 = vmatmul.mubr.f32.gmra.mxu0 %v2575
          %v2756 = vpop.f32.mrf.mxu0
          %v2757 = vadd.f32 %v2541, %v2756
          %v2758 = vpop.f32.mrf.mxu0
          %2759 = vmatprep.mubr.f32.mxu0 0.0
          %2760 = vmatmul.mubr.f32.gmra.mxu0 %v2578
          %v2761 = vpop.f32.mrf.mxu0
          %v2762 = vadd.f32 %v2541, %v2761
          %v2763 = vpop.f32.mrf.mxu0
          %2764 = vmatprep.mubr.f32.mxu0 0.0
          %2765 = vmatmul.mubr.f32.gmra.mxu0 %v2581
          %v2766 = vpop.f32.mrf.mxu0
          %v2767 = vadd.f32 %v2541, %v2766
          %v2768 = vpop.f32.mrf.mxu0
          %2769 = vmatprep.mubr.f32.mxu0 0.0
          %2770 = vmatmul.mubr.f32.gmra.mxu0 %v2584
          %v2771 = vpop.f32.mrf.mxu0
          %v2772 = vadd.f32 %v2541, %v2771
          %v2773 = vpop.f32.mrf.mxu0
          %2774 = vmatprep.mubr.f32.mxu0 0.0
          %2775 = vmatmul.mubr.f32.gmra.mxu0 %v2587
          %v2776 = vpop.f32.mrf.mxu0
          %v2777 = vadd.f32 %v2541, %v2776
          %v2778 = vpop.f32.mrf.mxu0
          %2779 = vmatprep.mubr.f32.mxu0 0.0
          %2780 = vmatmul.mubr.f32.gmra.mxu0 %v2590
          %v2781 = vpop.f32.mrf.mxu0
          %v2782 = vadd.f32 %v2541, %v2781
          %v2783 = vpop.f32.mrf.mxu0
          %2784 = vmatprep.mubr.f32.mxu0 0.0
          %2785 = vmatmul.mubr.f32.gmra.mxu0 %v2593
          %v2786 = vpop.f32.mrf.mxu0
          %v2787 = vadd.f32 %v2541, %v2786
          %v2788 = vpop.f32.mrf.mxu0
          %2789 = vmatprep.mubr.f32.mxu0 0.0
          %2790 = vmatmul.mubr.f32.gmra.mxu0 %v2596
          %v2791 = vpop.f32.mrf.mxu0
          %v2792 = vadd.f32 %v2541, %v2791
          %v2793 = vpop.f32.mrf.mxu0
          %2794 = vmatprep.mubr.f32.mxu0 0.0
          %2795 = vmatmul.mubr.f32.gmra.mxu0 %v2599
          %v2796 = vpop.f32.mrf.mxu0
          %v2797 = vadd.f32 %v2541, %v2796
          %v2798 = vpop.f32.mrf.mxu0
          %2799 = vmatprep.mubr.f32.mxu0 0.0
          %2800 = vmatmul.mubr.f32.gmra.mxu0 %v2602
          %v2801 = vpop.f32.mrf.mxu0
          %v2802 = vadd.f32 %v2541, %v2801
          %v2803 = vpop.f32.mrf.mxu0
          %2804 = vmatprep.mubr.f32.mxu0 0.0
          %2805 = vmatmul.mubr.f32.gmra.mxu0 %v2605
          %v2806 = vpop.f32.mrf.mxu0
          %v2807 = vadd.f32 %v2541, %v2806
          %v2808 = vpop.f32.mrf.mxu0
          %2809 = vmatprep.mubr.f32.mxu0 0.0
          %2810 = vmatmul.mubr.f32.gmra.mxu0 %v2608
          %v2811 = vpop.f32.mrf.mxu0
          %v2812 = vadd.f32 %v2541, %v2811
          %v2813 = vpop.f32.mrf.mxu0
          %2814 = vmatprep.mubr.f32.mxu0 0.0
          %2815 = vmatmul.mubr.f32.gmra.mxu0 %v2611
          %v2816 = vpop.f32.mrf.mxu0
          %v2817 = vadd.f32 %v2541, %v2816
          %v2818 = vpop.f32.mrf.mxu0
          %2819 = vmatprep.mubr.f32.mxu0 0.0
          %2820 = vmatmul.mubr.f32.gmra.mxu0 %v2614
          %v2821 = vpop.f32.mrf.mxu0
          %v2822 = vadd.f32 %v2541, %v2821
          %v2823 = vpop.f32.mrf.mxu0
          %2824 = vmatprep.mubr.f32.mxu0 0.0
          %2825 = vmatmul.mubr.f32.gmra.mxu0 %v2617
          %v2826 = vpop.f32.mrf.mxu0
          %v2827 = vadd.f32 %v2541, %v2826
          %v2828 = vpop.f32.mrf.mxu0
          %2829 = vmatprep.mubr.f32.mxu0 0.0
          %2830 = vmatmul.mubr.f32.gmra.mxu0 %v2620
          %v2831 = vpop.f32.mrf.mxu0
          %v2832 = vadd.f32 %v2541, %v2831
          %v2833 = vpop.f32.mrf.mxu0
          %2834 = vmatprep.mubr.f32.mxu0 0.0
          %2835 = vmatmul.mubr.f32.gmra.mxu0 %v2623
          %v2836 = vpop.f32.mrf.mxu0
          %v2837 = vadd.f32 %v2541, %v2836
          %v2838 = vpop.f32.mrf.mxu0
          %2839 = vmatprep.mubr.f32.mxu0 0.0
          %2840 = vmatmul.mubr.f32.gmra.mxu0 %v2626
          %v2841 = vpop.f32.mrf.mxu0
          %v2842 = vadd.f32 %v2541, %v2841
          %v2843 = vpop.f32.mrf.mxu0
          %2844 = vmatprep.mubr.f32.mxu0 0.0
          %2845 = vmatmul.mubr.f32.gmra.mxu0 %v2629
          %v2846 = vpop.f32.mrf.mxu0
          %v2847 = vadd.f32 %v2541, %v2846
          %v2848 = vpop.f32.mrf.mxu0
          %2849 = vmatprep.mubr.f32.mxu0 0.0
          %2850 = vmatmul.mubr.f32.gmra.mxu0 %v2632
          %v2851 = vpop.f32.mrf.mxu0
          %v2852 = vadd.f32 %v2541, %v2851
          %v2853 = vpop.f32.mrf.mxu0
          %2854 = vmatprep.mubr.f32.mxu0 0.0
          %2855 = vmatmul.mubr.f32.gmra.mxu0 %v2635
          %v2856 = vpop.f32.mrf.mxu0
          %v2857 = vadd.f32 %v2541, %v2856
          %v2858 = vpop.f32.mrf.mxu0
          %2859 = vmatprep.mubr.f32.mxu0 0.0
          %2860 = vmatmul.mubr.f32.gmra.mxu0 %v2638
          %v2861 = vpop.f32.mrf.mxu0
          %v2862 = vadd.f32 %v2541, %v2861
          %v2863 = vpop.f32.mrf.mxu0
          %2864 = vdwg.mxu0
          %v2865 = vadd.f32 %v2707, %v2471
          %v2866 = vadd.f32 %v2712, %v2472
          %v2867 = vadd.f32 %v2717, %v2473
          %v2868 = vadd.f32 %v2722, %v2474
          %v2869 = vadd.f32 %v2727, %v2475
          %v2870 = vadd.f32 %v2732, %v2476
          %v2871 = vadd.f32 %v2737, %v2477
          %v2872 = vadd.f32 %v2742, %v2478
          %v2873 = vadd.f32 %v2747, %v2479
          %v2874 = vadd.f32 %v2752, %v2480
          %v2875 = vadd.f32 %v2757, %v2481
          %v2876 = vadd.f32 %v2762, %v2482
          %v2877 = vadd.f32 %v2767, %v2483
          %v2878 = vadd.f32 %v2772, %v2484
          %v2879 = vadd.f32 %v2777, %v2485
          %v2880 = vadd.f32 %v2782, %v2486
          %v2881 = vadd.f32 %v2787, %v2487
          %v2882 = vadd.f32 %v2792, %v2488
          %v2883 = vadd.f32 %v2797, %v2489
          %v2884 = vadd.f32 %v2802, %v2490
          %v2885 = vadd.f32 %v2807, %v2491
          %v2886 = vadd.f32 %v2812, %v2492
          %v2887 = vadd.f32 %v2817, %v2493
          %v2888 = vadd.f32 %v2822, %v2494
          %v2889 = vadd.f32 %v2827, %v2495
          %v2890 = vadd.f32 %v2832, %v2496
          %v2891 = vadd.f32 %v2837, %v2497
          %v2892 = vadd.f32 %v2842, %v2498
          %v2893 = vadd.f32 %v2847, %v2499
          %v2894 = vadd.f32 %v2852, %v2500
          %v2895 = vadd.f32 %v2857, %v2501
          %v2896 = vadd.f32 %v2862, %v2502
          %v2897 = vmax.f32 %v2865, 0.0
          %v2898 = vmax.f32 %v2866, 0.0
          %v2899 = vmax.f32 %v2867, 0.0
          %v2900 = vmax.f32 %v2868, 0.0
          %v2901 = vmax.f32 %v2869, 0.0
          %v2902 = vmax.f32 %v2870, 0.0
          %v2903 = vmax.f32 %v2871, 0.0
          %v2904 = vmax.f32 %v2872, 0.0
          %v2905 = vmax.f32 %v2873, 0.0
          %v2906 = vmax.f32 %v2874, 0.0
          %v2907 = vmax.f32 %v2875, 0.0
          %v2908 = vmax.f32 %v2876, 0.0
          %v2909 = vmax.f32 %v2877, 0.0
          %v2910 = vmax.f32 %v2878, 0.0
          %v2911 = vmax.f32 %v2879, 0.0
          %v2912 = vmax.f32 %v2880, 0.0
          %v2913 = vmax.f32 %v2881, 0.0
          %v2914 = vmax.f32 %v2882, 0.0
          %v2915 = vmax.f32 %v2883, 0.0
          %v2916 = vmax.f32 %v2884, 0.0
          %v2917 = vmax.f32 %v2885, 0.0
          %v2918 = vmax.f32 %v2886, 0.0
          %v2919 = vmax.f32 %v2887, 0.0
          %v2920 = vmax.f32 %v2888, 0.0
          %v2921 = vmax.f32 %v2889, 0.0
          %v2922 = vmax.f32 %v2890, 0.0
          %v2923 = vmax.f32 %v2891, 0.0
          %v2924 = vmax.f32 %v2892, 0.0
          %v2925 = vmax.f32 %v2893, 0.0
          %v2926 = vmax.f32 %v2894, 0.0
          %v2927 = vmax.f32 %v2895, 0.0
          %v2928 = vmax.f32 %v2896, 0.0
          %v2929 = vld [vmem:[%s7] sm:$0xff]
          %v2930 = vld [vmem:[%s7 + $0x8] sm:$0xff]
          %v2931 = vld [vmem:[%s7 + $0x10] sm:$0xff]
          %v2932 = vld [vmem:[%s7 + $0x18] sm:$0xff]
          %v2933 = vld [vmem:[%s7 + $0x20] sm:$0xff]
          %v2934 = vld [vmem:[%s7 + $0x28] sm:$0xff]
          %v2935 = vld [vmem:[%s7 + $0x30] sm:$0xff]
          %v2936 = vld [vmem:[%s7 + $0x38] sm:$0xff]
          %v2937 = vld [vmem:[%s8] sm:$0x1]
          %v2939 = vlaneseq
          %v2940 = vshrl.u32 %v2939, 7
          %v2941 = vsub.s32 0, %v2940
          %v2942 = vrot.slane %v2937, %v2941
          %vm2944 = vcmask 523264
          %v2946 = vsel %vm2944, %v2897, 0
          %v2949 = vsel %vm2944, %v2898, 0
          %v2952 = vsel %vm2944, %v2899, 0
          %v2955 = vsel %vm2944, %v2900, 0
          %v2958 = vsel %vm2944, %v2901, 0
          %v2961 = vsel %vm2944, %v2902, 0
          %v2964 = vsel %vm2944, %v2903, 0
          %v2967 = vsel %vm2944, %v2904, 0
          %v2970 = vsel %vm2944, %v2905, 0
          %v2973 = vsel %vm2944, %v2906, 0
          %v2976 = vsel %vm2944, %v2907, 0
          %v2979 = vsel %vm2944, %v2908, 0
          %v2982 = vsel %vm2944, %v2909, 0
          %v2985 = vsel %vm2944, %v2910, 0
          %v2988 = vsel %vm2944, %v2911, 0
          %v2991 = vsel %vm2944, %v2912, 0
          %v2994 = vsel %vm2944, %v2913, 0
          %v2997 = vsel %vm2944, %v2914, 0
          %v3000 = vsel %vm2944, %v2915, 0
          %v3003 = vsel %vm2944, %v2916, 0
          %v3006 = vsel %vm2944, %v2917, 0
          %v3009 = vsel %vm2944, %v2918, 0
          %v3012 = vsel %vm2944, %v2919, 0
          %v3015 = vsel %vm2944, %v2920, 0
          %v3018 = vsel %vm2944, %v2921, 0
          %v3021 = vsel %vm2944, %v2922, 0
          %v3024 = vsel %vm2944, %v2923, 0
          %v3027 = vsel %vm2944, %v2924, 0
          %v3030 = vsel %vm2944, %v2925, 0
          %v3033 = vsel %vm2944, %v2926, 0
          %v3036 = vsel %vm2944, %v2927, 0
          %v3039 = vsel %vm2944, %v2928, 0
          %3041 = vmatprep.subr.mxu0 0.0
          %3042 = vmatpush1.msra.mxu0 0.0
          %3043 = vmatprep.subr.mxu0 0.0
          %3044 = vmatpush1.msra.mxu0 0.0
          %3045 = vmatprep.subr.mxu0 0.0
          %3046 = vmatpush1.msra.mxu0 0.0
          %3047 = vmatprep.subr.mxu0 0.0
          %3048 = vmatpush1.msra.mxu0 0.0
          %3049 = vmatprep.subr.mxu0 0.0
          %3050 = vmatpush1.msra.mxu0 0.0
          %3051 = vmatprep.subr.mxu0 0.0
          %3052 = vmatpush1.msra.mxu0 0.0
          %3053 = vmatprep.subr.mxu0 0.0
          %3054 = vmatpush1.msra.mxu0 0.0
          %3055 = vmatprep.subr.mxu0 0.0
          %3056 = vmatpush1.msra.mxu0 0.0
          %3057 = vmatprep.subr.mxu0 0.0
          %3058 = vmatpush1.msra.mxu0 %v2936
          %3059 = vmatprep.subr.mxu0 0.0
          %3060 = vmatpush1.msra.mxu0 %v2935
          %3061 = vmatprep.subr.mxu0 0.0
          %3062 = vmatpush1.msra.mxu0 %v2934
          %3063 = vmatprep.subr.mxu0 0.0
          %3064 = vmatpush1.msra.mxu0 %v2933
          %3065 = vmatprep.subr.mxu0 0.0
          %3066 = vmatpush1.msra.mxu0 %v2932
          %3067 = vmatprep.subr.mxu0 0.0
          %3068 = vmatpush1.msra.mxu0 %v2931
          %3069 = vmatprep.subr.mxu0 0.0
          %3070 = vmatpush1.msra.mxu0 %v2930
          %3071 = vmatprep.subr.mxu0 0.0
          %3072 = vmatpush1.msra.mxu0 %v2929
          %3073 = vmatprep.subr.mxu0 0.0
          %3074 = vmatpush2.msra.mxu0 0.0
          %3075 = vmatprep.subr.mxu0 0.0
          %3076 = vmatpush2.msra.mxu0 0.0
          %3077 = vmatprep.subr.mxu0 0.0
          %3078 = vmatpush2.msra.mxu0 0.0
          %3079 = vmatprep.subr.mxu0 0.0
          %3080 = vmatpush2.msra.mxu0 0.0
          %3081 = vmatprep.subr.mxu0 0.0
          %3082 = vmatpush2.msra.mxu0 0.0
          %3083 = vmatprep.subr.mxu0 0.0
          %3084 = vmatpush2.msra.mxu0 0.0
          %3085 = vmatprep.subr.mxu0 0.0
          %3086 = vmatpush2.msra.mxu0 0.0
          %3087 = vmatprep.subr.mxu0 0.0
          %3088 = vmatpush2.msra.mxu0 0.0
          %3089 = vmatprep.subr.mxu0 0.0
          %3090 = vmatpush2.msra.mxu0 0.0
          %3091 = vmatprep.subr.mxu0 0.0
          %3092 = vmatpush2.msra.mxu0 0.0
          %3093 = vmatprep.subr.mxu0 0.0
          %3094 = vmatpush2.msra.mxu0 0.0
          %3095 = vmatprep.subr.mxu0 0.0
          %3096 = vmatpush2.msra.mxu0 0.0
          %3097 = vmatprep.subr.mxu0 0.0
          %3098 = vmatpush2.msra.mxu0 0.0
          %3099 = vmatprep.subr.mxu0 0.0
          %3100 = vmatpush2.msra.mxu0 0.0
          %3101 = vmatprep.subr.mxu0 0.0
          %3102 = vmatpush2.msra.mxu0 0.0
          %3103 = vmatprep.subr.mxu0 0.0
          %3104 = vmatpush2.msra.mxu0 0.0
          %3105 = vmatprep.mubr.f32.mxu0 0.0
          %3106 = vmatmul.mubr.f32.gmra.mxu0 %v2946
          %v3107 = vpop.f32.mrf.mxu0
          %v3108 = vadd.f32 %v2942, %v3107
          %v3109 = vpop.f32.mrf.mxu0
          %3110 = vmatprep.mubr.f32.mxu0 0.0
          %3111 = vmatmul.mubr.f32.gmra.mxu0 %v2949
          %v3112 = vpop.f32.mrf.mxu0
          %v3113 = vadd.f32 %v2942, %v3112
          %v3114 = vpop.f32.mrf.mxu0
          %3115 = vmatprep.mubr.f32.mxu0 0.0
          %3116 = vmatmul.mubr.f32.gmra.mxu0 %v2952
          %v3117 = vpop.f32.mrf.mxu0
          %v3118 = vadd.f32 %v2942, %v3117
          %v3119 = vpop.f32.mrf.mxu0
          %3120 = vmatprep.mubr.f32.mxu0 0.0
          %3121 = vmatmul.mubr.f32.gmra.mxu0 %v2955
          %v3122 = vpop.f32.mrf.mxu0
          %v3123 = vadd.f32 %v2942, %v3122
          %v3124 = vpop.f32.mrf.mxu0
          %3125 = vmatprep.mubr.f32.mxu0 0.0
          %3126 = vmatmul.mubr.f32.gmra.mxu0 %v2958
          %v3127 = vpop.f32.mrf.mxu0
          %v3128 = vadd.f32 %v2942, %v3127
          %v3129 = vpop.f32.mrf.mxu0
          %3130 = vmatprep.mubr.f32.mxu0 0.0
          %3131 = vmatmul.mubr.f32.gmra.mxu0 %v2961
          %v3132 = vpop.f32.mrf.mxu0
          %v3133 = vadd.f32 %v2942, %v3132
          %v3134 = vpop.f32.mrf.mxu0
          %3135 = vmatprep.mubr.f32.mxu0 0.0
          %3136 = vmatmul.mubr.f32.gmra.mxu0 %v2964
          %v3137 = vpop.f32.mrf.mxu0
          %v3138 = vadd.f32 %v2942, %v3137
          %v3139 = vpop.f32.mrf.mxu0
          %3140 = vmatprep.mubr.f32.mxu0 0.0
          %3141 = vmatmul.mubr.f32.gmra.mxu0 %v2967
          %v3142 = vpop.f32.mrf.mxu0
          %v3143 = vadd.f32 %v2942, %v3142
          %v3144 = vpop.f32.mrf.mxu0
          %3145 = vmatprep.mubr.f32.mxu0 0.0
          %3146 = vmatmul.mubr.f32.gmra.mxu0 %v2970
          %v3147 = vpop.f32.mrf.mxu0
          %v3148 = vadd.f32 %v2942, %v3147
          %v3149 = vpop.f32.mrf.mxu0
          %3150 = vmatprep.mubr.f32.mxu0 0.0
          %3151 = vmatmul.mubr.f32.gmra.mxu0 %v2973
          %v3152 = vpop.f32.mrf.mxu0
          %v3153 = vadd.f32 %v2942, %v3152
          %v3154 = vpop.f32.mrf.mxu0
          %3155 = vmatprep.mubr.f32.mxu0 0.0
          %3156 = vmatmul.mubr.f32.gmra.mxu0 %v2976
          %v3157 = vpop.f32.mrf.mxu0
          %v3158 = vadd.f32 %v2942, %v3157
          %v3159 = vpop.f32.mrf.mxu0
          %3160 = vmatprep.mubr.f32.mxu0 0.0
          %3161 = vmatmul.mubr.f32.gmra.mxu0 %v2979
          %v3162 = vpop.f32.mrf.mxu0
          %v3163 = vadd.f32 %v2942, %v3162
          %v3164 = vpop.f32.mrf.mxu0
          %3165 = vmatprep.mubr.f32.mxu0 0.0
          %3166 = vmatmul.mubr.f32.gmra.mxu0 %v2982
          %v3167 = vpop.f32.mrf.mxu0
          %v3168 = vadd.f32 %v2942, %v3167
          %v3169 = vpop.f32.mrf.mxu0
          %3170 = vmatprep.mubr.f32.mxu0 0.0
          %3171 = vmatmul.mubr.f32.gmra.mxu0 %v2985
          %v3172 = vpop.f32.mrf.mxu0
          %v3173 = vadd.f32 %v2942, %v3172
          %v3174 = vpop.f32.mrf.mxu0
          %3175 = vmatprep.mubr.f32.mxu0 0.0
          %3176 = vmatmul.mubr.f32.gmra.mxu0 %v2988
          %v3177 = vpop.f32.mrf.mxu0
          %v3178 = vadd.f32 %v2942, %v3177
          %v3179 = vpop.f32.mrf.mxu0
          %3180 = vmatprep.mubr.f32.mxu0 0.0
          %3181 = vmatmul.mubr.f32.gmra.mxu0 %v2991
          %v3182 = vpop.f32.mrf.mxu0
          %v3183 = vadd.f32 %v2942, %v3182
          %v3184 = vpop.f32.mrf.mxu0
          %3185 = vmatprep.mubr.f32.mxu0 0.0
          %3186 = vmatmul.mubr.f32.gmra.mxu0 %v2994
          %v3187 = vpop.f32.mrf.mxu0
          %v3188 = vadd.f32 %v2942, %v3187
          %v3189 = vpop.f32.mrf.mxu0
          %3190 = vmatprep.mubr.f32.mxu0 0.0
          %3191 = vmatmul.mubr.f32.gmra.mxu0 %v2997
          %v3192 = vpop.f32.mrf.mxu0
          %v3193 = vadd.f32 %v2942, %v3192
          %v3194 = vpop.f32.mrf.mxu0
          %3195 = vmatprep.mubr.f32.mxu0 0.0
          %3196 = vmatmul.mubr.f32.gmra.mxu0 %v3000
          %v3197 = vpop.f32.mrf.mxu0
          %v3198 = vadd.f32 %v2942, %v3197
          %v3199 = vpop.f32.mrf.mxu0
          %3200 = vmatprep.mubr.f32.mxu0 0.0
          %3201 = vmatmul.mubr.f32.gmra.mxu0 %v3003
          %v3202 = vpop.f32.mrf.mxu0
          %v3203 = vadd.f32 %v2942, %v3202
          %v3204 = vpop.f32.mrf.mxu0
          %3205 = vmatprep.mubr.f32.mxu0 0.0
          %3206 = vmatmul.mubr.f32.gmra.mxu0 %v3006
          %v3207 = vpop.f32.mrf.mxu0
          %v3208 = vadd.f32 %v2942, %v3207
          %v3209 = vpop.f32.mrf.mxu0
          %3210 = vmatprep.mubr.f32.mxu0 0.0
          %3211 = vmatmul.mubr.f32.gmra.mxu0 %v3009
          %v3212 = vpop.f32.mrf.mxu0
          %v3213 = vadd.f32 %v2942, %v3212
          %v3214 = vpop.f32.mrf.mxu0
          %3215 = vmatprep.mubr.f32.mxu0 0.0
          %3216 = vmatmul.mubr.f32.gmra.mxu0 %v3012
          %v3217 = vpop.f32.mrf.mxu0
          %v3218 = vadd.f32 %v2942, %v3217
          %v3219 = vpop.f32.mrf.mxu0
          %3220 = vmatprep.mubr.f32.mxu0 0.0
          %3221 = vmatmul.mubr.f32.gmra.mxu0 %v3015
          %v3222 = vpop.f32.mrf.mxu0
          %v3223 = vadd.f32 %v2942, %v3222
          %v3224 = vpop.f32.mrf.mxu0
          %3225 = vmatprep.mubr.f32.mxu0 0.0
          %3226 = vmatmul.mubr.f32.gmra.mxu0 %v3018
          %v3227 = vpop.f32.mrf.mxu0
          %v3228 = vadd.f32 %v2942, %v3227
          %v3229 = vpop.f32.mrf.mxu0
          %3230 = vmatprep.mubr.f32.mxu0 0.0
          %3231 = vmatmul.mubr.f32.gmra.mxu0 %v3021
          %v3232 = vpop.f32.mrf.mxu0
          %v3233 = vadd.f32 %v2942, %v3232
          %v3234 = vpop.f32.mrf.mxu0
          %3235 = vmatprep.mubr.f32.mxu0 0.0
          %3236 = vmatmul.mubr.f32.gmra.mxu0 %v3024
          %v3237 = vpop.f32.mrf.mxu0
          %v3238 = vadd.f32 %v2942, %v3237
          %v3239 = vpop.f32.mrf.mxu0
          %3240 = vmatprep.mubr.f32.mxu0 0.0
          %3241 = vmatmul.mubr.f32.gmra.mxu0 %v3027
          %v3242 = vpop.f32.mrf.mxu0
          %v3243 = vadd.f32 %v2942, %v3242
          %v3244 = vpop.f32.mrf.mxu0
          %3245 = vmatprep.mubr.f32.mxu0 0.0
          %3246 = vmatmul.mubr.f32.gmra.mxu0 %v3030
          %v3247 = vpop.f32.mrf.mxu0
          %v3248 = vadd.f32 %v2942, %v3247
          %v3249 = vpop.f32.mrf.mxu0
          %3250 = vmatprep.mubr.f32.mxu0 0.0
          %3251 = vmatmul.mubr.f32.gmra.mxu0 %v3033
          %v3252 = vpop.f32.mrf.mxu0
          %v3253 = vadd.f32 %v2942, %v3252
          %v3254 = vpop.f32.mrf.mxu0
          %3255 = vmatprep.mubr.f32.mxu0 0.0
          %3256 = vmatmul.mubr.f32.gmra.mxu0 %v3036
          %v3257 = vpop.f32.mrf.mxu0
          %v3258 = vadd.f32 %v2942, %v3257
          %v3259 = vpop.f32.mrf.mxu0
          %3260 = vmatprep.mubr.f32.mxu0 0.0
          %3261 = vmatmul.mubr.f32.gmra.mxu0 %v3039
          %v3262 = vpop.f32.mrf.mxu0
          %v3263 = vadd.f32 %v2942, %v3262
          %v3264 = vpop.f32.mrf.mxu0
          %3265 = vdwg.mxu0
          %v3266 = vmax.f32 %v3108, 0.0
          %v3267 = vmax.f32 %v3113, 0.0
          %v3268 = vmax.f32 %v3118, 0.0
          %v3269 = vmax.f32 %v3123, 0.0
          %v3270 = vmax.f32 %v3128, 0.0
          %v3271 = vmax.f32 %v3133, 0.0
          %v3272 = vmax.f32 %v3138, 0.0
          %v3273 = vmax.f32 %v3143, 0.0
          %v3274 = vmax.f32 %v3148, 0.0
          %v3275 = vmax.f32 %v3153, 0.0
          %v3276 = vmax.f32 %v3158, 0.0
          %v3277 = vmax.f32 %v3163, 0.0
          %v3278 = vmax.f32 %v3168, 0.0
          %v3279 = vmax.f32 %v3173, 0.0
          %v3280 = vmax.f32 %v3178, 0.0
          %v3281 = vmax.f32 %v3183, 0.0
          %v3282 = vmax.f32 %v3188, 0.0
          %v3283 = vmax.f32 %v3193, 0.0
          %v3284 = vmax.f32 %v3198, 0.0
          %v3285 = vmax.f32 %v3203, 0.0
          %v3286 = vmax.f32 %v3208, 0.0
          %v3287 = vmax.f32 %v3213, 0.0
          %v3288 = vmax.f32 %v3218, 0.0
          %v3289 = vmax.f32 %v3223, 0.0
          %v3290 = vmax.f32 %v3228, 0.0
          %v3291 = vmax.f32 %v3233, 0.0
          %v3292 = vmax.f32 %v3238, 0.0
          %v3293 = vmax.f32 %v3243, 0.0
          %v3294 = vmax.f32 %v3248, 0.0
          %v3295 = vmax.f32 %v3253, 0.0
          %v3296 = vmax.f32 %v3258, 0.0
          %v3297 = vmax.f32 %v3263, 0.0
          %v3298 = vld [vmem:[%s9] sm:$0xff]
          %v3299 = vld [vmem:[%s9 + $0x8] sm:$0xff]
          %v3300 = vld [vmem:[%s9 + $0x10] sm:$0xff]
          %v3301 = vld [vmem:[%s9 + $0x18] sm:$0xff]
          %v3302 = vld [vmem:[%s9 + $0x20] sm:$0xff]
          %v3303 = vld [vmem:[%s9 + $0x28] sm:$0xff]
          %v3304 = vld [vmem:[%s9 + $0x30] sm:$0xff]
          %v3305 = vld [vmem:[%s9 + $0x38] sm:$0xff]
          %v3306 = vld [vmem:[%s10] sm:$0x1]
          %v3308 = vlaneseq
          %v3309 = vshrl.u32 %v3308, 7
          %v3310 = vsub.s32 0, %v3309
          %v3311 = vrot.slane %v3306, %v3310
          %v3314 = vsel %vm2944, %v3266, 0
          %v3317 = vsel %vm2944, %v3267, 0
          %v3320 = vsel %vm2944, %v3268, 0
          %v3323 = vsel %vm2944, %v3269, 0
          %v3326 = vsel %vm2944, %v3270, 0
          %v3329 = vsel %vm2944, %v3271, 0
          %v3332 = vsel %vm2944, %v3272, 0
          %v3335 = vsel %vm2944, %v3273, 0
          %v3338 = vsel %vm2944, %v3274, 0
          %v3341 = vsel %vm2944, %v3275, 0
          %v3344 = vsel %vm2944, %v3276, 0
          %v3347 = vsel %vm2944, %v3277, 0
          %v3350 = vsel %vm2944, %v3278, 0
          %v3353 = vsel %vm2944, %v3279, 0
          %v3356 = vsel %vm2944, %v3280, 0
          %v3359 = vsel %vm2944, %v3281, 0
          %v3362 = vsel %vm2944, %v3282, 0
          %v3365 = vsel %vm2944, %v3283, 0
          %v3368 = vsel %vm2944, %v3284, 0
          %v3371 = vsel %vm2944, %v3285, 0
          %v3374 = vsel %vm2944, %v3286, 0
          %v3377 = vsel %vm2944, %v3287, 0
          %v3380 = vsel %vm2944, %v3288, 0
          %v3383 = vsel %vm2944, %v3289, 0
          %v3386 = vsel %vm2944, %v3290, 0
          %v3389 = vsel %vm2944, %v3291, 0
          %v3392 = vsel %vm2944, %v3292, 0
          %v3395 = vsel %vm2944, %v3293, 0
          %v3398 = vsel %vm2944, %v3294, 0
          %v3401 = vsel %vm2944, %v3295, 0
          %v3404 = vsel %vm2944, %v3296, 0
          %v3407 = vsel %vm2944, %v3297, 0
          %3409 = vmatprep.subr.mxu0 0.0
          %3410 = vmatpush1.msra.mxu0 0.0
          %3411 = vmatprep.subr.mxu0 0.0
          %3412 = vmatpush1.msra.mxu0 0.0
          %3413 = vmatprep.subr.mxu0 0.0
          %3414 = vmatpush1.msra.mxu0 0.0
          %3415 = vmatprep.subr.mxu0 0.0
          %3416 = vmatpush1.msra.mxu0 0.0
          %3417 = vmatprep.subr.mxu0 0.0
          %3418 = vmatpush1.msra.mxu0 0.0
          %3419 = vmatprep.subr.mxu0 0.0
          %3420 = vmatpush1.msra.mxu0 0.0
          %3421 = vmatprep.subr.mxu0 0.0
          %3422 = vmatpush1.msra.mxu0 0.0
          %3423 = vmatprep.subr.mxu0 0.0
          %3424 = vmatpush1.msra.mxu0 0.0
          %3425 = vmatprep.subr.mxu0 0.0
          %3426 = vmatpush1.msra.mxu0 %v3305
          %3427 = vmatprep.subr.mxu0 0.0
          %3428 = vmatpush1.msra.mxu0 %v3304
          %3429 = vmatprep.subr.mxu0 0.0
          %3430 = vmatpush1.msra.mxu0 %v3303
          %3431 = vmatprep.subr.mxu0 0.0
          %3432 = vmatpush1.msra.mxu0 %v3302
          %3433 = vmatprep.subr.mxu0 0.0
          %3434 = vmatpush1.msra.mxu0 %v3301
          %3435 = vmatprep.subr.mxu0 0.0
          %3436 = vmatpush1.msra.mxu0 %v3300
          %3437 = vmatprep.subr.mxu0 0.0
          %3438 = vmatpush1.msra.mxu0 %v3299
          %3439 = vmatprep.subr.mxu0 0.0
          %3440 = vmatpush1.msra.mxu0 %v3298
          %3441 = vmatprep.subr.mxu0 0.0
          %3442 = vmatpush2.msra.mxu0 0.0
          %3443 = vmatprep.subr.mxu0 0.0
          %3444 = vmatpush2.msra.mxu0 0.0
          %3445 = vmatprep.subr.mxu0 0.0
          %3446 = vmatpush2.msra.mxu0 0.0
          %3447 = vmatprep.subr.mxu0 0.0
          %3448 = vmatpush2.msra.mxu0 0.0
          %3449 = vmatprep.subr.mxu0 0.0
          %3450 = vmatpush2.msra.mxu0 0.0
          %3451 = vmatprep.subr.mxu0 0.0
          %3452 = vmatpush2.msra.mxu0 0.0
          %3453 = vmatprep.subr.mxu0 0.0
          %3454 = vmatpush2.msra.mxu0 0.0
          %3455 = vmatprep.subr.mxu0 0.0
          %3456 = vmatpush2.msra.mxu0 0.0
          %3457 = vmatprep.subr.mxu0 0.0
          %3458 = vmatpush2.msra.mxu0 0.0
          %3459 = vmatprep.subr.mxu0 0.0
          %3460 = vmatpush2.msra.mxu0 0.0
          %3461 = vmatprep.subr.mxu0 0.0
          %3462 = vmatpush2.msra.mxu0 0.0
          %3463 = vmatprep.subr.mxu0 0.0
          %3464 = vmatpush2.msra.mxu0 0.0
          %3465 = vmatprep.subr.mxu0 0.0
          %3466 = vmatpush2.msra.mxu0 0.0
          %3467 = vmatprep.subr.mxu0 0.0
          %3468 = vmatpush2.msra.mxu0 0.0
          %3469 = vmatprep.subr.mxu0 0.0
          %3470 = vmatpush2.msra.mxu0 0.0
          %3471 = vmatprep.subr.mxu0 0.0
          %3472 = vmatpush2.msra.mxu0 0.0
          %3473 = vmatprep.mubr.f32.mxu0 0.0
          %3474 = vmatmul.mubr.f32.gmra.mxu0 %v3314
          %v3475 = vpop.f32.mrf.mxu0
          %v3476 = vadd.f32 %v3311, %v3475
          %v3477 = vpop.f32.mrf.mxu0
          %3478 = vmatprep.mubr.f32.mxu0 0.0
          %3479 = vmatmul.mubr.f32.gmra.mxu0 %v3317
          %v3480 = vpop.f32.mrf.mxu0
          %v3481 = vadd.f32 %v3311, %v3480
          %v3482 = vpop.f32.mrf.mxu0
          %3483 = vmatprep.mubr.f32.mxu0 0.0
          %3484 = vmatmul.mubr.f32.gmra.mxu0 %v3320
          %v3485 = vpop.f32.mrf.mxu0
          %v3486 = vadd.f32 %v3311, %v3485
          %v3487 = vpop.f32.mrf.mxu0
          %3488 = vmatprep.mubr.f32.mxu0 0.0
          %3489 = vmatmul.mubr.f32.gmra.mxu0 %v3323
          %v3490 = vpop.f32.mrf.mxu0
          %v3491 = vadd.f32 %v3311, %v3490
          %v3492 = vpop.f32.mrf.mxu0
          %3493 = vmatprep.mubr.f32.mxu0 0.0
          %3494 = vmatmul.mubr.f32.gmra.mxu0 %v3326
          %v3495 = vpop.f32.mrf.mxu0
          %v3496 = vadd.f32 %v3311, %v3495
          %v3497 = vpop.f32.mrf.mxu0
          %3498 = vmatprep.mubr.f32.mxu0 0.0
          %3499 = vmatmul.mubr.f32.gmra.mxu0 %v3329
          %v3500 = vpop.f32.mrf.mxu0
          %v3501 = vadd.f32 %v3311, %v3500
          %v3502 = vpop.f32.mrf.mxu0
          %3503 = vmatprep.mubr.f32.mxu0 0.0
          %3504 = vmatmul.mubr.f32.gmra.mxu0 %v3332
          %v3505 = vpop.f32.mrf.mxu0
          %v3506 = vadd.f32 %v3311, %v3505
          %v3507 = vpop.f32.mrf.mxu0
          %3508 = vmatprep.mubr.f32.mxu0 0.0
          %3509 = vmatmul.mubr.f32.gmra.mxu0 %v3335
          %v3510 = vpop.f32.mrf.mxu0
          %v3511 = vadd.f32 %v3311, %v3510
          %v3512 = vpop.f32.mrf.mxu0
          %3513 = vmatprep.mubr.f32.mxu0 0.0
          %3514 = vmatmul.mubr.f32.gmra.mxu0 %v3338
          %v3515 = vpop.f32.mrf.mxu0
          %v3516 = vadd.f32 %v3311, %v3515
          %v3517 = vpop.f32.mrf.mxu0
          %3518 = vmatprep.mubr.f32.mxu0 0.0
          %3519 = vmatmul.mubr.f32.gmra.mxu0 %v3341
          %v3520 = vpop.f32.mrf.mxu0
          %v3521 = vadd.f32 %v3311, %v3520
          %v3522 = vpop.f32.mrf.mxu0
          %3523 = vmatprep.mubr.f32.mxu0 0.0
          %3524 = vmatmul.mubr.f32.gmra.mxu0 %v3344
          %v3525 = vpop.f32.mrf.mxu0
          %v3526 = vadd.f32 %v3311, %v3525
          %v3527 = vpop.f32.mrf.mxu0
          %3528 = vmatprep.mubr.f32.mxu0 0.0
          %3529 = vmatmul.mubr.f32.gmra.mxu0 %v3347
          %v3530 = vpop.f32.mrf.mxu0
          %v3531 = vadd.f32 %v3311, %v3530
          %v3532 = vpop.f32.mrf.mxu0
          %3533 = vmatprep.mubr.f32.mxu0 0.0
          %3534 = vmatmul.mubr.f32.gmra.mxu0 %v3350
          %v3535 = vpop.f32.mrf.mxu0
          %v3536 = vadd.f32 %v3311, %v3535
          %v3537 = vpop.f32.mrf.mxu0
          %3538 = vmatprep.mubr.f32.mxu0 0.0
          %3539 = vmatmul.mubr.f32.gmra.mxu0 %v3353
          %v3540 = vpop.f32.mrf.mxu0
          %v3541 = vadd.f32 %v3311, %v3540
          %v3542 = vpop.f32.mrf.mxu0
          %3543 = vmatprep.mubr.f32.mxu0 0.0
          %3544 = vmatmul.mubr.f32.gmra.mxu0 %v3356
          %v3545 = vpop.f32.mrf.mxu0
          %v3546 = vadd.f32 %v3311, %v3545
          %v3547 = vpop.f32.mrf.mxu0
          %3548 = vmatprep.mubr.f32.mxu0 0.0
          %3549 = vmatmul.mubr.f32.gmra.mxu0 %v3359
          %v3550 = vpop.f32.mrf.mxu0
          %v3551 = vadd.f32 %v3311, %v3550
          %v3552 = vpop.f32.mrf.mxu0
          %3553 = vmatprep.mubr.f32.mxu0 0.0
          %3554 = vmatmul.mubr.f32.gmra.mxu0 %v3362
          %v3555 = vpop.f32.mrf.mxu0
          %v3556 = vadd.f32 %v3311, %v3555
          %v3557 = vpop.f32.mrf.mxu0
          %3558 = vmatprep.mubr.f32.mxu0 0.0
          %3559 = vmatmul.mubr.f32.gmra.mxu0 %v3365
          %v3560 = vpop.f32.mrf.mxu0
          %v3561 = vadd.f32 %v3311, %v3560
          %v3562 = vpop.f32.mrf.mxu0
          %3563 = vmatprep.mubr.f32.mxu0 0.0
          %3564 = vmatmul.mubr.f32.gmra.mxu0 %v3368
          %v3565 = vpop.f32.mrf.mxu0
          %v3566 = vadd.f32 %v3311, %v3565
          %v3567 = vpop.f32.mrf.mxu0
          %3568 = vmatprep.mubr.f32.mxu0 0.0
          %3569 = vmatmul.mubr.f32.gmra.mxu0 %v3371
          %v3570 = vpop.f32.mrf.mxu0
          %v3571 = vadd.f32 %v3311, %v3570
          %v3572 = vpop.f32.mrf.mxu0
          %3573 = vmatprep.mubr.f32.mxu0 0.0
          %3574 = vmatmul.mubr.f32.gmra.mxu0 %v3374
          %v3575 = vpop.f32.mrf.mxu0
          %v3576 = vadd.f32 %v3311, %v3575
          %v3577 = vpop.f32.mrf.mxu0
          %3578 = vmatprep.mubr.f32.mxu0 0.0
          %3579 = vmatmul.mubr.f32.gmra.mxu0 %v3377
          %v3580 = vpop.f32.mrf.mxu0
          %v3581 = vadd.f32 %v3311, %v3580
          %v3582 = vpop.f32.mrf.mxu0
          %3583 = vmatprep.mubr.f32.mxu0 0.0
          %3584 = vmatmul.mubr.f32.gmra.mxu0 %v3380
          %v3585 = vpop.f32.mrf.mxu0
          %v3586 = vadd.f32 %v3311, %v3585
          %v3587 = vpop.f32.mrf.mxu0
          %3588 = vmatprep.mubr.f32.mxu0 0.0
          %3589 = vmatmul.mubr.f32.gmra.mxu0 %v3383
          %v3590 = vpop.f32.mrf.mxu0
          %v3591 = vadd.f32 %v3311, %v3590
          %v3592 = vpop.f32.mrf.mxu0
          %3593 = vmatprep.mubr.f32.mxu0 0.0
          %3594 = vmatmul.mubr.f32.gmra.mxu0 %v3386
          %v3595 = vpop.f32.mrf.mxu0
          %v3596 = vadd.f32 %v3311, %v3595
          %v3597 = vpop.f32.mrf.mxu0
          %3598 = vmatprep.mubr.f32.mxu0 0.0
          %3599 = vmatmul.mubr.f32.gmra.mxu0 %v3389
          %v3600 = vpop.f32.mrf.mxu0
          %v3601 = vadd.f32 %v3311, %v3600
          %v3602 = vpop.f32.mrf.mxu0
          %3603 = vmatprep.mubr.f32.mxu0 0.0
          %3604 = vmatmul.mubr.f32.gmra.mxu0 %v3392
          %v3605 = vpop.f32.mrf.mxu0
          %v3606 = vadd.f32 %v3311, %v3605
          %v3607 = vpop.f32.mrf.mxu0
          %3608 = vmatprep.mubr.f32.mxu0 0.0
          %3609 = vmatmul.mubr.f32.gmra.mxu0 %v3395
          %v3610 = vpop.f32.mrf.mxu0
          %v3611 = vadd.f32 %v3311, %v3610
          %v3612 = vpop.f32.mrf.mxu0
          %3613 = vmatprep.mubr.f32.mxu0 0.0
          %3614 = vmatmul.mubr.f32.gmra.mxu0 %v3398
          %v3615 = vpop.f32.mrf.mxu0
          %v3616 = vadd.f32 %v3311, %v3615
          %v3617 = vpop.f32.mrf.mxu0
          %3618 = vmatprep.mubr.f32.mxu0 0.0
          %3619 = vmatmul.mubr.f32.gmra.mxu0 %v3401
          %v3620 = vpop.f32.mrf.mxu0
          %v3621 = vadd.f32 %v3311, %v3620
          %v3622 = vpop.f32.mrf.mxu0
          %3623 = vmatprep.mubr.f32.mxu0 0.0
          %3624 = vmatmul.mubr.f32.gmra.mxu0 %v3404
          %v3625 = vpop.f32.mrf.mxu0
          %v3626 = vadd.f32 %v3311, %v3625
          %v3627 = vpop.f32.mrf.mxu0
          %3628 = vmatprep.mubr.f32.mxu0 0.0
          %3629 = vmatmul.mubr.f32.gmra.mxu0 %v3407
          %v3630 = vpop.f32.mrf.mxu0
          %v3631 = vadd.f32 %v3311, %v3630
          %v3632 = vpop.f32.mrf.mxu0
          %3633 = vdwg.mxu0
          %v3634 = vmax.f32 %v3476, 0.0
          %v3635 = vmax.f32 %v3481, 0.0
          %v3636 = vmax.f32 %v3486, 0.0
          %v3637 = vmax.f32 %v3491, 0.0
          %v3638 = vmax.f32 %v3496, 0.0
          %v3639 = vmax.f32 %v3501, 0.0
          %v3640 = vmax.f32 %v3506, 0.0
          %v3641 = vmax.f32 %v3511, 0.0
          %v3642 = vmax.f32 %v3516, 0.0
          %v3643 = vmax.f32 %v3521, 0.0
          %v3644 = vmax.f32 %v3526, 0.0
          %v3645 = vmax.f32 %v3531, 0.0
          %v3646 = vmax.f32 %v3536, 0.0
          %v3647 = vmax.f32 %v3541, 0.0
          %v3648 = vmax.f32 %v3546, 0.0
          %v3649 = vmax.f32 %v3551, 0.0
          %v3650 = vmax.f32 %v3556, 0.0
          %v3651 = vmax.f32 %v3561, 0.0
          %v3652 = vmax.f32 %v3566, 0.0
          %v3653 = vmax.f32 %v3571, 0.0
          %v3654 = vmax.f32 %v3576, 0.0
          %v3655 = vmax.f32 %v3581, 0.0
          %v3656 = vmax.f32 %v3586, 0.0
          %v3657 = vmax.f32 %v3591, 0.0
          %v3658 = vmax.f32 %v3596, 0.0
          %v3659 = vmax.f32 %v3601, 0.0
          %v3660 = vmax.f32 %v3606, 0.0
          %v3661 = vmax.f32 %v3611, 0.0
          %v3662 = vmax.f32 %v3616, 0.0
          %v3663 = vmax.f32 %v3621, 0.0
          %v3664 = vmax.f32 %v3626, 0.0
          %v3665 = vmax.f32 %v3631, 0.0
          %3666 = vst [vmem:[%s422] sm:$0xff] %v3634
          %3667 = vst [vmem:[%s422 + $0x8] sm:$0xff] %v3635
          %3668 = vst [vmem:[%s422 + $0x10] sm:$0xff] %v3636
          %3669 = vst [vmem:[%s422 + $0x18] sm:$0xff] %v3637
          %3670 = vst [vmem:[%s422 + $0x20] sm:$0xff] %v3638
          %3671 = vst [vmem:[%s422 + $0x28] sm:$0xff] %v3639
          %3672 = vst [vmem:[%s422 + $0x30] sm:$0xff] %v3640
          %3673 = vst [vmem:[%s422 + $0x38] sm:$0xff] %v3641
          %3674 = vst [vmem:[%s422 + $0x40] sm:$0xff] %v3642
          %3675 = vst [vmem:[%s422 + $0x48] sm:$0xff] %v3643
          %3676 = vst [vmem:[%s422 + $0x50] sm:$0xff] %v3644
          %3677 = vst [vmem:[%s422 + $0x58] sm:$0xff] %v3645
          %3678 = vst [vmem:[%s422 + $0x60] sm:$0xff] %v3646
          %3679 = vst [vmem:[%s422 + $0x68] sm:$0xff] %v3647
          %3680 = vst [vmem:[%s422 + $0x70] sm:$0xff] %v3648
          %3681 = vst [vmem:[%s422 + $0x78] sm:$0xff] %v3649
          %3682 = vst [vmem:[%s422 + $0x80] sm:$0xff] %v3650
          %3683 = vst [vmem:[%s422 + $0x88] sm:$0xff] %v3651
          %3684 = vst [vmem:[%s422 + $0x90] sm:$0xff] %v3652
          %3685 = vst [vmem:[%s422 + $0x98] sm:$0xff] %v3653
          %3686 = vst [vmem:[%s422 + $0xa0] sm:$0xff] %v3654
          %3687 = vst [vmem:[%s422 + $0xa8] sm:$0xff] %v3655
          %3688 = vst [vmem:[%s422 + $0xb0] sm:$0xff] %v3656
          %3689 = vst [vmem:[%s422 + $0xb8] sm:$0xff] %v3657
          %3690 = vst [vmem:[%s422 + $0xc0] sm:$0xff] %v3658
          %3691 = vst [vmem:[%s422 + $0xc8] sm:$0xff] %v3659
          %3692 = vst [vmem:[%s422 + $0xd0] sm:$0xff] %v3660
          %3693 = vst [vmem:[%s422 + $0xd8] sm:$0xff] %v3661
          %3694 = vst [vmem:[%s422 + $0xe0] sm:$0xff] %v3662
          %3695 = vst [vmem:[%s422 + $0xe8] sm:$0xff] %v3663
          %3696 = vst [vmem:[%s422 + $0xf0] sm:$0xff] %v3664
          %3697 = vst [vmem:[%s422 + $0xf8] sm:$0xff] %v3665
        $region72: #{tpu_custom_call.1} parent=63 // pred_fallthru
          _
        %s3698 = sand.u32 %s291, 1
        %s3699 = scalar_lea.sflag [#allocation4], %s3698
        %s3700 = sand.u32 %s291, 1
        %s3701 = smul.addr %s3700, 256
        %s3702 = scalar_lea.vmem [#allocation3], %s3701
        // Predicated region
        $region73: #{tpu_custom_call.1} parent=63 // pred_check
          %p3703 = pneg %p301
        $region74: #{tpu_custom_call.1} parent=63 // pred_check_branch
          %3705 = sbr.rel (%p3703) target = $region76
        $region75: #{tpu_custom_call.1} parent=63 // pred_region
          %s3706 = smul.u32 32, %s29
          %s3708 = ssub.s32 4096, 4096
          %3709 = vsyncadd %s3699, %s3708
          %s3710 = smul.addr %s3706, 128
          %s3711 = scalar_lea.hbm %s11, %s3710
          %s3712 = sshll.u32 %s3702, 4
          %s3713 = int_to_ptr.vmem [resolvable:$true] %s3712
          %3718 = dma.vmem_to_hbm [thread:$0]  %s3713, 4096, %s3711, %s3699, 128, 128, 8
        $region76: #{tpu_custom_call.1} parent=63 // pred_fallthru
          _
      $region64: #{tpu_custom_call.1} parent=5 // pred_fallthru
        _
      %p3719 = scmp.le.s32.totalorder 2, %s20
      // Predicated region
      $region77: #{tpu_custom_call.1} parent=5 // pred_check
        %p3720 = pneg %p3719
      $region78: #{tpu_custom_call.1} parent=5 // pred_check_branch
        %3722 = sbr.rel (%p3720) target = $region80
      $region79: #{tpu_custom_call.1} parent=5 // pred_region
        %s3723 = ssub.s32 %s20, 2
        // Predicated region
        $region81: #{tpu_custom_call.1} parent=79 // pred_check
          %p3724 = pneg %p307
        $region82: #{tpu_custom_call.1} parent=79 // pred_check_branch
          %3726 = sbr.rel (%p3724) target = $region84
        $region83: #{tpu_custom_call.1} parent=79 // pred_region
          %s3727 = sand.u32 %s292, 1
          %s3728 = scalar_lea.sflag [#allocation4], %s3727
          %s3729 = sand.u32 %s292, 1
          %s3730 = smul.addr %s3729, 256
          %s3731 = scalar_lea.vmem [#allocation3], %s3730
          %3732 = dma.done %s3728, 4096
        $region84: #{tpu_custom_call.1} parent=79 // pred_fallthru
          _
      $region80: #{tpu_custom_call.1} parent=5 // pred_fallthru
        _
    $region6: #{tpu_custom_call.1} parent=1 // loop_footer
      %s24 = sadd.s32 1, %s20
    $region7: #{tpu_custom_call.1} parent=1 // loop_footer_branch
      %19 = sbr.rel target = $region3
    $region8: #{tpu_custom_call.1} parent=1 // loop_exit
      _
    %3733 = vsyncpa [#allocation4], 1
    %s3734 = scalar_lea.sflag [#allocation4], 1
    %3735 = vsyncpa %s3734, 1

</llo_original>
